<compile_context>
chip_gen: v5e
topology: v5e:2x2
jax: 0.10.0
libtpu: 0.0.40
codegen_flags: <defaults>
</compile_context>

<pallas_src>
import functools
import math

import jax
import jax.numpy as jnp
from jax.experimental import pallas as pl
from jax.experimental.pallas import tpu as pltpu

_INV_SQRT2 = 1.0 / math.sqrt(2.0)
_LN_EPS = 1e-5                       # torch.nn.LayerNorm default
_VMEM_LIMIT = 32 * 1024 * 1024       # explicit scoped-VMEM limit (safe on v5e/v6e/v7x)


def _ln_f32(x, g, b):
    """Row-wise LayerNorm in f32 (biased variance, like nn.LayerNorm)."""
    mean = jnp.mean(x, axis=-1, keepdims=True)
    xc = x - mean
    var = jnp.mean(xc * xc, axis=-1, keepdims=True)
    return xc * jax.lax.rsqrt(var + _LN_EPS) * g + b


# --------------- fused patch embedding + positional embedding ---------------

def _embed_kernel(p_ref, w_ref, b_ref, pos_ref, o_ref):
    p = p_ref[...]                                            # bf16 [MB, PD]
    y = jnp.dot(p, w_ref[...], preferred_element_type=jnp.float32)
    y = y + b_ref[...] + pos_ref[...]                         # bias + pos-embed (f32)
    o_ref[...] = y.astype(o_ref.dtype)


def embed_tokens(patches_bf16, w_bf16, b_f32, pos_tile_f32, num_m_blocks, mb):
    pd = patches_bf16.shape[1]
    e = w_bf16.shape[1]
    return pl.pallas_call(
        _embed_kernel,
        out_shape=jax.ShapeDtypeStruct((num_m_blocks * mb, e), jnp.bfloat16),
        grid_spec=pltpu.PrefetchScalarGridSpec(
            num_scalar_prefetch=0,
            grid=(num_m_blocks,),
            in_specs=[
                pl.BlockSpec((mb, pd), lambda i: (i, 0)),
                pl.BlockSpec((pd, e), lambda i: (0, 0)),
                pl.BlockSpec((1, e), lambda i: (0, 0)),
                pl.BlockSpec((mb, e), lambda i: (0, 0)),
            ],
            out_specs=pl.BlockSpec((mb, e), lambda i: (i, 0)),
        ),
        compiler_params=pltpu.CompilerParams(
            dimension_semantics=("parallel",),
            vmem_limit_bytes=_VMEM_LIMIT),
    )(patches_bf16, w_bf16, b_f32, pos_tile_f32)


# -------------- fused transformer encoder STACK (all layers) ----------------

def _encoder_stack_kernel(x_ref,
                          ln1_g_ref, ln1_b_ref,
                          wq_ref, bq_ref, wk_ref, bk_ref, wv_ref, bv_ref,
                          wo_ref, bo_ref,
                          ln2_g_ref, ln2_b_ref,
                          w1_ref, b1_ref, w2_ref, b2_ref,
                          o_ref, res_ref,
                          *, num_heads, b_tile, n_tok):
    d = pl.program_id(1)

    @pl.when(d == 0)
    def _():                                                  # load residual stream once
        res_ref[...] = x_ref[...].astype(jnp.float32)

    x = res_ref[...]                                          # [MB, E] f32
    mb, e = x.shape
    hd = e // num_heads

    # --- LN1 -> head-major Q/K/V projections -> attention -> per-head out-proj ---
    xn = _ln_f32(x, ln1_g_ref[0], ln1_b_ref[0]).astype(jnp.bfloat16)

    attn = jnp.zeros((mb, e), jnp.float32)
    for h in range(num_heads):                                # static unroll
        # Full K=E contraction per projection; no lane-offset activation slices.
        qh = jnp.dot(xn, wq_ref[0, h], preferred_element_type=jnp.float32) + bq_ref[0, h]
        kh = jnp.dot(xn, wk_ref[0, h], preferred_element_type=jnp.float32) + bk_ref[0, h]
        vh = jnp.dot(xn, wv_ref[0, h], preferred_element_type=jnp.float32) + bv_ref[0, h]
        # leading-dim split only (free): [MB, hd] -> [b_tile, N, hd]
        qh = qh.reshape(b_tile, n_tok, hd).astype(jnp.bfloat16)
        kh = kh.reshape(b_tile, n_tok, hd).astype(jnp.bfloat16)
        vh = vh.reshape(b_tile, n_tok, hd).astype(jnp.bfloat16)
        # scale already folded into wq/bq at prep time.
        s = jnp.einsum('bqd,bkd->bqk', qh, kh,
                       preferred_element_type=jnp.float32)    # [b_tile, N, N] f32
        m = jnp.max(s, axis=-1, keepdims=True)
        p = jnp.exp(s - m)
        l = jnp.sum(p, axis=-1, keepdims=True)
        # EUP approximate reciprocal (~1e-4 rel. error vs exact softmax; OK for inference).
        p = (p * pl.reciprocal(l, approx=True)).astype(jnp.bfloat16)
        ctx = jnp.einsum('bqk,bkd->bqd', p, vh,
                         preferred_element_type=jnp.float32)  # [b_tile, N, hd]
        ctx = ctx.reshape(mb, hd).astype(jnp.bfloat16)
        # fold out-projection per head: attn = sum_h ctx_h @ Wo[h]  (no concat)
        attn = attn + jnp.dot(ctx, wo_ref[0, h], preferred_element_type=jnp.float32)

    x = x + attn + bo_ref[0]                                  # dropout = identity

    # --- LN2 -> MLP (exact erf GELU in f32) -> residual ---
    xn2 = _ln_f32(x, ln2_g_ref[0], ln2_b_ref[0]).astype(jnp.bfloat16)
    h1 = jnp.dot(xn2, w1_ref[0], preferred_element_type=jnp.float32) + b1_ref[0]
    h1 = 0.5 * h1 * (1.0 + jax.lax.erf(h1 * _INV_SQRT2))      # nn.GELU (exact)
    h2 = jnp.dot(h1.astype(jnp.bfloat16), w2_ref[0],
                 preferred_element_type=jnp.float32) + b2_ref[0]
    x = x + h2                                                # dropout = identity

    res_ref[...] = x                                          # carry to next layer

    @pl.when(d == pl.num_programs(1) - 1)
    def _():
        o_ref[...] = x.astype(o_ref.dtype)


def encoder_stack(h, ew, *, num_m_blocks, mb, b_tile, n_tok, num_heads, depth):
    e = h.shape[1]
    hid = ew["w1"].shape[-1]
    m_total = num_m_blocks * mb

    def wspec(arr):
        shape = arr.shape
        nd = len(shape)
        return pl.BlockSpec((1,) + shape[1:],
                            lambda m, d, _nd=nd: (d,) + (0,) * (_nd - 1))

    flops_per_layer = (
        2 * m_total * e * (3 * e)          # head-major Q/K/V projections
        + 2 * m_total * n_tok * e          # QK^T
        + 2 * m_total * n_tok * e          # PV
        + 2 * m_total * e * e              # out-projection
        + 4 * m_total * e * hid            # MLP fc1 + fc2
    )
    transc_per_layer = m_total * n_tok * num_heads + m_total * hid
    weight_bytes = 2 * depth * (4 * e * e + 2 * e * hid)       # bf16 weights
    act_bytes = 2 * 2 * m_total * e                            # bf16 in + out
    cost = pl.CostEstimate(flops=int(depth * flops_per_layer),
                           transcendentals=int(depth * transc_per_layer),
                           bytes_accessed=int(weight_bytes + act_bytes))

    grid_spec = pltpu.PrefetchScalarGridSpec(
        num_scalar_prefetch=0,
        grid=(num_m_blocks, depth),
        in_specs=[
            pl.BlockSpec((mb, e), lambda m, d: (m, 0)),        # residual stream input
            wspec(ew["ln1_g"]), wspec(ew["ln1_b"]),
            wspec(ew["wq"]), wspec(ew["bq"]),
            wspec(ew["wk"]), wspec(ew["bk"]),
            wspec(ew["wv"]), wspec(ew["bv"]),
            wspec(ew["wo"]), wspec(ew["bo"]),
            wspec(ew["ln2_g"]), wspec(ew["ln2_b"]),
            wspec(ew["w1"]), wspec(ew["b1"]),
            wspec(ew["w2"]), wspec(ew["b2"]),
        ],
        out_specs=pl.BlockSpec((mb, e), lambda m, d: (m, 0)),
        scratch_shapes=[pltpu.VMEM((mb, e), jnp.float32)],     # carried residual
    )

    return pl.pallas_call(
        functools.partial(_encoder_stack_kernel, num_heads=num_heads,
                          b_tile=b_tile, n_tok=n_tok),
        out_shape=jax.ShapeDtypeStruct((m_total, e), jnp.bfloat16),
        grid_spec=grid_spec,
        compiler_params=pltpu.CompilerParams(
            dimension_semantics=("parallel", "arbitrary"),
            vmem_limit_bytes=_VMEM_LIMIT),
        cost_estimate=cost,
    )(h,
      ew["ln1_g"], ew["ln1_b"],
      ew["wq"], ew["bq"], ew["wk"], ew["bk"], ew["wv"], ew["bv"],
      ew["wo"], ew["bo"],
      ew["ln2_g"], ew["ln2_b"],
      ew["w1"], ew["b1"], ew["w2"], ew["b2"])


# ------------------- fused final LayerNorm + video head ---------------------

def _head_kernel(x_ref, g_ref, b_ref, w_ref, hb_ref, o_ref):
    x = x_ref[...].astype(jnp.float32)
    xn = _ln_f32(x, g_ref[...], b_ref[...]).astype(jnp.bfloat16)
    y = jnp.dot(xn, w_ref[...], preferred_element_type=jnp.float32) + hb_ref[...]
    o_ref[...] = y.astype(o_ref.dtype)


def final_head(h, g, b, w_bf16, hb, num_m_blocks, mb):
    e = h.shape[1]
    od = w_bf16.shape[1]
    return pl.pallas_call(
        _head_kernel,
        out_shape=jax.ShapeDtypeStruct((num_m_blocks * mb, od), jnp.float32),
        grid_spec=pltpu.PrefetchScalarGridSpec(
            num_scalar_prefetch=0,
            grid=(num_m_blocks,),
            in_specs=[
                pl.BlockSpec((mb, e), lambda i: (i, 0)),
                pl.BlockSpec((1, e), lambda i: (0, 0)),
                pl.BlockSpec((1, e), lambda i: (0, 0)),
                pl.BlockSpec((e, od), lambda i: (0, 0)),
                pl.BlockSpec((1, od), lambda i: (0, 0)),
            ],
            out_specs=pl.BlockSpec((mb, od), lambda i: (i, 0)),
        ),
        compiler_params=pltpu.CompilerParams(
            dimension_semantics=("parallel",),
            vmem_limit_bytes=_VMEM_LIMIT),
    )(h, g, b, w_bf16, hb)


# ----------------------------- parameter init -------------------------------

def init_params(key, cfg):
    """Torch-equivalent parameter layout (fused in_proj [E,3E] etc.)."""
    E = cfg["emb_dim"]
    depth = cfg["depth"]
    ps = cfg["patch_size"]
    patch_dim = ps * ps * cfg["in_channels"]
    out_patch_dim = ps * ps * cfg["out_channels"]
    n_patches = (cfg["image_size"][0] // ps) * (cfg["image_size"][1] // ps)
    max_len = cfg["in_frames"] * n_patches * 2
    mlp_hidden = int(E * cfg["mlp_ratio"])

    keys = jax.random.split(key, depth + 4)

    def lin(k, fan_in, fan_out):
        k1, k2 = jax.random.split(k)
        w = jax.random.normal(k1, (fan_in, fan_out), jnp.float32) * 0.02
        b = jax.random.normal(k2, (fan_out,), jnp.float32) * 0.02
        return w, b

    params = {}
    params["patch_w"], params["patch_b"] = lin(keys[0], patch_dim, E)
    params["pos"] = jax.random.normal(keys[1], (1, max_len, E), jnp.float32) * 0.02

    layers = []
    for d in range(depth):
        lk = jax.random.split(keys[2 + d], 4)
        wqkv, bqkv = lin(lk[0], E, 3 * E)       # fused in-projection (q|k|v columns)
        wo, bo = lin(lk[1], E, E)
        w1, b1 = lin(lk[2], E, mlp_hidden)
        w2, b2 = lin(lk[3], mlp_hidden, E)
        layers.append(dict(
            ln1_g=jnp.ones((E,), jnp.float32), ln1_b=jnp.zeros((E,), jnp.float32),
            wqkv=wqkv, bqkv=bqkv, wo=wo, bo=bo,
            ln2_g=jnp.ones((E,), jnp.float32), ln2_b=jnp.zeros((E,), jnp.float32),
            w1=w1, b1=b1, w2=w2, b2=b2,
        ))
    params["layers"] = layers
    params["lnf_g"] = jnp.ones((E,), jnp.float32)
    params["lnf_b"] = jnp.zeros((E,), jnp.float32)
    params["head_w"], params["head_b"] = lin(keys[2 + depth], E, out_patch_dim)
    return params


def prepare_params(params, cfg, n_tok, b_tile):
    """One-time prep: stack per-layer weights along depth, split Q/K/V/Wo
    head-major, fold the attention scale into Wq/bq, and cast weights to bf16."""
    E = cfg["emb_dim"]
    H = cfg["num_heads"]
    hd = E // H
    depth = cfg["depth"]
    hid = int(E * cfg["mlp_ratio"])
    scale = 1.0 / math.sqrt(hd)

    prep = {}
    prep["patch_w"] = params["patch_w"].astype(jnp.bfloat16)
    prep["patch_b"] = params["patch_b"].reshape(1, E)
    pos = params["pos"][0, :n_tok, :]
    prep["pos_tile"] = jnp.tile(pos, (b_tile, 1))              # [MB, E] f32

    def stack(name):
        return jnp.stack([lw[name] for lw in params["layers"]], axis=0)

    wqkv = stack("wqkv")                                       # [depth, E, 3E]
    bqkv = stack("bqkv")                                       # [depth, 3E]
    wq, wk, wv = wqkv[:, :, :E], wqkv[:, :, E:2 * E], wqkv[:, :, 2 * E:]
    bq, bk, bv = bqkv[:, :E], bqkv[:, E:2 * E], bqkv[:, 2 * E:]

    def hm_w(w):   # [depth, E, E] -> [depth, H, E, hd] (head-major columns)
        return jnp.transpose(w.reshape(depth, E, H, hd), (0, 2, 1, 3))

    def hm_b(b):   # [depth, E] -> [depth, H, 1, hd]
        return b.reshape(depth, H, 1, hd)

    prep["enc"] = dict(
        ln1_g=stack("ln1_g").reshape(depth, 1, E),
        ln1_b=stack("ln1_b").reshape(depth, 1, E),
        wq=(hm_w(wq) * scale).astype(jnp.bfloat16),            # scale folded in
        bq=hm_b(bq) * scale,
        wk=hm_w(wk).astype(jnp.bfloat16), bk=hm_b(bk),
        wv=hm_w(wv).astype(jnp.bfloat16), bv=hm_b(bv),
        wo=stack("wo").reshape(depth, H, hd, E).astype(jnp.bfloat16),  # row-split per head
        bo=stack("bo").reshape(depth, 1, E),
        ln2_g=stack("ln2_g").reshape(depth, 1, E),
        ln2_b=stack("ln2_b").reshape(depth, 1, E),
        w1=stack("w1").astype(jnp.bfloat16),
        b1=stack("b1").reshape(depth, 1, hid),
        w2=stack("w2").astype(jnp.bfloat16),
        b2=stack("b2").reshape(depth, 1, E),
    )
    prep["lnf_g"] = params["lnf_g"].reshape(1, E)
    prep["lnf_b"] = params["lnf_b"].reshape(1, E)
    prep["head_w"] = params["head_w"].astype(jnp.bfloat16)
    prep["head_b"] = params["head_b"].reshape(1, -1)
    return prep


def choose_b_tile(B, N):
    """Batch elements per grid step: fill the matmul M dimension (~>=128 rows
    where possible) while dividing B evenly."""
    bt = min(B, max(1, 128 // N))
    while B % bt != 0:
        bt -= 1
    return max(bt, 1)


# ------------------------------- forward pass -------------------------------

def vivit_forward(prep, x, cfg, b_tile):
    """x: [B, T, C, H, W]  ->  [B, out_frames, out_channels, H, W]"""
    B, T, C, Himg, Wimg = x.shape
    assert T == cfg["in_frames"]
    if cfg["out_frames"] != cfg["in_frames"]:
        raise NotImplementedError("This simple example only handles out_frames == in_frames.")
    ps = cfg["patch_size"]
    nH, nW = Himg // ps, Wimg // ps
    N = T * nH * nW
    E = cfg["emb_dim"]
    num_heads = cfg["num_heads"]
    depth = cfg["depth"]
    Cout = cfg["out_channels"]
    assert N % 8 == 0, "tokens-per-sample must be a multiple of 8 (TPU sublanes)"
    assert E % num_heads == 0
    assert B % b_tile == 0
    mb = b_tile * N
    num_m_blocks = B // b_tile

    # --- patchify: nn.Unfold ordering -> per patch (C, ph, pw), patches row-major.
    # TODO(synk): this layout pass is done in XLA; fold into the embed kernel's
    # index_map only if needed for very large videos.
    xp = x.reshape(B * T, C, nH, ps, nW, ps)
    xp = jnp.transpose(xp, (0, 2, 4, 1, 3, 5))                 # [BT, nH, nW, C, ps, ps]
    patches = xp.reshape(B * N, C * ps * ps).astype(jnp.bfloat16)

    # --- fused patch embedding + learned positional embedding ---
    h = embed_tokens(patches, prep["patch_w"], prep["patch_b"], prep["pos_tile"],
                     num_m_blocks, mb)                         # [B*N, E] bf16

    # --- whole transformer encoder stack in ONE fused Pallas kernel ---
    h = encoder_stack(h, prep["enc"], num_m_blocks=num_m_blocks, mb=mb,
                      b_tile=b_tile, n_tok=N, num_heads=num_heads, depth=depth)

    # --- fused final LayerNorm + video-head projection ---
    pv = final_head(h, prep["lnf_g"], prep["lnf_b"], prep["head_w"], prep["head_b"],
                    num_m_blocks, mb)                          # [B*N, Cout*ps*ps] f32

    # --- un-patchify (matches SimpleVideoHead permute) ---
    pv = pv.reshape(B, T, nH, nW, Cout, ps, ps)
    pv = jnp.transpose(pv, (0, 1, 4, 2, 5, 3, 6))              # [B, T, Cout, nH, ps, nW, ps]
    return pv.reshape(B, T, Cout, nH * ps, nW * ps)


# ----------------------------------- main ------------------------------------

if __name__ == "__main__":
    cfg = dict(
        in_channels=3,
        image_size=(32, 32),
        patch_size=16,
        emb_dim=128,
        depth=2,
        num_heads=4,
        mlp_ratio=4.0,
        out_channels=3,
        in_frames=4,
        out_frames=4,
    )

    key = jax.random.PRNGKey(0)
    pkey, xkey = jax.random.split(key)
    params = init_params(pkey, cfg)

    B = 2
    Himg, Wimg = cfg["image_size"]
    x = jax.random.normal(
        xkey, (B, cfg["in_frames"], cfg["in_channels"], Himg, Wimg), jnp.float32)

    ps = cfg["patch_size"]
    N = cfg["in_frames"] * (Himg // ps) * (Wimg // ps)
    b_tile = choose_b_tile(B, N)
    prep = prepare_params(params, cfg, N, b_tile)

    fwd = jax.jit(functools.partial(vivit_forward, cfg=cfg, b_tile=b_tile))
    out = jax.block_until_ready(fwd(prep, x))

    expected = (B, cfg["out_frames"], cfg["out_channels"], Himg, Wimg)
    assert out.shape == expected, (out.shape, expected)
    assert bool(jnp.all(jnp.isfinite(out)))
    print("KERNEL_OK")
</pallas_src>

<mosaic_0001>
module attributes {stable_mosaic.version = 11 : i64} {
  func.func @_embed_kernel(%arg0: i32, %arg1: memref<32x768xbf16, #tpu.memory_space<vmem>>, %arg2: memref<768x128xbf16, #tpu.memory_space<vmem>>, %arg3: memref<1x128xf32, #tpu.memory_space<vmem>>, %arg4: memref<32x128xf32, #tpu.memory_space<vmem>>, %arg5: memref<32x128xbf16, #tpu.memory_space<vmem>>) attributes {dimension_semantics = [#tpu.dimension_semantics<parallel>], iteration_bounds = array<i64: 1>, scalar_prefetch = 0 : i64, scratch_operands = 0 : i64, tpu.core_type = #tpu.core_type<tc>, window_params = [{transform_indices = @transform_0, window_bounds = array<i64: 32, 768>}, {pipeline_mode = #tpu.pipeline_mode<synchronous>, transform_indices = @transform_1, window_bounds = array<i64: 768, 128>}, {pipeline_mode = #tpu.pipeline_mode<synchronous>, transform_indices = @transform_2, window_bounds = array<i64: 1, 128>}, {pipeline_mode = #tpu.pipeline_mode<synchronous>, transform_indices = @transform_3, window_bounds = array<i64: 32, 128>}, {transform_indices = @transform_4, window_bounds = array<i64: 32, 128>}]} {
    %c0 = arith.constant 0 : index
    %c0_0 = arith.constant 0 : index
    %0 = vector.load %arg1[%c0, %c0_0] : memref<32x768xbf16, #tpu.memory_space<vmem>>, vector<32x768xbf16>
    %c0_1 = arith.constant 0 : index
    %c0_2 = arith.constant 0 : index
    %1 = vector.load %arg2[%c0_1, %c0_2] : memref<768x128xbf16, #tpu.memory_space<vmem>>, vector<768x128xbf16>
    %cst = arith.constant dense<0.000000e+00> : vector<32x128xf32>
    %2 = tpu.matmul %0, %1, %cst {dimension_numbers = #tpu.dot_dimension_numbers<[1], [0], [0], [1], [0, 0, 1, 1], [], []>} : vector<32x768xbf16>, vector<768x128xbf16>, vector<32x128xf32> -> vector<32x128xf32>
    %c0_3 = arith.constant 0 : index
    %c0_4 = arith.constant 0 : index
    %3 = vector.load %arg3[%c0_3, %c0_4] : memref<1x128xf32, #tpu.memory_space<vmem>>, vector<1x128xf32>
    %4 = vector.broadcast %3 : vector<1x128xf32> to vector<32x128xf32>
    %5 = arith.addf %2, %4 : vector<32x128xf32>
    %c0_5 = arith.constant 0 : index
    %c0_6 = arith.constant 0 : index
    %6 = vector.load %arg4[%c0_5, %c0_6] : memref<32x128xf32, #tpu.memory_space<vmem>>, vector<32x128xf32>
    %7 = arith.addf %5, %6 : vector<32x128xf32>
    %8 = arith.truncf %7 : vector<32x128xf32> to vector<32x128xbf16>
    %c0_7 = arith.constant 0 : index
    %c0_8 = arith.constant 0 : index
    %9 = vector.load %arg5[%c0_7, %c0_8] : memref<32x128xbf16, #tpu.memory_space<vmem>>, vector<32x128xbf16>
    tpu.vector_store %arg5[%c0_7, %c0_8], %8 {strides = array<i32>} : memref<32x128xbf16, #tpu.memory_space<vmem>>, vector<32x128xbf16>,
    return
  }
  func.func @transform_0(%arg0: i32) -> (i32, i32) {
    %c0_i32 = arith.constant 0 : i32
    %c0_i32_0 = arith.constant 0 : i32
    return %arg0, %c0_i32 : i32, i32
  }
  func.func @transform_1(%arg0: i32) -> (i32, i32) {
    %c0_i32 = arith.constant 0 : i32
    %c0_i32_0 = arith.constant 0 : i32
    %c0_i32_1 = arith.constant 0 : i32
    return %c0_i32, %c0_i32_0 : i32, i32
  }
  func.func @transform_2(%arg0: i32) -> (i32, i32) {
    %c0_i32 = arith.constant 0 : i32
    %c0_i32_0 = arith.constant 0 : i32
    %c0_i32_1 = arith.constant 0 : i32
    return %c0_i32, %c0_i32_0 : i32, i32
  }
  func.func @transform_3(%arg0: i32) -> (i32, i32) {
    %c0_i32 = arith.constant 0 : i32
    %c0_i32_0 = arith.constant 0 : i32
    %c0_i32_1 = arith.constant 0 : i32
    return %c0_i32, %c0_i32_0 : i32, i32
  }
  func.func @transform_4(%arg0: i32) -> (i32, i32) {
    %c0_i32 = arith.constant 0 : i32
    %c0_i32_0 = arith.constant 0 : i32
    return %arg0, %c0_i32 : i32, i32
  }
}

module attributes {stable_mosaic.version = 11 : i64} {
  func.func @_encoder_stack_kernel(%arg0: i32, %arg1: i32, %arg2: memref<32x128xbf16, #tpu.memory_space<vmem>>, %arg3: memref<1x1x128xf32, #tpu.memory_space<vmem>>, %arg4: memref<1x1x128xf32, #tpu.memory_space<vmem>>, %arg5: memref<1x4x128x32xbf16, #tpu.memory_space<vmem>>, %arg6: memref<1x4x1x32xf32, #tpu.memory_space<vmem>>, %arg7: memref<1x4x128x32xbf16, #tpu.memory_space<vmem>>, %arg8: memref<1x4x1x32xf32, #tpu.memory_space<vmem>>, %arg9: memref<1x4x128x32xbf16, #tpu.memory_space<vmem>>, %arg10: memref<1x4x1x32xf32, #tpu.memory_space<vmem>>, %arg11: memref<1x4x32x128xbf16, #tpu.memory_space<vmem>>, %arg12: memref<1x1x128xf32, #tpu.memory_space<vmem>>, %arg13: memref<1x1x128xf32, #tpu.memory_space<vmem>>, %arg14: memref<1x1x128xf32, #tpu.memory_space<vmem>>, %arg15: memref<1x128x512xbf16, #tpu.memory_space<vmem>>, %arg16: memref<1x1x512xf32, #tpu.memory_space<vmem>>, %arg17: memref<1x512x128xbf16, #tpu.memory_space<vmem>>, %arg18: memref<1x1x128xf32, #tpu.memory_space<vmem>>, %arg19: memref<32x128xbf16, #tpu.memory_space<vmem>>, %arg20: memref<32x128xf32, #tpu.memory_space<vmem>>) attributes {dimension_semantics = [#tpu.dimension_semantics<parallel>, #tpu.dimension_semantics<arbitrary>], iteration_bounds = array<i64: 1, 2>, scalar_prefetch = 0 : i64, scratch_operands = 1 : i64, tpu.core_type = #tpu.core_type<tc>, window_params = [{transform_indices = @transform_0, window_bounds = array<i64: 32, 128>}, {transform_indices = @transform_1, window_bounds = array<i64: 1, 1, 128>}, {transform_indices = @transform_2, window_bounds = array<i64: 1, 1, 128>}, {transform_indices = @transform_3, window_bounds = array<i64: 1, 4, 128, 32>}, {transform_indices = @transform_4, window_bounds = array<i64: 1, 4, 1, 32>}, {transform_indices = @transform_5, window_bounds = array<i64: 1, 4, 128, 32>}, {transform_indices = @transform_6, window_bounds = array<i64: 1, 4, 1, 32>}, {transform_indices = @transform_7, window_bounds = array<i64: 1, 4, 128, 32>}, {transform_indices = @transform_8, window_bounds = array<i64: 1, 4, 1, 32>}, {transform_indices = @transform_9, window_bounds = array<i64: 1, 4, 32, 128>}, {transform_indices = @transform_10, window_bounds = array<i64: 1, 1, 128>}, {transform_indices = @transform_11, window_bounds = array<i64: 1, 1, 128>}, {transform_indices = @transform_12, window_bounds = array<i64: 1, 1, 128>}, {transform_indices = @transform_13, window_bounds = array<i64: 1, 128, 512>}, {transform_indices = @transform_14, window_bounds = array<i64: 1, 1, 512>}, {transform_indices = @transform_15, window_bounds = array<i64: 1, 512, 128>}, {transform_indices = @transform_16, window_bounds = array<i64: 1, 1, 128>}, {transform_indices = @transform_17, window_bounds = array<i64: 32, 128>}]} {
    %c0_i32 = arith.constant 0 : i32
    %0 = arith.cmpi eq, %arg1, %c0_i32 : i32
    %1 = arith.extui %0 : i1 to i32
    %c0_i32_0 = arith.constant 0 : i32
    %2 = arith.cmpi ne, %1, %c0_i32_0 : i32
    scf.if %2 {
      %c0_188 = arith.constant 0 : index
      %c0_189 = arith.constant 0 : index
      %272 = vector.load %arg2[%c0_188, %c0_189] : memref<32x128xbf16, #tpu.memory_space<vmem>>, vector<32x128xbf16>
      %273 = arith.extf %272 : vector<32x128xbf16> to vector<32x128xf32>
      %c0_190 = arith.constant 0 : index
      %c0_191 = arith.constant 0 : index
      %274 = vector.load %arg20[%c0_190, %c0_191] : memref<32x128xf32, #tpu.memory_space<vmem>>, vector<32x128xf32>
      tpu.vector_store %arg20[%c0_190, %c0_191], %273 {strides = array<i32>} : memref<32x128xf32, #tpu.memory_space<vmem>>, vector<32x128xf32>,
    } else {
    }
    %c0 = arith.constant 0 : index
    %c0_1 = arith.constant 0 : index
    %3 = vector.load %arg20[%c0, %c0_1] : memref<32x128xf32, #tpu.memory_space<vmem>>, vector<32x128xf32>
    %c0_2 = arith.constant 0 : index
    %c0_3 = arith.constant 0 : index
    %c0_4 = arith.constant 0 : index
    %4 = vector.load %arg3[%c0_2, %c0_3, %c0_4] : memref<1x1x128xf32, #tpu.memory_space<vmem>>, vector<1x1x128xf32>
    %5 = vector.shape_cast %4 : vector<1x1x128xf32> to vector<1x128xf32>
    %c0_5 = arith.constant 0 : index
    %c0_6 = arith.constant 0 : index
    %c0_7 = arith.constant 0 : index
    %6 = vector.load %arg4[%c0_5, %c0_6, %c0_7] : memref<1x1x128xf32, #tpu.memory_space<vmem>>, vector<1x1x128xf32>
    %7 = vector.shape_cast %6 : vector<1x1x128xf32> to vector<1x128xf32>
    %cst = arith.constant dense<0.000000e+00> : vector<32xf32>
    %8 = vector.multi_reduction <add>, %3, %cst [1] : vector<32x128xf32> to vector<32xf32>
    %9 = vector.shape_cast %8 : vector<32xf32> to vector<32x1xf32>
    %cst_8 = arith.constant 1.280000e+02 : f32
    %10 = vector.broadcast %cst_8 : f32 to vector<32x1xf32>
    %11 = arith.divf %9, %10 : vector<32x1xf32>
    %12 = vector.broadcast %11 : vector<32x1xf32> to vector<32x128xf32>
    %13 = arith.subf %3, %12 : vector<32x128xf32>
    %14 = arith.mulf %13, %13 : vector<32x128xf32>
    %cst_9 = arith.constant dense<0.000000e+00> : vector<32xf32>
    %15 = vector.multi_reduction <add>, %14, %cst_9 [1] : vector<32x128xf32> to vector<32xf32>
    %16 = vector.shape_cast %15 : vector<32xf32> to vector<32x1xf32>
    %cst_10 = arith.constant 1.280000e+02 : f32
    %17 = vector.broadcast %cst_10 : f32 to vector<32x1xf32>
    %18 = arith.divf %16, %17 : vector<32x1xf32>
    %cst_11 = arith.constant 9.99999974E-6 : f32
    %19 = vector.broadcast %cst_11 : f32 to vector<32x1xf32>
    %20 = arith.addf %18, %19 : vector<32x1xf32>
    %21 = math.rsqrt %20 : vector<32x1xf32>
    %22 = vector.broadcast %21 : vector<32x1xf32> to vector<32x128xf32>
    %23 = arith.mulf %13, %22 : vector<32x128xf32>
    %24 = vector.broadcast %5 : vector<1x128xf32> to vector<32x128xf32>
    %25 = arith.mulf %23, %24 : vector<32x128xf32>
    %26 = vector.broadcast %7 : vector<1x128xf32> to vector<32x128xf32>
    %27 = arith.addf %25, %26 : vector<32x128xf32>
    %28 = arith.truncf %27 : vector<32x128xf32> to vector<32x128xbf16>
    %cst_12 = arith.constant 0.000000e+00 : f32
    %29 = vector.broadcast %cst_12 : f32 to vector<32x128xf32>
    %c0_13 = arith.constant 0 : index
    %c0_14 = arith.constant 0 : index
    %c0_15 = arith.constant 0 : index
    %c0_16 = arith.constant 0 : index
    %30 = vector.load %arg5[%c0_13, %c0_14, %c0_15, %c0_16] : memref<1x4x128x32xbf16, #tpu.memory_space<vmem>>, vector<1x1x128x32xbf16>
    %31 = vector.shape_cast %30 : vector<1x1x128x32xbf16> to vector<128x32xbf16>
    %cst_17 = arith.constant dense<0.000000e+00> : vector<32x32xf32>
    %32 = tpu.matmul %28, %31, %cst_17 {dimension_numbers = #tpu.dot_dimension_numbers<[1], [0], [0], [1], [0, 0, 1, 1], [], []>} : vector<32x128xbf16>, vector<128x32xbf16>, vector<32x32xf32> -> vector<32x32xf32>
    %c0_18 = arith.constant 0 : index
    %c0_19 = arith.constant 0 : index
    %c0_20 = arith.constant 0 : index
    %c0_21 = arith.constant 0 : index
    %33 = vector.load %arg6[%c0_18, %c0_19, %c0_20, %c0_21] : memref<1x4x1x32xf32, #tpu.memory_space<vmem>>, vector<1x1x1x32xf32>
    %34 = vector.shape_cast %33 : vector<1x1x1x32xf32> to vector<1x32xf32>
    %35 = vector.broadcast %34 : vector<1x32xf32> to vector<32x32xf32>
    %36 = arith.addf %32, %35 : vector<32x32xf32>
    %c0_22 = arith.constant 0 : index
    %c0_23 = arith.constant 0 : index
    %c0_24 = arith.constant 0 : index
    %c0_25 = arith.constant 0 : index
    %37 = vector.load %arg7[%c0_22, %c0_23, %c0_24, %c0_25] : memref<1x4x128x32xbf16, #tpu.memory_space<vmem>>, vector<1x1x128x32xbf16>
    %38 = vector.shape_cast %37 : vector<1x1x128x32xbf16> to vector<128x32xbf16>
    %cst_26 = arith.constant dense<0.000000e+00> : vector<32x32xf32>
    %39 = tpu.matmul %28, %38, %cst_26 {dimension_numbers = #tpu.dot_dimension_numbers<[1], [0], [0], [1], [0, 0, 1, 1], [], []>} : vector<32x128xbf16>, vector<128x32xbf16>, vector<32x32xf32> -> vector<32x32xf32>
    %c0_27 = arith.constant 0 : index
    %c0_28 = arith.constant 0 : index
    %c0_29 = arith.constant 0 : index
    %c0_30 = arith.constant 0 : index
    %40 = vector.load %arg8[%c0_27, %c0_28, %c0_29, %c0_30] : memref<1x4x1x32xf32, #tpu.memory_space<vmem>>, vector<1x1x1x32xf32>
    %41 = vector.shape_cast %40 : vector<1x1x1x32xf32> to vector<1x32xf32>
    %42 = vector.broadcast %41 : vector<1x32xf32> to vector<32x32xf32>
    %43 = arith.addf %39, %42 : vector<32x32xf32>
    %c0_31 = arith.constant 0 : index
    %c0_32 = arith.constant 0 : index
    %c0_33 = arith.constant 0 : index
    %c0_34 = arith.constant 0 : index
    %44 = vector.load %arg9[%c0_31, %c0_32, %c0_33, %c0_34] : memref<1x4x128x32xbf16, #tpu.memory_space<vmem>>, vector<1x1x128x32xbf16>
    %45 = vector.shape_cast %44 : vector<1x1x128x32xbf16> to vector<128x32xbf16>
    %cst_35 = arith.constant dense<0.000000e+00> : vector<32x32xf32>
    %46 = tpu.matmul %28, %45, %cst_35 {dimension_numbers = #tpu.dot_dimension_numbers<[1], [0], [0], [1], [0, 0, 1, 1], [], []>} : vector<32x128xbf16>, vector<128x32xbf16>, vector<32x32xf32> -> vector<32x32xf32>
    %c0_36 = arith.constant 0 : index
    %c0_37 = arith.constant 0 : index
    %c0_38 = arith.constant 0 : index
    %c0_39 = arith.constant 0 : index
    %47 = vector.load %arg10[%c0_36, %c0_37, %c0_38, %c0_39] : memref<1x4x1x32xf32, #tpu.memory_space<vmem>>, vector<1x1x1x32xf32>
    %48 = vector.shape_cast %47 : vector<1x1x1x32xf32> to vector<1x32xf32>
    %49 = vector.broadcast %48 : vector<1x32xf32> to vector<32x32xf32>
    %50 = arith.addf %46, %49 : vector<32x32xf32>
    %51 = vector.shape_cast %36 : vector<32x32xf32> to vector<2x16x32xf32>
    %52 = arith.truncf %51 : vector<2x16x32xf32> to vector<2x16x32xbf16>
    %53 = vector.shape_cast %43 : vector<32x32xf32> to vector<2x16x32xf32>
    %54 = arith.truncf %53 : vector<2x16x32xf32> to vector<2x16x32xbf16>
    %55 = vector.shape_cast %50 : vector<32x32xf32> to vector<2x16x32xf32>
    %56 = arith.truncf %55 : vector<2x16x32xf32> to vector<2x16x32xbf16>
    "tpu.trace_start"() <{level = 10 : i32, message = "bqd,bkd->bqk"}> : () -> ()
    %cst_40 = arith.constant dense<0.000000e+00> : vector<2x16x16xf32>
    %57 = tpu.matmul %52, %54, %cst_40 {dimension_numbers = #tpu.dot_dimension_numbers<[2], [2], [1], [1], [0, 0, 0, 1, 1, 1], [0], [0]>} : vector<2x16x32xbf16>, vector<2x16x32xbf16>, vector<2x16x16xf32> -> vector<2x16x16xf32>
    "tpu.trace_stop"() : () -> ()
    %cst_41 = arith.constant dense<0xFF800000> : vector<2x16xf32>
    %58 = vector.multi_reduction <maximumf>, %57, %cst_41 [2] : vector<2x16x16xf32> to vector<2x16xf32>
    %59 = vector.shape_cast %58 : vector<2x16xf32> to vector<2x16x1xf32>
    %60 = vector.broadcast %59 : vector<2x16x1xf32> to vector<2x16x16xf32>
    %61 = arith.subf %57, %60 : vector<2x16x16xf32>
    %62 = math.exp %61 : vector<2x16x16xf32>
    %cst_42 = arith.constant dense<0.000000e+00> : vector<2x16xf32>
    %63 = vector.multi_reduction <add>, %62, %cst_42 [2] : vector<2x16x16xf32> to vector<2x16xf32>
    %64 = vector.shape_cast %63 : vector<2x16xf32> to vector<2x16x1xf32>
    %65 = tpu.reciprocal %64 {approx = true} : vector<2x16x1xf32> -> vector<2x16x1xf32>
    %66 = vector.broadcast %65 : vector<2x16x1xf32> to vector<2x16x16xf32>
    %67 = arith.mulf %62, %66 : vector<2x16x16xf32>
    %68 = arith.truncf %67 : vector<2x16x16xf32> to vector<2x16x16xbf16>
    "tpu.trace_start"() <{level = 10 : i32, message = "bqk,bkd->bqd"}> : () -> ()
    %cst_43 = arith.constant dense<0.000000e+00> : vector<2x16x32xf32>
    %69 = tpu.matmul %68, %56, %cst_43 {dimension_numbers = #tpu.dot_dimension_numbers<[2], [1], [1], [2], [0, 0, 0, 1, 1, 2], [0], [0]>} : vector<2x16x16xbf16>, vector<2x16x32xbf16>, vector<2x16x32xf32> -> vector<2x16x32xf32>
    "tpu.trace_stop"() : () -> ()
    %70 = vector.shape_cast %69 : vector<2x16x32xf32> to vector<32x32xf32>
    %71 = arith.truncf %70 : vector<32x32xf32> to vector<32x32xbf16>
    %c0_44 = arith.constant 0 : index
    %c0_45 = arith.constant 0 : index
    %c0_46 = arith.constant 0 : index
    %c0_47 = arith.constant 0 : index
    %72 = vector.load %arg11[%c0_44, %c0_45, %c0_46, %c0_47] : memref<1x4x32x128xbf16, #tpu.memory_space<vmem>>, vector<1x1x32x128xbf16>
    %73 = vector.shape_cast %72 : vector<1x1x32x128xbf16> to vector<32x128xbf16>
    %cst_48 = arith.constant dense<0.000000e+00> : vector<32x128xf32>
    %74 = tpu.matmul %71, %73, %cst_48 {dimension_numbers = #tpu.dot_dimension_numbers<[1], [0], [0], [1], [0, 0, 1, 1], [], []>} : vector<32x32xbf16>, vector<32x128xbf16>, vector<32x128xf32> -> vector<32x128xf32>
    %75 = arith.addf %29, %74 : vector<32x128xf32>
    %c0_49 = arith.constant 0 : index
    %c1 = arith.constant 1 : index
    %c0_50 = arith.constant 0 : index
    %c0_51 = arith.constant 0 : index
    %76 = vector.load %arg5[%c0_49, %c1, %c0_50, %c0_51] : memref<1x4x128x32xbf16, #tpu.memory_space<vmem>>, vector<1x1x128x32xbf16>
    %77 = vector.shape_cast %76 : vector<1x1x128x32xbf16> to vector<128x32xbf16>
    %cst_52 = arith.constant dense<0.000000e+00> : vector<32x32xf32>
    %78 = tpu.matmul %28, %77, %cst_52 {dimension_numbers = #tpu.dot_dimension_numbers<[1], [0], [0], [1], [0, 0, 1, 1], [], []>} : vector<32x128xbf16>, vector<128x32xbf16>, vector<32x32xf32> -> vector<32x32xf32>
    %c0_53 = arith.constant 0 : index
    %c1_54 = arith.constant 1 : index
    %c0_55 = arith.constant 0 : index
    %c0_56 = arith.constant 0 : index
    %79 = vector.load %arg6[%c0_53, %c1_54, %c0_55, %c0_56] : memref<1x4x1x32xf32, #tpu.memory_space<vmem>>, vector<1x1x1x32xf32>
    %80 = vector.shape_cast %79 : vector<1x1x1x32xf32> to vector<1x32xf32>
    %81 = vector.broadcast %80 : vector<1x32xf32> to vector<32x32xf32>
    %82 = arith.addf %78, %81 : vector<32x32xf32>
    %c0_57 = arith.constant 0 : index
    %c1_58 = arith.constant 1 : index
    %c0_59 = arith.constant 0 : index
    %c0_60 = arith.constant 0 : index
    %83 = vector.load %arg7[%c0_57, %c1_58, %c0_59, %c0_60] : memref<1x4x128x32xbf16, #tpu.memory_space<vmem>>, vector<1x1x128x32xbf16>
    %84 = vector.shape_cast %83 : vector<1x1x128x32xbf16> to vector<128x32xbf16>
    %cst_61 = arith.constant dense<0.000000e+00> : vector<32x32xf32>
    %85 = tpu.matmul %28, %84, %cst_61 {dimension_numbers = #tpu.dot_dimension_numbers<[1], [0], [0], [1], [0, 0, 1, 1], [], []>} : vector<32x128xbf16>, vector<128x32xbf16>, vector<32x32xf32> -> vector<32x32xf32>
    %c0_62 = arith.constant 0 : index
    %c1_63 = arith.constant 1 : index
    %c0_64 = arith.constant 0 : index
    %c0_65 = arith.constant 0 : index
    %86 = vector.load %arg8[%c0_62, %c1_63, %c0_64, %c0_65] : memref<1x4x1x32xf32, #tpu.memory_space<vmem>>, vector<1x1x1x32xf32>
    %87 = vector.shape_cast %86 : vector<1x1x1x32xf32> to vector<1x32xf32>
    %88 = vector.broadcast %87 : vector<1x32xf32> to vector<32x32xf32>
    %89 = arith.addf %85, %88 : vector<32x32xf32>
    %c0_66 = arith.constant 0 : index
    %c1_67 = arith.constant 1 : index
    %c0_68 = arith.constant 0 : index
    %c0_69 = arith.constant 0 : index
    %90 = vector.load %arg9[%c0_66, %c1_67, %c0_68, %c0_69] : memref<1x4x128x32xbf16, #tpu.memory_space<vmem>>, vector<1x1x128x32xbf16>
    %91 = vector.shape_cast %90 : vector<1x1x128x32xbf16> to vector<128x32xbf16>
    %cst_70 = arith.constant dense<0.000000e+00> : vector<32x32xf32>
    %92 = tpu.matmul %28, %91, %cst_70 {dimension_numbers = #tpu.dot_dimension_numbers<[1], [0], [0], [1], [0, 0, 1, 1], [], []>} : vector<32x128xbf16>, vector<128x32xbf16>, vector<32x32xf32> -> vector<32x32xf32>
    %c0_71 = arith.constant 0 : index
    %c1_72 = arith.constant 1 : index
    %c0_73 = arith.constant 0 : index
    %c0_74 = arith.constant 0 : index
    %93 = vector.load %arg10[%c0_71, %c1_72, %c0_73, %c0_74] : memref<1x4x1x32xf32, #tpu.memory_space<vmem>>, vector<1x1x1x32xf32>
    %94 = vector.shape_cast %93 : vector<1x1x1x32xf32> to vector<1x32xf32>
    %95 = vector.broadcast %94 : vector<1x32xf32> to vector<32x32xf32>
    %96 = arith.addf %92, %95 : vector<32x32xf32>
    %97 = vector.shape_cast %82 : vector<32x32xf32> to vector<2x16x32xf32>
    %98 = arith.truncf %97 : vector<2x16x32xf32> to vector<2x16x32xbf16>
    %99 = vector.shape_cast %89 : vector<32x32xf32> to vector<2x16x32xf32>
    %100 = arith.truncf %99 : vector<2x16x32xf32> to vector<2x16x32xbf16>
    %101 = vector.shape_cast %96 : vector<32x32xf32> to vector<2x16x32xf32>
    %102 = arith.truncf %101 : vector<2x16x32xf32> to vector<2x16x32xbf16>
    "tpu.trace_start"() <{level = 10 : i32, message = "bqd,bkd->bqk"}> : () -> ()
    %cst_75 = arith.constant dense<0.000000e+00> : vector<2x16x16xf32>
    %103 = tpu.matmul %98, %100, %cst_75 {dimension_numbers = #tpu.dot_dimension_numbers<[2], [2], [1], [1], [0, 0, 0, 1, 1, 1], [0], [0]>} : vector<2x16x32xbf16>, vector<2x16x32xbf16>, vector<2x16x16xf32> -> vector<2x16x16xf32>
    "tpu.trace_stop"() : () -> ()
    %cst_76 = arith.constant dense<0xFF800000> : vector<2x16xf32>
    %104 = vector.multi_reduction <maximumf>, %103, %cst_76 [2] : vector<2x16x16xf32> to vector<2x16xf32>
    %105 = vector.shape_cast %104 : vector<2x16xf32> to vector<2x16x1xf32>
    %106 = vector.broadcast %105 : vector<2x16x1xf32> to vector<2x16x16xf32>
    %107 = arith.subf %103, %106 : vector<2x16x16xf32>
    %108 = math.exp %107 : vector<2x16x16xf32>
    %cst_77 = arith.constant dense<0.000000e+00> : vector<2x16xf32>
    %109 = vector.multi_reduction <add>, %108, %cst_77 [2] : vector<2x16x16xf32> to vector<2x16xf32>
    %110 = vector.shape_cast %109 : vector<2x16xf32> to vector<2x16x1xf32>
    %111 = tpu.reciprocal %110 {approx = true} : vector<2x16x1xf32> -> vector<2x16x1xf32>
    %112 = vector.broadcast %111 : vector<2x16x1xf32> to vector<2x16x16xf32>
    %113 = arith.mulf %108, %112 : vector<2x16x16xf32>
    %114 = arith.truncf %113 : vector<2x16x16xf32> to vector<2x16x16xbf16>
    "tpu.trace_start"() <{level = 10 : i32, message = "bqk,bkd->bqd"}> : () -> ()
    %cst_78 = arith.constant dense<0.000000e+00> : vector<2x16x32xf32>
    %115 = tpu.matmul %114, %102, %cst_78 {dimension_numbers = #tpu.dot_dimension_numbers<[2], [1], [1], [2], [0, 0, 0, 1, 1, 2], [0], [0]>} : vector<2x16x16xbf16>, vector<2x16x32xbf16>, vector<2x16x32xf32> -> vector<2x16x32xf32>
    "tpu.trace_stop"() : () -> ()
    %116 = vector.shape_cast %115 : vector<2x16x32xf32> to vector<32x32xf32>
    %117 = arith.truncf %116 : vector<32x32xf32> to vector<32x32xbf16>
    %c0_79 = arith.constant 0 : index
    %c1_80 = arith.constant 1 : index
    %c0_81 = arith.constant 0 : index
    %c0_82 = arith.constant 0 : index
    %118 = vector.load %arg11[%c0_79, %c1_80, %c0_81, %c0_82] : memref<1x4x32x128xbf16, #tpu.memory_space<vmem>>, vector<1x1x32x128xbf16>
    %119 = vector.shape_cast %118 : vector<1x1x32x128xbf16> to vector<32x128xbf16>
    %cst_83 = arith.constant dense<0.000000e+00> : vector<32x128xf32>
    %120 = tpu.matmul %117, %119, %cst_83 {dimension_numbers = #tpu.dot_dimension_numbers<[1], [0], [0], [1], [0, 0, 1, 1], [], []>} : vector<32x32xbf16>, vector<32x128xbf16>, vector<32x128xf32> -> vector<32x128xf32>
    %121 = arith.addf %75, %120 : vector<32x128xf32>
    %c0_84 = arith.constant 0 : index
    %c2 = arith.constant 2 : index
    %c0_85 = arith.constant 0 : index
    %c0_86 = arith.constant 0 : index
    %122 = vector.load %arg5[%c0_84, %c2, %c0_85, %c0_86] : memref<1x4x128x32xbf16, #tpu.memory_space<vmem>>, vector<1x1x128x32xbf16>
    %123 = vector.shape_cast %122 : vector<1x1x128x32xbf16> to vector<128x32xbf16>
    %cst_87 = arith.constant dense<0.000000e+00> : vector<32x32xf32>
    %124 = tpu.matmul %28, %123, %cst_87 {dimension_numbers = #tpu.dot_dimension_numbers<[1], [0], [0], [1], [0, 0, 1, 1], [], []>} : vector<32x128xbf16>, vector<128x32xbf16>, vector<32x32xf32> -> vector<32x32xf32>
    %c0_88 = arith.constant 0 : index
    %c2_89 = arith.constant 2 : index
    %c0_90 = arith.constant 0 : index
    %c0_91 = arith.constant 0 : index
    %125 = vector.load %arg6[%c0_88, %c2_89, %c0_90, %c0_91] : memref<1x4x1x32xf32, #tpu.memory_space<vmem>>, vector<1x1x1x32xf32>
    %126 = vector.shape_cast %125 : vector<1x1x1x32xf32> to vector<1x32xf32>
    %127 = vector.broadcast %126 : vector<1x32xf32> to vector<32x32xf32>
    %128 = arith.addf %124, %127 : vector<32x32xf32>
    %c0_92 = arith.constant 0 : index
    %c2_93 = arith.constant 2 : index
    %c0_94 = arith.constant 0 : index
    %c0_95 = arith.constant 0 : index
    %129 = vector.load %arg7[%c0_92, %c2_93, %c0_94, %c0_95] : memref<1x4x128x32xbf16, #tpu.memory_space<vmem>>, vector<1x1x128x32xbf16>
    %130 = vector.shape_cast %129 : vector<1x1x128x32xbf16> to vector<128x32xbf16>
    %cst_96 = arith.constant dense<0.000000e+00> : vector<32x32xf32>
    %131 = tpu.matmul %28, %130, %cst_96 {dimension_numbers = #tpu.dot_dimension_numbers<[1], [0], [0], [1], [0, 0, 1, 1], [], []>} : vector<32x128xbf16>, vector<128x32xbf16>, vector<32x32xf32> -> vector<32x32xf32>
    %c0_97 = arith.constant 0 : index
    %c2_98 = arith.constant 2 : index
    %c0_99 = arith.constant 0 : index
    %c0_100 = arith.constant 0 : index
    %132 = vector.load %arg8[%c0_97, %c2_98, %c0_99, %c0_100] : memref<1x4x1x32xf32, #tpu.memory_space<vmem>>, vector<1x1x1x32xf32>
    %133 = vector.shape_cast %132 : vector<1x1x1x32xf32> to vector<1x32xf32>
    %134 = vector.broadcast %133 : vector<1x32xf32> to vector<32x32xf32>
    %135 = arith.addf %131, %134 : vector<32x32xf32>
    %c0_101 = arith.constant 0 : index
    %c2_102 = arith.constant 2 : index
    %c0_103 = arith.constant 0 : index
    %c0_104 = arith.constant 0 : index
    %136 = vector.load %arg9[%c0_101, %c2_102, %c0_103, %c0_104] : memref<1x4x128x32xbf16, #tpu.memory_space<vmem>>, vector<1x1x128x32xbf16>
    %137 = vector.shape_cast %136 : vector<1x1x128x32xbf16> to vector<128x32xbf16>
    %cst_105 = arith.constant dense<0.000000e+00> : vector<32x32xf32>
    %138 = tpu.matmul %28, %137, %cst_105 {dimension_numbers = #tpu.dot_dimension_numbers<[1], [0], [0], [1], [0, 0, 1, 1], [], []>} : vector<32x128xbf16>, vector<128x32xbf16>, vector<32x32xf32> -> vector<32x32xf32>
    %c0_106 = arith.constant 0 : index
    %c2_107 = arith.constant 2 : index
    %c0_108 = arith.constant 0 : index
    %c0_109 = arith.constant 0 : index
    %139 = vector.load %arg10[%c0_106, %c2_107, %c0_108, %c0_109] : memref<1x4x1x32xf32, #tpu.memory_space<vmem>>, vector<1x1x1x32xf32>
    %140 = vector.shape_cast %139 : vector<1x1x1x32xf32> to vector<1x32xf32>
    %141 = vector.broadcast %140 : vector<1x32xf32> to vector<32x32xf32>
    %142 = arith.addf %138, %141 : vector<32x32xf32>
    %143 = vector.shape_cast %128 : vector<32x32xf32> to vector<2x16x32xf32>
    %144 = arith.truncf %143 : vector<2x16x32xf32> to vector<2x16x32xbf16>
    %145 = vector.shape_cast %135 : vector<32x32xf32> to vector<2x16x32xf32>
    %146 = arith.truncf %145 : vector<2x16x32xf32> to vector<2x16x32xbf16>
    %147 = vector.shape_cast %142 : vector<32x32xf32> to vector<2x16x32xf32>
    %148 = arith.truncf %147 : vector<2x16x32xf32> to vector<2x16x32xbf16>
    "tpu.trace_start"() <{level = 10 : i32, message = "bqd,bkd->bqk"}> : () -> ()
    %cst_110 = arith.constant dense<0.000000e+00> : vector<2x16x16xf32>
    %149 = tpu.matmul %144, %146, %cst_110 {dimension_numbers = #tpu.dot_dimension_numbers<[2], [2], [1], [1], [0, 0, 0, 1, 1, 1], [0], [0]>} : vector<2x16x32xbf16>, vector<2x16x32xbf16>, vector<2x16x16xf32> -> vector<2x16x16xf32>
    "tpu.trace_stop"() : () -> ()
    %cst_111 = arith.constant dense<0xFF800000> : vector<2x16xf32>
    %150 = vector.multi_reduction <maximumf>, %149, %cst_111 [2] : vector<2x16x16xf32> to vector<2x16xf32>
    %151 = vector.shape_cast %150 : vector<2x16xf32> to vector<2x16x1xf32>
    %152 = vector.broadcast %151 : vector<2x16x1xf32> to vector<2x16x16xf32>
    %153 = arith.subf %149, %152 : vector<2x16x16xf32>
    %154 = math.exp %153 : vector<2x16x16xf32>
    %cst_112 = arith.constant dense<0.000000e+00> : vector<2x16xf32>
    %155 = vector.multi_reduction <add>, %154, %cst_112 [2] : vector<2x16x16xf32> to vector<2x16xf32>
    %156 = vector.shape_cast %155 : vector<2x16xf32> to vector<2x16x1xf32>
    %157 = tpu.reciprocal %156 {approx = true} : vector<2x16x1xf32> -> vector<2x16x1xf32>
    %158 = vector.broadcast %157 : vector<2x16x1xf32> to vector<2x16x16xf32>
    %159 = arith.mulf %154, %158 : vector<2x16x16xf32>
    %160 = arith.truncf %159 : vector<2x16x16xf32> to vector<2x16x16xbf16>
    "tpu.trace_start"() <{level = 10 : i32, message = "bqk,bkd->bqd"}> : () -> ()
    %cst_113 = arith.constant dense<0.000000e+00> : vector<2x16x32xf32>
    %161 = tpu.matmul %160, %148, %cst_113 {dimension_numbers = #tpu.dot_dimension_numbers<[2], [1], [1], [2], [0, 0, 0, 1, 1, 2], [0], [0]>} : vector<2x16x16xbf16>, vector<2x16x32xbf16>, vector<2x16x32xf32> -> vector<2x16x32xf32>
    "tpu.trace_stop"() : () -> ()
    %162 = vector.shape_cast %161 : vector<2x16x32xf32> to vector<32x32xf32>
    %163 = arith.truncf %162 : vector<32x32xf32> to vector<32x32xbf16>
    %c0_114 = arith.constant 0 : index
    %c2_115 = arith.constant 2 : index
    %c0_116 = arith.constant 0 : index
    %c0_117 = arith.constant 0 : index
    %164 = vector.load %arg11[%c0_114, %c2_115, %c0_116, %c0_117] : memref<1x4x32x128xbf16, #tpu.memory_space<vmem>>, vector<1x1x32x128xbf16>
    %165 = vector.shape_cast %164 : vector<1x1x32x128xbf16> to vector<32x128xbf16>
    %cst_118 = arith.constant dense<0.000000e+00> : vector<32x128xf32>
    %166 = tpu.matmul %163, %165, %cst_118 {dimension_numbers = #tpu.dot_dimension_numbers<[1], [0], [0], [1], [0, 0, 1, 1], [], []>} : vector<32x32xbf16>, vector<32x128xbf16>, vector<32x128xf32> -> vector<32x128xf32>
    %167 = arith.addf %121, %166 : vector<32x128xf32>
    %c0_119 = arith.constant 0 : index
    %c3 = arith.constant 3 : index
    %c0_120 = arith.constant 0 : index
    %c0_121 = arith.constant 0 : index
    %168 = vector.load %arg5[%c0_119, %c3, %c0_120, %c0_121] : memref<1x4x128x32xbf16, #tpu.memory_space<vmem>>, vector<1x1x128x32xbf16>
    %169 = vector.shape_cast %168 : vector<1x1x128x32xbf16> to vector<128x32xbf16>
    %cst_122 = arith.constant dense<0.000000e+00> : vector<32x32xf32>
    %170 = tpu.matmul %28, %169, %cst_122 {dimension_numbers = #tpu.dot_dimension_numbers<[1], [0], [0], [1], [0, 0, 1, 1], [], []>} : vector<32x128xbf16>, vector<128x32xbf16>, vector<32x32xf32> -> vector<32x32xf32>
    %c0_123 = arith.constant 0 : index
    %c3_124 = arith.constant 3 : index
    %c0_125 = arith.constant 0 : index
    %c0_126 = arith.constant 0 : index
    %171 = vector.load %arg6[%c0_123, %c3_124, %c0_125, %c0_126] : memref<1x4x1x32xf32, #tpu.memory_space<vmem>>, vector<1x1x1x32xf32>
    %172 = vector.shape_cast %171 : vector<1x1x1x32xf32> to vector<1x32xf32>
    %173 = vector.broadcast %172 : vector<1x32xf32> to vector<32x32xf32>
    %174 = arith.addf %170, %173 : vector<32x32xf32>
    %c0_127 = arith.constant 0 : index
    %c3_128 = arith.constant 3 : index
    %c0_129 = arith.constant 0 : index
    %c0_130 = arith.constant 0 : index
    %175 = vector.load %arg7[%c0_127, %c3_128, %c0_129, %c0_130] : memref<1x4x128x32xbf16, #tpu.memory_space<vmem>>, vector<1x1x128x32xbf16>
    %176 = vector.shape_cast %175 : vector<1x1x128x32xbf16> to vector<128x32xbf16>
    %cst_131 = arith.constant dense<0.000000e+00> : vector<32x32xf32>
    %177 = tpu.matmul %28, %176, %cst_131 {dimension_numbers = #tpu.dot_dimension_numbers<[1], [0], [0], [1], [0, 0, 1, 1], [], []>} : vector<32x128xbf16>, vector<128x32xbf16>, vector<32x32xf32> -> vector<32x32xf32>
    %c0_132 = arith.constant 0 : index
    %c3_133 = arith.constant 3 : index
    %c0_134 = arith.constant 0 : index
    %c0_135 = arith.constant 0 : index
    %178 = vector.load %arg8[%c0_132, %c3_133, %c0_134, %c0_135] : memref<1x4x1x32xf32, #tpu.memory_space<vmem>>, vector<1x1x1x32xf32>
    %179 = vector.shape_cast %178 : vector<1x1x1x32xf32> to vector<1x32xf32>
    %180 = vector.broadcast %179 : vector<1x32xf32> to vector<32x32xf32>
    %181 = arith.addf %177, %180 : vector<32x32xf32>
    %c0_136 = arith.constant 0 : index
    %c3_137 = arith.constant 3 : index
    %c0_138 = arith.constant 0 : index
    %c0_139 = arith.constant 0 : index
    %182 = vector.load %arg9[%c0_136, %c3_137, %c0_138, %c0_139] : memref<1x4x128x32xbf16, #tpu.memory_space<vmem>>, vector<1x1x128x32xbf16>
    %183 = vector.shape_cast %182 : vector<1x1x128x32xbf16> to vector<128x32xbf16>
    %cst_140 = arith.constant dense<0.000000e+00> : vector<32x32xf32>
    %184 = tpu.matmul %28, %183, %cst_140 {dimension_numbers = #tpu.dot_dimension_numbers<[1], [0], [0], [1], [0, 0, 1, 1], [], []>} : vector<32x128xbf16>, vector<128x32xbf16>, vector<32x32xf32> -> vector<32x32xf32>
    %c0_141 = arith.constant 0 : index
    %c3_142 = arith.constant 3 : index
    %c0_143 = arith.constant 0 : index
    %c0_144 = arith.constant 0 : index
    %185 = vector.load %arg10[%c0_141, %c3_142, %c0_143, %c0_144] : memref<1x4x1x32xf32, #tpu.memory_space<vmem>>, vector<1x1x1x32xf32>
    %186 = vector.shape_cast %185 : vector<1x1x1x32xf32> to vector<1x32xf32>
    %187 = vector.broadcast %186 : vector<1x32xf32> to vector<32x32xf32>
    %188 = arith.addf %184, %187 : vector<32x32xf32>
    %189 = vector.shape_cast %174 : vector<32x32xf32> to vector<2x16x32xf32>
    %190 = arith.truncf %189 : vector<2x16x32xf32> to vector<2x16x32xbf16>
    %191 = vector.shape_cast %181 : vector<32x32xf32> to vector<2x16x32xf32>
    %192 = arith.truncf %191 : vector<2x16x32xf32> to vector<2x16x32xbf16>
    %193 = vector.shape_cast %188 : vector<32x32xf32> to vector<2x16x32xf32>
    %194 = arith.truncf %193 : vector<2x16x32xf32> to vector<2x16x32xbf16>
    "tpu.trace_start"() <{level = 10 : i32, message = "bqd,bkd->bqk"}> : () -> ()
    %cst_145 = arith.constant dense<0.000000e+00> : vector<2x16x16xf32>
    %195 = tpu.matmul %190, %192, %cst_145 {dimension_numbers = #tpu.dot_dimension_numbers<[2], [2], [1], [1], [0, 0, 0, 1, 1, 1], [0], [0]>} : vector<2x16x32xbf16>, vector<2x16x32xbf16>, vector<2x16x16xf32> -> vector<2x16x16xf32>
    "tpu.trace_stop"() : () -> ()
    %cst_146 = arith.constant dense<0xFF800000> : vector<2x16xf32>
    %196 = vector.multi_reduction <maximumf>, %195, %cst_146 [2] : vector<2x16x16xf32> to vector<2x16xf32>
    %197 = vector.shape_cast %196 : vector<2x16xf32> to vector<2x16x1xf32>
    %198 = vector.broadcast %197 : vector<2x16x1xf32> to vector<2x16x16xf32>
    %199 = arith.subf %195, %198 : vector<2x16x16xf32>
    %200 = math.exp %199 : vector<2x16x16xf32>
    %cst_147 = arith.constant dense<0.000000e+00> : vector<2x16xf32>
    %201 = vector.multi_reduction <add>, %200, %cst_147 [2] : vector<2x16x16xf32> to vector<2x16xf32>
    %202 = vector.shape_cast %201 : vector<2x16xf32> to vector<2x16x1xf32>
    %203 = tpu.reciprocal %202 {approx = true} : vector<2x16x1xf32> -> vector<2x16x1xf32>
    %204 = vector.broadcast %203 : vector<2x16x1xf32> to vector<2x16x16xf32>
    %205 = arith.mulf %200, %204 : vector<2x16x16xf32>
    %206 = arith.truncf %205 : vector<2x16x16xf32> to vector<2x16x16xbf16>
    "tpu.trace_start"() <{level = 10 : i32, message = "bqk,bkd->bqd"}> : () -> ()
    %cst_148 = arith.constant dense<0.000000e+00> : vector<2x16x32xf32>
    %207 = tpu.matmul %206, %194, %cst_148 {dimension_numbers = #tpu.dot_dimension_numbers<[2], [1], [1], [2], [0, 0, 0, 1, 1, 2], [0], [0]>} : vector<2x16x16xbf16>, vector<2x16x32xbf16>, vector<2x16x32xf32> -> vector<2x16x32xf32>
    "tpu.trace_stop"() : () -> ()
    %208 = vector.shape_cast %207 : vector<2x16x32xf32> to vector<32x32xf32>
    %209 = arith.truncf %208 : vector<32x32xf32> to vector<32x32xbf16>
    %c0_149 = arith.constant 0 : index
    %c3_150 = arith.constant 3 : index
    %c0_151 = arith.constant 0 : index
    %c0_152 = arith.constant 0 : index
    %210 = vector.load %arg11[%c0_149, %c3_150, %c0_151, %c0_152] : memref<1x4x32x128xbf16, #tpu.memory_space<vmem>>, vector<1x1x32x128xbf16>
    %211 = vector.shape_cast %210 : vector<1x1x32x128xbf16> to vector<32x128xbf16>
    %cst_153 = arith.constant dense<0.000000e+00> : vector<32x128xf32>
    %212 = tpu.matmul %209, %211, %cst_153 {dimension_numbers = #tpu.dot_dimension_numbers<[1], [0], [0], [1], [0, 0, 1, 1], [], []>} : vector<32x32xbf16>, vector<32x128xbf16>, vector<32x128xf32> -> vector<32x128xf32>
    %213 = arith.addf %167, %212 : vector<32x128xf32>
    %214 = arith.addf %3, %213 : vector<32x128xf32>
    %c0_154 = arith.constant 0 : index
    %c0_155 = arith.constant 0 : index
    %c0_156 = arith.constant 0 : index
    %215 = vector.load %arg12[%c0_154, %c0_155, %c0_156] : memref<1x1x128xf32, #tpu.memory_space<vmem>>, vector<1x1x128xf32>
    %216 = vector.shape_cast %215 : vector<1x1x128xf32> to vector<1x128xf32>
    %217 = vector.broadcast %216 : vector<1x128xf32> to vector<32x128xf32>
    %218 = arith.addf %214, %217 : vector<32x128xf32>
    %c0_157 = arith.constant 0 : index
    %c0_158 = arith.constant 0 : index
    %c0_159 = arith.constant 0 : index
    %219 = vector.load %arg13[%c0_157, %c0_158, %c0_159] : memref<1x1x128xf32, #tpu.memory_space<vmem>>, vector<1x1x128xf32>
    %220 = vector.shape_cast %219 : vector<1x1x128xf32> to vector<1x128xf32>
    %c0_160 = arith.constant 0 : index
    %c0_161 = arith.constant 0 : index
    %c0_162 = arith.constant 0 : index
    %221 = vector.load %arg14[%c0_160, %c0_161, %c0_162] : memref<1x1x128xf32, #tpu.memory_space<vmem>>, vector<1x1x128xf32>
    %222 = vector.shape_cast %221 : vector<1x1x128xf32> to vector<1x128xf32>
    %cst_163 = arith.constant dense<0.000000e+00> : vector<32xf32>
    %223 = vector.multi_reduction <add>, %218, %cst_163 [1] : vector<32x128xf32> to vector<32xf32>
    %224 = vector.shape_cast %223 : vector<32xf32> to vector<32x1xf32>
    %cst_164 = arith.constant 1.280000e+02 : f32
    %225 = vector.broadcast %cst_164 : f32 to vector<32x1xf32>
    %226 = arith.divf %224, %225 : vector<32x1xf32>
    %227 = vector.broadcast %226 : vector<32x1xf32> to vector<32x128xf32>
    %228 = arith.subf %218, %227 : vector<32x128xf32>
    %229 = arith.mulf %228, %228 : vector<32x128xf32>
    %cst_165 = arith.constant dense<0.000000e+00> : vector<32xf32>
    %230 = vector.multi_reduction <add>, %229, %cst_165 [1] : vector<32x128xf32> to vector<32xf32>
    %231 = vector.shape_cast %230 : vector<32xf32> to vector<32x1xf32>
    %cst_166 = arith.constant 1.280000e+02 : f32
    %232 = vector.broadcast %cst_166 : f32 to vector<32x1xf32>
    %233 = arith.divf %231, %232 : vector<32x1xf32>
    %cst_167 = arith.constant 9.99999974E-6 : f32
    %234 = vector.broadcast %cst_167 : f32 to vector<32x1xf32>
    %235 = arith.addf %233, %234 : vector<32x1xf32>
    %236 = math.rsqrt %235 : vector<32x1xf32>
    %237 = vector.broadcast %236 : vector<32x1xf32> to vector<32x128xf32>
    %238 = arith.mulf %228, %237 : vector<32x128xf32>
    %239 = vector.broadcast %220 : vector<1x128xf32> to vector<32x128xf32>
    %240 = arith.mulf %238, %239 : vector<32x128xf32>
    %241 = vector.broadcast %222 : vector<1x128xf32> to vector<32x128xf32>
    %242 = arith.addf %240, %241 : vector<32x128xf32>
    %243 = arith.truncf %242 : vector<32x128xf32> to vector<32x128xbf16>
    %c0_168 = arith.constant 0 : index
    %c0_169 = arith.constant 0 : index
    %c0_170 = arith.constant 0 : index
    %244 = vector.load %arg15[%c0_168, %c0_169, %c0_170] : memref<1x128x512xbf16, #tpu.memory_space<vmem>>, vector<1x128x512xbf16>
    %245 = vector.shape_cast %244 : vector<1x128x512xbf16> to vector<128x512xbf16>
    %cst_171 = arith.constant dense<0.000000e+00> : vector<32x512xf32>
    %246 = tpu.matmul %243, %245, %cst_171 {dimension_numbers = #tpu.dot_dimension_numbers<[1], [0], [0], [1], [0, 0, 1, 1], [], []>} : vector<32x128xbf16>, vector<128x512xbf16>, vector<32x512xf32> -> vector<32x512xf32>
    %c0_172 = arith.constant 0 : index
    %c0_173 = arith.constant 0 : index
    %c0_174 = arith.constant 0 : index
    %247 = vector.load %arg16[%c0_172, %c0_173, %c0_174] : memref<1x1x512xf32, #tpu.memory_space<vmem>>, vector<1x1x512xf32>
    %248 = vector.shape_cast %247 : vector<1x1x512xf32> to vector<1x512xf32>
    %249 = vector.broadcast %248 : vector<1x512xf32> to vector<32x512xf32>
    %250 = arith.addf %246, %249 : vector<32x512xf32>
    %cst_175 = arith.constant 5.000000e-01 : f32
    %251 = vector.broadcast %cst_175 : f32 to vector<32x512xf32>
    %252 = arith.mulf %251, %250 : vector<32x512xf32>
    %cst_176 = arith.constant 0.707106769 : f32
    %253 = vector.broadcast %cst_176 : f32 to vector<32x512xf32>
    %254 = arith.mulf %250, %253 : vector<32x512xf32>
    %255 = math.erf %254 : vector<32x512xf32>
    %cst_177 = arith.constant 1.000000e+00 : f32
    %256 = vector.broadcast %cst_177 : f32 to vector<32x512xf32>
    %257 = arith.addf %256, %255 : vector<32x512xf32>
    %258 = arith.mulf %252, %257 : vector<32x512xf32>
    %259 = arith.truncf %258 : vector<32x512xf32> to vector<32x512xbf16>
    %c0_178 = arith.constant 0 : index
    %c0_179 = arith.constant 0 : index
    %c0_180 = arith.constant 0 : index
    %260 = vector.load %arg17[%c0_178, %c0_179, %c0_180] : memref<1x512x128xbf16, #tpu.memory_space<vmem>>, vector<1x512x128xbf16>
    %261 = vector.shape_cast %260 : vector<1x512x128xbf16> to vector<512x128xbf16>
    %cst_181 = arith.constant dense<0.000000e+00> : vector<32x128xf32>
    %262 = tpu.matmul %259, %261, %cst_181 {dimension_numbers = #tpu.dot_dimension_numbers<[1], [0], [0], [1], [0, 0, 1, 1], [], []>} : vector<32x512xbf16>, vector<512x128xbf16>, vector<32x128xf32> -> vector<32x128xf32>
    %c0_182 = arith.constant 0 : index
    %c0_183 = arith.constant 0 : index
    %c0_184 = arith.constant 0 : index
    %263 = vector.load %arg18[%c0_182, %c0_183, %c0_184] : memref<1x1x128xf32, #tpu.memory_space<vmem>>, vector<1x1x128xf32>
    %264 = vector.shape_cast %263 : vector<1x1x128xf32> to vector<1x128xf32>
    %265 = vector.broadcast %264 : vector<1x128xf32> to vector<32x128xf32>
    %266 = arith.addf %262, %265 : vector<32x128xf32>
    %267 = arith.addf %218, %266 : vector<32x128xf32>
    %c0_185 = arith.constant 0 : index
    %c0_186 = arith.constant 0 : index
    %268 = vector.load %arg20[%c0_185, %c0_186] : memref<32x128xf32, #tpu.memory_space<vmem>>, vector<32x128xf32>
    tpu.vector_store %arg20[%c0_185, %c0_186], %267 {strides = array<i32>} : memref<32x128xf32, #tpu.memory_space<vmem>>, vector<32x128xf32>,
    %c1_i32 = arith.constant 1 : i32
    %269 = arith.cmpi eq, %arg1, %c1_i32 : i32
    %270 = arith.extui %269 : i1 to i32
    %c0_i32_187 = arith.constant 0 : i32
    %271 = arith.cmpi ne, %270, %c0_i32_187 : i32
    scf.if %271 {
      %272 = arith.truncf %267 : vector<32x128xf32> to vector<32x128xbf16>
      %c0_188 = arith.constant 0 : index
      %c0_189 = arith.constant 0 : index
      %273 = vector.load %arg19[%c0_188, %c0_189] : memref<32x128xbf16, #tpu.memory_space<vmem>>, vector<32x128xbf16>
      tpu.vector_store %arg19[%c0_188, %c0_189], %272 {strides = array<i32>} : memref<32x128xbf16, #tpu.memory_space<vmem>>, vector<32x128xbf16>,
    } else {
    }
    return
  }
  func.func @transform_0(%arg0: i32, %arg1: i32) -> (i32, i32) {
    %c0_i32 = arith.constant 0 : i32
    %c0_i32_0 = arith.constant 0 : i32
    return %arg0, %c0_i32 : i32, i32
  }
  func.func @transform_1(%arg0: i32, %arg1: i32) -> (i32, i32, i32) {
    %c0_i32 = arith.constant 0 : i32
    %c0_i32_0 = arith.constant 0 : i32
    %c0_i32_1 = arith.constant 0 : i32
    return %arg1, %c0_i32, %c0_i32_0 : i32, i32, i32
  }
  func.func @transform_2(%arg0: i32, %arg1: i32) -> (i32, i32, i32) {
    %c0_i32 = arith.constant 0 : i32
    %c0_i32_0 = arith.constant 0 : i32
    %c0_i32_1 = arith.constant 0 : i32
    return %arg1, %c0_i32, %c0_i32_0 : i32, i32, i32
  }
  func.func @transform_3(%arg0: i32, %arg1: i32) -> (i32, i32, i32, i32) {
    %c0_i32 = arith.constant 0 : i32
    %c0_i32_0 = arith.constant 0 : i32
    %c0_i32_1 = arith.constant 0 : i32
    %c0_i32_2 = arith.constant 0 : i32
    return %arg1, %c0_i32, %c0_i32_0, %c0_i32_1 : i32, i32, i32, i32
  }
  func.func @transform_4(%arg0: i32, %arg1: i32) -> (i32, i32, i32, i32) {
    %c0_i32 = arith.constant 0 : i32
    %c0_i32_0 = arith.constant 0 : i32
    %c0_i32_1 = arith.constant 0 : i32
    %c0_i32_2 = arith.constant 0 : i32
    return %arg1, %c0_i32, %c0_i32_0, %c0_i32_1 : i32, i32, i32, i32
  }
  func.func @transform_5(%arg0: i32, %arg1: i32) -> (i32, i32, i32, i32) {
    %c0_i32 = arith.constant 0 : i32
    %c0_i32_0 = arith.constant 0 : i32
    %c0_i32_1 = arith.constant 0 : i32
    %c0_i32_2 = arith.constant 0 : i32
    return %arg1, %c0_i32, %c0_i32_0, %c0_i32_1 : i32, i32, i32, i32
  }
  func.func @transform_6(%arg0: i32, %arg1: i32) -> (i32, i32, i32, i32) {
    %c0_i32 = arith.constant 0 : i32
    %c0_i32_0 = arith.constant 0 : i32
    %c0_i32_1 = arith.constant 0 : i32
    %c0_i32_2 = arith.constant 0 : i32
    return %arg1, %c0_i32, %c0_i32_0, %c0_i32_1 : i32, i32, i32, i32
  }
  func.func @transform_7(%arg0: i32, %arg1: i32) -> (i32, i32, i32, i32) {
    %c0_i32 = arith.constant 0 : i32
    %c0_i32_0 = arith.constant 0 : i32
    %c0_i32_1 = arith.constant 0 : i32
    %c0_i32_2 = arith.constant 0 : i32
    return %arg1, %c0_i32, %c0_i32_0, %c0_i32_1 : i32, i32, i32, i32
  }
  func.func @transform_8(%arg0: i32, %arg1: i32) -> (i32, i32, i32, i32) {
    %c0_i32 = arith.constant 0 : i32
    %c0_i32_0 = arith.constant 0 : i32
    %c0_i32_1 = arith.constant 0 : i32
    %c0_i32_2 = arith.constant 0 : i32
    return %arg1, %c0_i32, %c0_i32_0, %c0_i32_1 : i32, i32, i32, i32
  }
  func.func @transform_9(%arg0: i32, %arg1: i32) -> (i32, i32, i32, i32) {
    %c0_i32 = arith.constant 0 : i32
    %c0_i32_0 = arith.constant 0 : i32
    %c0_i32_1 = arith.constant 0 : i32
    %c0_i32_2 = arith.constant 0 : i32
    return %arg1, %c0_i32, %c0_i32_0, %c0_i32_1 : i32, i32, i32, i32
  }
  func.func @transform_10(%arg0: i32, %arg1: i32) -> (i32, i32, i32) {
    %c0_i32 = arith.constant 0 : i32
    %c0_i32_0 = arith.constant 0 : i32
    %c0_i32_1 = arith.constant 0 : i32
    return %arg1, %c0_i32, %c0_i32_0 : i32, i32, i32
  }
  func.func @transform_11(%arg0: i32, %arg1: i32) -> (i32, i32, i32) {
    %c0_i32 = arith.constant 0 : i32
    %c0_i32_0 = arith.constant 0 : i32
    %c0_i32_1 = arith.constant 0 : i32
    return %arg1, %c0_i32, %c0_i32_0 : i32, i32, i32
  }
  func.func @transform_12(%arg0: i32, %arg1: i32) -> (i32, i32, i32) {
    %c0_i32 = arith.constant 0 : i32
    %c0_i32_0 = arith.constant 0 : i32
    %c0_i32_1 = arith.constant 0 : i32
    return %arg1, %c0_i32, %c0_i32_0 : i32, i32, i32
  }
  func.func @transform_13(%arg0: i32, %arg1: i32) -> (i32, i32, i32) {
    %c0_i32 = arith.constant 0 : i32
    %c0_i32_0 = arith.constant 0 : i32
    %c0_i32_1 = arith.constant 0 : i32
    return %arg1, %c0_i32, %c0_i32_0 : i32, i32, i32
  }
  func.func @transform_14(%arg0: i32, %arg1: i32) -> (i32, i32, i32) {
    %c0_i32 = arith.constant 0 : i32
    %c0_i32_0 = arith.constant 0 : i32
    %c0_i32_1 = arith.constant 0 : i32
    return %arg1, %c0_i32, %c0_i32_0 : i32, i32, i32
  }
  func.func @transform_15(%arg0: i32, %arg1: i32) -> (i32, i32, i32) {
    %c0_i32 = arith.constant 0 : i32
    %c0_i32_0 = arith.constant 0 : i32
    %c0_i32_1 = arith.constant 0 : i32
    return %arg1, %c0_i32, %c0_i32_0 : i32, i32, i32
  }
  func.func @transform_16(%arg0: i32, %arg1: i32) -> (i32, i32, i32) {
    %c0_i32 = arith.constant 0 : i32
    %c0_i32_0 = arith.constant 0 : i32
    %c0_i32_1 = arith.constant 0 : i32
    return %arg1, %c0_i32, %c0_i32_0 : i32, i32, i32
  }
  func.func @transform_17(%arg0: i32, %arg1: i32) -> (i32, i32) {
    %c0_i32 = arith.constant 0 : i32
    %c0_i32_0 = arith.constant 0 : i32
    return %arg0, %c0_i32 : i32, i32
  }
}

module attributes {stable_mosaic.version = 11 : i64} {
  func.func @_head_kernel(%arg0: i32, %arg1: memref<32x128xbf16, #tpu.memory_space<vmem>>, %arg2: memref<1x128xf32, #tpu.memory_space<vmem>>, %arg3: memref<1x128xf32, #tpu.memory_space<vmem>>, %arg4: memref<128x768xbf16, #tpu.memory_space<vmem>>, %arg5: memref<1x768xf32, #tpu.memory_space<vmem>>, %arg6: memref<32x768xf32, #tpu.memory_space<vmem>>) attributes {dimension_semantics = [#tpu.dimension_semantics<parallel>], iteration_bounds = array<i64: 1>, scalar_prefetch = 0 : i64, scratch_operands = 0 : i64, tpu.core_type = #tpu.core_type<tc>, window_params = [{transform_indices = @transform_0, window_bounds = array<i64: 32, 128>}, {pipeline_mode = #tpu.pipeline_mode<synchronous>, transform_indices = @transform_1, window_bounds = array<i64: 1, 128>}, {pipeline_mode = #tpu.pipeline_mode<synchronous>, transform_indices = @transform_2, window_bounds = array<i64: 1, 128>}, {pipeline_mode = #tpu.pipeline_mode<synchronous>, transform_indices = @transform_3, window_bounds = array<i64: 128, 768>}, {pipeline_mode = #tpu.pipeline_mode<synchronous>, transform_indices = @transform_4, window_bounds = array<i64: 1, 768>}, {transform_indices = @transform_5, window_bounds = array<i64: 32, 768>}]} {
    %c0 = arith.constant 0 : index
    %c0_0 = arith.constant 0 : index
    %0 = vector.load %arg1[%c0, %c0_0] : memref<32x128xbf16, #tpu.memory_space<vmem>>, vector<32x128xbf16>
    %1 = arith.extf %0 : vector<32x128xbf16> to vector<32x128xf32>
    %c0_1 = arith.constant 0 : index
    %c0_2 = arith.constant 0 : index
    %2 = vector.load %arg2[%c0_1, %c0_2] : memref<1x128xf32, #tpu.memory_space<vmem>>, vector<1x128xf32>
    %c0_3 = arith.constant 0 : index
    %c0_4 = arith.constant 0 : index
    %3 = vector.load %arg3[%c0_3, %c0_4] : memref<1x128xf32, #tpu.memory_space<vmem>>, vector<1x128xf32>
    %cst = arith.constant dense<0.000000e+00> : vector<32xf32>
    %4 = vector.multi_reduction <add>, %1, %cst [1] : vector<32x128xf32> to vector<32xf32>
    %5 = vector.shape_cast %4 : vector<32xf32> to vector<32x1xf32>
    %cst_5 = arith.constant 1.280000e+02 : f32
    %6 = vector.broadcast %cst_5 : f32 to vector<32x1xf32>
    %7 = arith.divf %5, %6 : vector<32x1xf32>
    %8 = vector.broadcast %7 : vector<32x1xf32> to vector<32x128xf32>
    %9 = arith.subf %1, %8 : vector<32x128xf32>
    %10 = arith.mulf %9, %9 : vector<32x128xf32>
    %cst_6 = arith.constant dense<0.000000e+00> : vector<32xf32>
    %11 = vector.multi_reduction <add>, %10, %cst_6 [1] : vector<32x128xf32> to vector<32xf32>
    %12 = vector.shape_cast %11 : vector<32xf32> to vector<32x1xf32>
    %cst_7 = arith.constant 1.280000e+02 : f32
    %13 = vector.broadcast %cst_7 : f32 to vector<32x1xf32>
    %14 = arith.divf %12, %13 : vector<32x1xf32>
    %cst_8 = arith.constant 9.99999974E-6 : f32
    %15 = vector.broadcast %cst_8 : f32 to vector<32x1xf32>
    %16 = arith.addf %14, %15 : vector<32x1xf32>
    %17 = math.rsqrt %16 : vector<32x1xf32>
    %18 = vector.broadcast %17 : vector<32x1xf32> to vector<32x128xf32>
    %19 = arith.mulf %9, %18 : vector<32x128xf32>
    %20 = vector.broadcast %2 : vector<1x128xf32> to vector<32x128xf32>
    %21 = arith.mulf %19, %20 : vector<32x128xf32>
    %22 = vector.broadcast %3 : vector<1x128xf32> to vector<32x128xf32>
    %23 = arith.addf %21, %22 : vector<32x128xf32>
    %24 = arith.truncf %23 : vector<32x128xf32> to vector<32x128xbf16>
    %c0_9 = arith.constant 0 : index
    %c0_10 = arith.constant 0 : index
    %25 = vector.load %arg4[%c0_9, %c0_10] : memref<128x768xbf16, #tpu.memory_space<vmem>>, vector<128x768xbf16>
    %cst_11 = arith.constant dense<0.000000e+00> : vector<32x768xf32>
    %26 = tpu.matmul %24, %25, %cst_11 {dimension_numbers = #tpu.dot_dimension_numbers<[1], [0], [0], [1], [0, 0, 1, 1], [], []>} : vector<32x128xbf16>, vector<128x768xbf16>, vector<32x768xf32> -> vector<32x768xf32>
    %c0_12 = arith.constant 0 : index
    %c0_13 = arith.constant 0 : index
    %27 = vector.load %arg5[%c0_12, %c0_13] : memref<1x768xf32, #tpu.memory_space<vmem>>, vector<1x768xf32>
    %28 = vector.broadcast %27 : vector<1x768xf32> to vector<32x768xf32>
    %29 = arith.addf %26, %28 : vector<32x768xf32>
    %c0_14 = arith.constant 0 : index
    %c0_15 = arith.constant 0 : index
    %30 = vector.load %arg6[%c0_14, %c0_15] : memref<32x768xf32, #tpu.memory_space<vmem>>, vector<32x768xf32>
    tpu.vector_store %arg6[%c0_14, %c0_15], %29 {strides = array<i32>} : memref<32x768xf32, #tpu.memory_space<vmem>>, vector<32x768xf32>,
    return
  }
  func.func @transform_0(%arg0: i32) -> (i32, i32) {
    %c0_i32 = arith.constant 0 : i32
    %c0_i32_0 = arith.constant 0 : i32
    return %arg0, %c0_i32 : i32, i32
  }
  func.func @transform_1(%arg0: i32) -> (i32, i32) {
    %c0_i32 = arith.constant 0 : i32
    %c0_i32_0 = arith.constant 0 : i32
    %c0_i32_1 = arith.constant 0 : i32
    return %c0_i32, %c0_i32_0 : i32, i32
  }
  func.func @transform_2(%arg0: i32) -> (i32, i32) {
    %c0_i32 = arith.constant 0 : i32
    %c0_i32_0 = arith.constant 0 : i32
    %c0_i32_1 = arith.constant 0 : i32
    return %c0_i32, %c0_i32_0 : i32, i32
  }
  func.func @transform_3(%arg0: i32) -> (i32, i32) {
    %c0_i32 = arith.constant 0 : i32
    %c0_i32_0 = arith.constant 0 : i32
    %c0_i32_1 = arith.constant 0 : i32
    return %c0_i32, %c0_i32_0 : i32, i32
  }
  func.func @transform_4(%arg0: i32) -> (i32, i32) {
    %c0_i32 = arith.constant 0 : i32
    %c0_i32_0 = arith.constant 0 : i32
    %c0_i32_1 = arith.constant 0 : i32
    return %c0_i32, %c0_i32_0 : i32, i32
  }
  func.func @transform_5(%arg0: i32) -> (i32, i32) {
    %c0_i32 = arith.constant 0 : i32
    %c0_i32_0 = arith.constant 0 : i32
    return %arg0, %c0_i32 : i32, i32
  }
}

</mosaic_0001>

<llo_original>
// kernel: vivit_forward.3
$region0: #{vivit_forward.3}
  #allocation0 [shape = 'u32[]', space=smem, size = 0x4, offset = 0x4, fixed_abs, tag = 'smem constant byte address 0x4 - core index']
  #allocation1 [shape = 'u32[72,128]{1,0:T(1,128)}', space=vmem, size = 0x9000, scoped, tag = 'internal scratch']
  %s0 = inlined_call_operand.vmem [shape: bf16[32,768], index: 0, kind: input, shape index: {}]
  %s1 = inlined_call_operand.vmem [shape: bf16[768,128], index: 1, kind: input, shape index: {}]
  %s2 = inlined_call_operand.vmem [shape: f32[1,128], index: 2, kind: input, shape index: {}]
  %s3 = inlined_call_operand.vmem [shape: f32[32,128], index: 3, kind: input, shape index: {}]
  %s4 = inlined_call_operand.vmem [shape: bf16[32,128], index: 4, kind: output, shape index: {}]
  %s5 = sld [smem:[#allocation0]]
  $region26: #{vivit_forward.3} parent=0
    _
  %s7 = ssub.s32 1, %s5
  %s8 = scalar_select 0, %s7, %s5
  // Predicated region
  $region2: #{vivit_forward.3} parent=0 // pred_check
    _
  $region3: #{vivit_forward.3} parent=0 // pred_check_branch
    %10 = sbr.rel (0) target = $region5
  $region4: #{vivit_forward.3} parent=0 // pred_region
    _
  $region5: #{vivit_forward.3} parent=0 // pred_fallthru
    _
  // Predicated region
  $region6: #{vivit_forward.3} parent=0 // pred_check
    _
  $region7: #{vivit_forward.3} parent=0 // pred_check_branch
    %12 = sbr.rel (0) target = $region9
  $region8: #{vivit_forward.3} parent=0 // pred_region
    _
  $region9: #{vivit_forward.3} parent=0 // pred_fallthru
    _
  // Predicated region
  $region10: #{vivit_forward.3} parent=0 // pred_check
    _
  $region11: #{vivit_forward.3} parent=0 // pred_check_branch
    %14 = sbr.rel (0) target = $region13
  $region12: #{vivit_forward.3} parent=0 // pred_region
    _
  $region13: #{vivit_forward.3} parent=0 // pred_fallthru
    _
  // Predicated region
  $region14: #{vivit_forward.3} parent=0 // pred_check
    _
  $region15: #{vivit_forward.3} parent=0 // pred_check_branch
    %16 = sbr.rel (0) target = $region17
  $region16: #{vivit_forward.3} parent=0 // pred_region
    _
  $region17: #{vivit_forward.3} parent=0 // pred_fallthru
    _
  %v17 = vld [vmem:[%s0] sm:$0xff]
  %v18 = vld [vmem:[%s0 + $0x8] sm:$0xff]
  %v19 = vld [vmem:[%s0 + $0x10] sm:$0xff]
  %v20 = vld [vmem:[%s0 + $0x18] sm:$0xff]
  %v21 = vld [vmem:[%s0 + $0x20] sm:$0xff]
  %v22 = vld [vmem:[%s0 + $0x28] sm:$0xff]
  %v23 = vld [vmem:[%s0 + $0x30] sm:$0xff]
  %v24 = vld [vmem:[%s0 + $0x38] sm:$0xff]
  %v25 = vld [vmem:[%s0 + $0x40] sm:$0xff]
  %v26 = vld [vmem:[%s0 + $0x48] sm:$0xff]
  %v27 = vld [vmem:[%s0 + $0x50] sm:$0xff]
  %v28 = vld [vmem:[%s0 + $0x58] sm:$0xff]
  %v29 = vld [vmem:[%s1] sm:$0xf]
  %v30 = vld [vmem:[%s1 + $0x4] sm:$0xf]
  %v31 = vld [vmem:[%s1 + $0x8] sm:$0xf]
  %v32 = vld [vmem:[%s1 + $0xc] sm:$0xf]
  %v33 = vld [vmem:[%s1 + $0x10] sm:$0xf]
  %v34 = vld [vmem:[%s1 + $0x14] sm:$0xf]
  %v35 = vld [vmem:[%s1 + $0x18] sm:$0xf]
  %v36 = vld [vmem:[%s1 + $0x1c] sm:$0xf]
  %v37 = vld [vmem:[%s1 + $0x20] sm:$0xf]
  %v38 = vld [vmem:[%s1 + $0x24] sm:$0xf]
  %v39 = vld [vmem:[%s1 + $0x28] sm:$0xf]
  %v40 = vld [vmem:[%s1 + $0x2c] sm:$0xf]
  %v41 = vld [vmem:[%s1 + $0x30] sm:$0xf]
  %v42 = vld [vmem:[%s1 + $0x34] sm:$0xf]
  %v43 = vld [vmem:[%s1 + $0x38] sm:$0xf]
  %v44 = vld [vmem:[%s1 + $0x3c] sm:$0xf]
  %v45 = vld [vmem:[%s1 + $0x40] sm:$0xf]
  %v46 = vld [vmem:[%s1 + $0x44] sm:$0xf]
  %v47 = vld [vmem:[%s1 + $0x48] sm:$0xf]
  %v48 = vld [vmem:[%s1 + $0x4c] sm:$0xf]
  %v49 = vld [vmem:[%s1 + $0x50] sm:$0xf]
  %v50 = vld [vmem:[%s1 + $0x54] sm:$0xf]
  %v51 = vld [vmem:[%s1 + $0x58] sm:$0xf]
  %v52 = vld [vmem:[%s1 + $0x5c] sm:$0xf]
  %v53 = vld [vmem:[%s1 + $0x60] sm:$0xf]
  %v54 = vld [vmem:[%s1 + $0x64] sm:$0xf]
  %v55 = vld [vmem:[%s1 + $0x68] sm:$0xf]
  %v56 = vld [vmem:[%s1 + $0x6c] sm:$0xf]
  %v57 = vld [vmem:[%s1 + $0x70] sm:$0xf]
  %v58 = vld [vmem:[%s1 + $0x74] sm:$0xf]
  %v59 = vld [vmem:[%s1 + $0x78] sm:$0xf]
  %v60 = vld [vmem:[%s1 + $0x7c] sm:$0xf]
  %v61 = vld [vmem:[%s1 + $0x80] sm:$0xf]
  %v62 = vld [vmem:[%s1 + $0x84] sm:$0xf]
  %v63 = vld [vmem:[%s1 + $0x88] sm:$0xf]
  %v64 = vld [vmem:[%s1 + $0x8c] sm:$0xf]
  %v65 = vld [vmem:[%s1 + $0x90] sm:$0xf]
  %v66 = vld [vmem:[%s1 + $0x94] sm:$0xf]
  %v67 = vld [vmem:[%s1 + $0x98] sm:$0xf]
  %v68 = vld [vmem:[%s1 + $0x9c] sm:$0xf]
  %v69 = vld [vmem:[%s1 + $0xa0] sm:$0xf]
  %v70 = vld [vmem:[%s1 + $0xa4] sm:$0xf]
  %v71 = vld [vmem:[%s1 + $0xa8] sm:$0xf]
  %v72 = vld [vmem:[%s1 + $0xac] sm:$0xf]
  %v73 = vld [vmem:[%s1 + $0xb0] sm:$0xf]
  %v74 = vld [vmem:[%s1 + $0xb4] sm:$0xf]
  %v75 = vld [vmem:[%s1 + $0xb8] sm:$0xf]
  %v76 = vld [vmem:[%s1 + $0xbc] sm:$0xf]
  %v77 = vld [vmem:[%s1 + $0xc0] sm:$0xf]
  %v78 = vld [vmem:[%s1 + $0xc4] sm:$0xf]
  %v79 = vld [vmem:[%s1 + $0xc8] sm:$0xf]
  %v80 = vld [vmem:[%s1 + $0xcc] sm:$0xf]
  %v81 = vld [vmem:[%s1 + $0xd0] sm:$0xf]
  %v82 = vld [vmem:[%s1 + $0xd4] sm:$0xf]
  %v83 = vld [vmem:[%s1 + $0xd8] sm:$0xf]
  %v84 = vld [vmem:[%s1 + $0xdc] sm:$0xf]
  %v85 = vld [vmem:[%s1 + $0xe0] sm:$0xf]
  %v86 = vld [vmem:[%s1 + $0xe4] sm:$0xf]
  %v87 = vld [vmem:[%s1 + $0xe8] sm:$0xf]
  %v88 = vld [vmem:[%s1 + $0xec] sm:$0xf]
  %v89 = vld [vmem:[%s1 + $0xf0] sm:$0xf]
  %v90 = vld [vmem:[%s1 + $0xf4] sm:$0xf]
  %v91 = vld [vmem:[%s1 + $0xf8] sm:$0xf]
  %v92 = vld [vmem:[%s1 + $0xfc] sm:$0xf]
  %v93 = vld [vmem:[%s1 + $0x100] sm:$0xf]
  %v94 = vld [vmem:[%s1 + $0x104] sm:$0xf]
  %v95 = vld [vmem:[%s1 + $0x108] sm:$0xf]
  %v96 = vld [vmem:[%s1 + $0x10c] sm:$0xf]
  %v97 = vld [vmem:[%s1 + $0x110] sm:$0xf]
  %v98 = vld [vmem:[%s1 + $0x114] sm:$0xf]
  %v99 = vld [vmem:[%s1 + $0x118] sm:$0xf]
  %v100 = vld [vmem:[%s1 + $0x11c] sm:$0xf]
  %v101 = vld [vmem:[%s1 + $0x120] sm:$0xf]
  %v102 = vld [vmem:[%s1 + $0x124] sm:$0xf]
  %v103 = vld [vmem:[%s1 + $0x128] sm:$0xf]
  %v104 = vld [vmem:[%s1 + $0x12c] sm:$0xf]
  %v105 = vld [vmem:[%s1 + $0x130] sm:$0xf]
  %v106 = vld [vmem:[%s1 + $0x134] sm:$0xf]
  %v107 = vld [vmem:[%s1 + $0x138] sm:$0xf]
  %v108 = vld [vmem:[%s1 + $0x13c] sm:$0xf]
  %v109 = vld [vmem:[%s1 + $0x140] sm:$0xf]
  %v110 = vld [vmem:[%s1 + $0x144] sm:$0xf]
  %v111 = vld [vmem:[%s1 + $0x148] sm:$0xf]
  %v112 = vld [vmem:[%s1 + $0x14c] sm:$0xf]
  %v113 = vld [vmem:[%s1 + $0x150] sm:$0xf]
  %v114 = vld [vmem:[%s1 + $0x154] sm:$0xf]
  %v115 = vld [vmem:[%s1 + $0x158] sm:$0xf]
  %v116 = vld [vmem:[%s1 + $0x15c] sm:$0xf]
  %v117 = vld [vmem:[%s1 + $0x160] sm:$0xf]
  %v118 = vld [vmem:[%s1 + $0x164] sm:$0xf]
  %v119 = vld [vmem:[%s1 + $0x168] sm:$0xf]
  %v120 = vld [vmem:[%s1 + $0x16c] sm:$0xf]
  %v121 = vld [vmem:[%s1 + $0x170] sm:$0xf]
  %v122 = vld [vmem:[%s1 + $0x174] sm:$0xf]
  %v123 = vld [vmem:[%s1 + $0x178] sm:$0xf]
  %v124 = vld [vmem:[%s1 + $0x17c] sm:$0xf]
  %v125 = vld [vmem:[%s2] sm:$0x1]
  %v127 = vperm.slane %v125, 0
  %v141 = vunpack.c.l.b16 %v17
  %v142 = vunpack.c.h.b16 %v17
  %v143 = vunpack.c.l.b16 %v18
  %v144 = vunpack.c.h.b16 %v18
  %v145 = vunpack.c.l.b16 %v19
  %v146 = vunpack.c.h.b16 %v19
  %v147 = vunpack.c.l.b16 %v20
  %v148 = vunpack.c.h.b16 %v20
  %v149 = vunpack.c.l.b16 %v21
  %v150 = vunpack.c.h.b16 %v21
  %v151 = vunpack.c.l.b16 %v22
  %v152 = vunpack.c.h.b16 %v22
  %v153 = vunpack.c.l.b16 %v23
  %v154 = vunpack.c.h.b16 %v23
  %v155 = vunpack.c.l.b16 %v24
  %v156 = vunpack.c.h.b16 %v24
  %v157 = vunpack.c.l.b16 %v25
  %v158 = vunpack.c.h.b16 %v25
  %v159 = vunpack.c.l.b16 %v26
  %v160 = vunpack.c.h.b16 %v26
  %v161 = vunpack.c.l.b16 %v27
  %v162 = vunpack.c.h.b16 %v27
  %v163 = vunpack.c.l.b16 %v28
  %v164 = vunpack.c.h.b16 %v28
  %v165 = vpack.c.b16 %v147, %v141
  %v166 = vpack.c.b16 %v148, %v142
  %v167 = vpack.c.b16 %v149, %v143
  %v168 = vpack.c.b16 %v150, %v144
  %v169 = vpack.c.b16 %v151, %v145
  %v170 = vpack.c.b16 %v152, %v146
  %v171 = vpack.c.b16 %v159, %v153
  %v172 = vpack.c.b16 %v160, %v154
  %v173 = vpack.c.b16 %v161, %v155
  %v174 = vpack.c.b16 %v162, %v156
  %v175 = vpack.c.b16 %v163, %v157
  %v176 = vpack.c.b16 %v164, %v158
  %v285 = vunpack.c.l.b16 %v29
  %v286 = vunpack.c.l.b16 %v30
  %v287 = vunpack.c.l.b16 %v31
  %v288 = vunpack.c.l.b16 %v32
  %v289 = vunpack.c.l.b16 %v33
  %v290 = vunpack.c.l.b16 %v34
  %v291 = vunpack.c.l.b16 %v35
  %v292 = vunpack.c.l.b16 %v36
  %v293 = vunpack.c.l.b16 %v37
  %v294 = vunpack.c.l.b16 %v38
  %v295 = vunpack.c.l.b16 %v39
  %v296 = vunpack.c.l.b16 %v40
  %v297 = vunpack.c.l.b16 %v41
  %v298 = vunpack.c.l.b16 %v42
  %v299 = vunpack.c.l.b16 %v43
  %v300 = vunpack.c.l.b16 %v44
  %v301 = vunpack.c.l.b16 %v45
  %v302 = vunpack.c.l.b16 %v46
  %v303 = vunpack.c.l.b16 %v47
  %v304 = vunpack.c.l.b16 %v48
  %v305 = vunpack.c.l.b16 %v49
  %v306 = vunpack.c.l.b16 %v50
  %v307 = vunpack.c.l.b16 %v51
  %v308 = vunpack.c.l.b16 %v52
  %v309 = vunpack.c.l.b16 %v53
  %v310 = vunpack.c.l.b16 %v54
  %v311 = vunpack.c.l.b16 %v55
  %v312 = vunpack.c.l.b16 %v56
  %v313 = vunpack.c.l.b16 %v57
  %v314 = vunpack.c.l.b16 %v58
  %v315 = vunpack.c.l.b16 %v59
  %v316 = vunpack.c.l.b16 %v60
  %v317 = vunpack.c.l.b16 %v61
  %v318 = vunpack.c.l.b16 %v62
  %v319 = vunpack.c.l.b16 %v63
  %v320 = vunpack.c.l.b16 %v64
  %v321 = vunpack.c.l.b16 %v65
  %v322 = vunpack.c.l.b16 %v66
  %v323 = vunpack.c.l.b16 %v67
  %v324 = vunpack.c.l.b16 %v68
  %v325 = vunpack.c.l.b16 %v69
  %v326 = vunpack.c.l.b16 %v70
  %v327 = vunpack.c.l.b16 %v71
  %v328 = vunpack.c.l.b16 %v72
  %v329 = vunpack.c.l.b16 %v73
  %v330 = vunpack.c.l.b16 %v74
  %v331 = vunpack.c.l.b16 %v75
  %v332 = vunpack.c.l.b16 %v76
  %v333 = vunpack.c.l.b16 %v77
  %v334 = vunpack.c.l.b16 %v78
  %v335 = vunpack.c.l.b16 %v79
  %v336 = vunpack.c.l.b16 %v80
  %v337 = vunpack.c.l.b16 %v81
  %v338 = vunpack.c.l.b16 %v82
  %v339 = vunpack.c.l.b16 %v83
  %v340 = vunpack.c.l.b16 %v84
  %v341 = vunpack.c.l.b16 %v85
  %v342 = vunpack.c.l.b16 %v86
  %v343 = vunpack.c.l.b16 %v87
  %v344 = vunpack.c.l.b16 %v88
  %v345 = vunpack.c.l.b16 %v89
  %v346 = vunpack.c.l.b16 %v90
  %v347 = vunpack.c.l.b16 %v91
  %v348 = vunpack.c.l.b16 %v92
  %v349 = vunpack.c.l.b16 %v93
  %v350 = vunpack.c.l.b16 %v94
  %v351 = vunpack.c.l.b16 %v95
  %v352 = vunpack.c.l.b16 %v96
  %v353 = vunpack.c.l.b16 %v97
  %v354 = vunpack.c.l.b16 %v98
  %v355 = vunpack.c.l.b16 %v99
  %v356 = vunpack.c.l.b16 %v100
  %v357 = vunpack.c.l.b16 %v101
  %v358 = vunpack.c.l.b16 %v102
  %v359 = vunpack.c.l.b16 %v103
  %v360 = vunpack.c.l.b16 %v104
  %v361 = vunpack.c.l.b16 %v105
  %v362 = vunpack.c.l.b16 %v106
  %v363 = vunpack.c.l.b16 %v107
  %v364 = vunpack.c.l.b16 %v108
  %v365 = vunpack.c.l.b16 %v109
  %v366 = vunpack.c.l.b16 %v110
  %v367 = vunpack.c.l.b16 %v111
  %v368 = vunpack.c.l.b16 %v112
  %v369 = vunpack.c.l.b16 %v113
  %v370 = vunpack.c.l.b16 %v114
  %v371 = vunpack.c.l.b16 %v115
  %v372 = vunpack.c.l.b16 %v116
  %v373 = vunpack.c.l.b16 %v117
  %v374 = vunpack.c.l.b16 %v118
  %v375 = vunpack.c.l.b16 %v119
  %v376 = vunpack.c.l.b16 %v120
  %v377 = vunpack.c.l.b16 %v121
  %v378 = vunpack.c.l.b16 %v122
  %v379 = vunpack.c.l.b16 %v123
  %v380 = vunpack.c.l.b16 %v124
  %v381 = vpack.c.b16 %v286, %v285
  %v382 = vpack.c.b16 %v288, %v287
  %v383 = vpack.c.b16 %v290, %v289
  %v384 = vpack.c.b16 %v292, %v291
  %v385 = vpack.c.b16 %v294, %v293
  %v386 = vpack.c.b16 %v296, %v295
  %v387 = vpack.c.b16 %v298, %v297
  %v388 = vpack.c.b16 %v300, %v299
  %v389 = vpack.c.b16 %v302, %v301
  %v390 = vpack.c.b16 %v304, %v303
  %v391 = vpack.c.b16 %v306, %v305
  %v392 = vpack.c.b16 %v308, %v307
  %v393 = vpack.c.b16 %v310, %v309
  %v394 = vpack.c.b16 %v312, %v311
  %v395 = vpack.c.b16 %v314, %v313
  %v396 = vpack.c.b16 %v316, %v315
  %v397 = vpack.c.b16 %v318, %v317
  %v398 = vpack.c.b16 %v320, %v319
  %v399 = vpack.c.b16 %v322, %v321
  %v400 = vpack.c.b16 %v324, %v323
  %v401 = vpack.c.b16 %v326, %v325
  %v402 = vpack.c.b16 %v328, %v327
  %v403 = vpack.c.b16 %v330, %v329
  %v404 = vpack.c.b16 %v332, %v331
  %v405 = vpack.c.b16 %v334, %v333
  %v406 = vpack.c.b16 %v336, %v335
  %v407 = vpack.c.b16 %v338, %v337
  %v408 = vpack.c.b16 %v340, %v339
  %v409 = vpack.c.b16 %v342, %v341
  %v410 = vpack.c.b16 %v344, %v343
  %v411 = vpack.c.b16 %v346, %v345
  %v412 = vpack.c.b16 %v348, %v347
  %v413 = vpack.c.b16 %v350, %v349
  %v414 = vpack.c.b16 %v352, %v351
  %v415 = vpack.c.b16 %v354, %v353
  %v416 = vpack.c.b16 %v356, %v355
  %v417 = vpack.c.b16 %v358, %v357
  %v418 = vpack.c.b16 %v360, %v359
  %v419 = vpack.c.b16 %v362, %v361
  %v420 = vpack.c.b16 %v364, %v363
  %v421 = vpack.c.b16 %v366, %v365
  %v422 = vpack.c.b16 %v368, %v367
  %v423 = vpack.c.b16 %v370, %v369
  %v424 = vpack.c.b16 %v372, %v371
  %v425 = vpack.c.b16 %v374, %v373
  %v426 = vpack.c.b16 %v376, %v375
  %v427 = vpack.c.b16 %v378, %v377
  %v428 = vpack.c.b16 %v380, %v379
  %477 = vmatpush.bf16.msra.mxu0 %v388
  %478 = vmatpush.bf16.msra.mxu0 %v387
  %479 = vmatpush.bf16.msra.mxu0 %v386
  %480 = vmatpush.bf16.msra.mxu0 %v385
  %481 = vmatpush.bf16.msra.mxu0 %v384
  %482 = vmatpush.bf16.msra.mxu0 %v383
  %483 = vmatpush.bf16.msra.mxu0 %v382
  %484 = vmatpush.bf16.msra.mxu0 %v381
  %485 = vmatmul.bf16.gmra.mxu0 %v165
  %v486 = vpop.f32.mrf.mxu0
  %v487 = vadd.f32 %v127, %v486
  %v488 = vpop.f32.mrf.mxu0
  %v489 = vadd.f32 %v127, %v488
  %490 = vmatmul.bf16.gmra.mxu0 %v171
  %v491 = vpop.f32.mrf.mxu0
  %v492 = vadd.f32 %v127, %v491
  %v493 = vpop.f32.mrf.mxu0
  %v494 = vadd.f32 %v127, %v493
  %495 = vdwg.mxu0
  %496 = vmatpush.bf16.msra.mxu0 %v396
  %497 = vmatpush.bf16.msra.mxu0 %v395
  %498 = vmatpush.bf16.msra.mxu0 %v394
  %499 = vmatpush.bf16.msra.mxu0 %v393
  %500 = vmatpush.bf16.msra.mxu0 %v392
  %501 = vmatpush.bf16.msra.mxu0 %v391
  %502 = vmatpush.bf16.msra.mxu0 %v390
  %503 = vmatpush.bf16.msra.mxu0 %v389
  %504 = vmatmul.bf16.gmra.mxu0 %v166
  %v505 = vpop.f32.mrf.mxu0
  %v506 = vadd.f32 %v487, %v505
  %v507 = vpop.f32.mrf.mxu0
  %v508 = vadd.f32 %v489, %v507
  %509 = vmatmul.bf16.gmra.mxu0 %v172
  %v510 = vpop.f32.mrf.mxu0
  %v511 = vadd.f32 %v492, %v510
  %v512 = vpop.f32.mrf.mxu0
  %v513 = vadd.f32 %v494, %v512
  %514 = vdwg.mxu0
  %515 = vmatpush.bf16.msra.mxu0 %v404
  %516 = vmatpush.bf16.msra.mxu0 %v403
  %517 = vmatpush.bf16.msra.mxu0 %v402
  %518 = vmatpush.bf16.msra.mxu0 %v401
  %519 = vmatpush.bf16.msra.mxu0 %v400
  %520 = vmatpush.bf16.msra.mxu0 %v399
  %521 = vmatpush.bf16.msra.mxu0 %v398
  %522 = vmatpush.bf16.msra.mxu0 %v397
  %523 = vmatmul.bf16.gmra.mxu0 %v167
  %v524 = vpop.f32.mrf.mxu0
  %v525 = vadd.f32 %v506, %v524
  %v526 = vpop.f32.mrf.mxu0
  %v527 = vadd.f32 %v508, %v526
  %528 = vmatmul.bf16.gmra.mxu0 %v173
  %v529 = vpop.f32.mrf.mxu0
  %v530 = vadd.f32 %v511, %v529
  %v531 = vpop.f32.mrf.mxu0
  %v532 = vadd.f32 %v513, %v531
  %533 = vdwg.mxu0
  %534 = vmatpush.bf16.msra.mxu0 %v412
  %535 = vmatpush.bf16.msra.mxu0 %v411
  %536 = vmatpush.bf16.msra.mxu0 %v410
  %537 = vmatpush.bf16.msra.mxu0 %v409
  %538 = vmatpush.bf16.msra.mxu0 %v408
  %539 = vmatpush.bf16.msra.mxu0 %v407
  %540 = vmatpush.bf16.msra.mxu0 %v406
  %541 = vmatpush.bf16.msra.mxu0 %v405
  %542 = vmatmul.bf16.gmra.mxu0 %v168
  %v543 = vpop.f32.mrf.mxu0
  %v544 = vadd.f32 %v525, %v543
  %v545 = vpop.f32.mrf.mxu0
  %v546 = vadd.f32 %v527, %v545
  %547 = vmatmul.bf16.gmra.mxu0 %v174
  %v548 = vpop.f32.mrf.mxu0
  %v549 = vadd.f32 %v530, %v548
  %v550 = vpop.f32.mrf.mxu0
  %v551 = vadd.f32 %v532, %v550
  %552 = vdwg.mxu0
  %553 = vmatpush.bf16.msra.mxu0 %v420
  %554 = vmatpush.bf16.msra.mxu0 %v419
  %555 = vmatpush.bf16.msra.mxu0 %v418
  %556 = vmatpush.bf16.msra.mxu0 %v417
  %557 = vmatpush.bf16.msra.mxu0 %v416
  %558 = vmatpush.bf16.msra.mxu0 %v415
  %559 = vmatpush.bf16.msra.mxu0 %v414
  %560 = vmatpush.bf16.msra.mxu0 %v413
  %561 = vmatmul.bf16.gmra.mxu0 %v169
  %v562 = vpop.f32.mrf.mxu0
  %v563 = vadd.f32 %v544, %v562
  %v564 = vpop.f32.mrf.mxu0
  %v565 = vadd.f32 %v546, %v564
  %566 = vmatmul.bf16.gmra.mxu0 %v175
  %v567 = vpop.f32.mrf.mxu0
  %v568 = vadd.f32 %v549, %v567
  %v569 = vpop.f32.mrf.mxu0
  %v570 = vadd.f32 %v551, %v569
  %571 = vdwg.mxu0
  %572 = vmatpush.bf16.msra.mxu0 %v428
  %573 = vmatpush.bf16.msra.mxu0 %v427
  %574 = vmatpush.bf16.msra.mxu0 %v426
  %575 = vmatpush.bf16.msra.mxu0 %v425
  %576 = vmatpush.bf16.msra.mxu0 %v424
  %577 = vmatpush.bf16.msra.mxu0 %v423
  %578 = vmatpush.bf16.msra.mxu0 %v422
  %579 = vmatpush.bf16.msra.mxu0 %v421
  %580 = vmatmul.bf16.gmra.mxu0 %v170
  %v581 = vpop.f32.mrf.mxu0
  %v582 = vadd.f32 %v563, %v581
  %v583 = vpop.f32.mrf.mxu0
  %v584 = vadd.f32 %v565, %v583
  %585 = vmatmul.bf16.gmra.mxu0 %v176
  %v586 = vpop.f32.mrf.mxu0
  %v587 = vadd.f32 %v568, %v586
  %v588 = vpop.f32.mrf.mxu0
  %v589 = vadd.f32 %v570, %v588
  %590 = vdwg.mxu0
  %v591 = vld [vmem:[%s3] sm:$0xff]
  %v592 = vld [vmem:[%s3 + $0x8] sm:$0xff]
  %v593 = vld [vmem:[%s3 + $0x10] sm:$0xff]
  %v594 = vld [vmem:[%s3 + $0x18] sm:$0xff]
  %v595 = vadd.f32 %v582, %v591
  %v596 = vadd.f32 %v584, %v592
  %v597 = vadd.f32 %v587, %v593
  %v598 = vadd.f32 %v589, %v594
  %v599 = vpack.c.bf16 %v595, %v595
  %v600 = vpack.c.bf16 %v596, %v596
  %v601 = vpack.c.bf16 %v597, %v597
  %v602 = vpack.c.bf16 %v598, %v598
  %603 = vst [vmem:[%s4] sm:$0xf] %v599
  %604 = vst [vmem:[%s4 + $0x4] sm:$0xf] %v600
  %605 = vst [vmem:[%s4 + $0x8] sm:$0xf] %v601
  %606 = vst [vmem:[%s4 + $0xc] sm:$0xf] %v602
  // Predicated region
  $region18: #{vivit_forward.3} parent=0 // pred_check
    _
  $region19: #{vivit_forward.3} parent=0 // pred_check_branch
    %608 = sbr.rel (0) target = $region21
  $region20: #{vivit_forward.3} parent=0 // pred_region
    _
  $region21: #{vivit_forward.3} parent=0 // pred_fallthru
    _
  // Predicated region
  $region22: #{vivit_forward.3} parent=0 // pred_check
    _
  $region23: #{vivit_forward.3} parent=0 // pred_check_branch
    %610 = sbr.rel (0) target = $region25
  $region24: #{vivit_forward.3} parent=0 // pred_region
    _
  $region25: #{vivit_forward.3} parent=0 // pred_fallthru
    _

// kernel: vivit_forward.5
$region0: #{vivit_forward.5}
  #allocation0 [shape = 'u32[]', space=smem, size = 0x4, offset = 0x4, fixed_abs, tag = 'smem constant byte address 0x4 - core index']
  #allocation1 [shape = 'u32[72,128]{1,0:T(1,128)}', space=vmem, size = 0x9000, scoped, tag = 'internal scratch']
  %s0 = inlined_call_operand.vmem [shape: bf16[32,128], index: 0, kind: input, shape index: {}]
  %s1 = inlined_call_operand.vmem [shape: f32[1,128], index: 1, kind: input, shape index: {}]
  %s2 = inlined_call_operand.vmem [shape: f32[1,128], index: 2, kind: input, shape index: {}]
  %s3 = inlined_call_operand.vmem [shape: bf16[128,768], index: 3, kind: input, shape index: {}]
  %s4 = inlined_call_operand.vmem [shape: f32[1,768], index: 4, kind: input, shape index: {}]
  %s5 = inlined_call_operand.vmem [shape: f32[32,768], index: 5, kind: output, shape index: {}]
  %s6 = sld [smem:[#allocation0]]
  $region30: #{vivit_forward.5} parent=0
    _
  %s8 = ssub.s32 1, %s6
  %s9 = scalar_select 0, %s8, %s6
  // Predicated region
  $region2: #{vivit_forward.5} parent=0 // pred_check
    _
  $region3: #{vivit_forward.5} parent=0 // pred_check_branch
    %11 = sbr.rel (0) target = $region5
  $region4: #{vivit_forward.5} parent=0 // pred_region
    _
  $region5: #{vivit_forward.5} parent=0 // pred_fallthru
    _
  // Predicated region
  $region6: #{vivit_forward.5} parent=0 // pred_check
    _
  $region7: #{vivit_forward.5} parent=0 // pred_check_branch
    %13 = sbr.rel (0) target = $region9
  $region8: #{vivit_forward.5} parent=0 // pred_region
    _
  $region9: #{vivit_forward.5} parent=0 // pred_fallthru
    _
  // Predicated region
  $region10: #{vivit_forward.5} parent=0 // pred_check
    _
  $region11: #{vivit_forward.5} parent=0 // pred_check_branch
    %15 = sbr.rel (0) target = $region13
  $region12: #{vivit_forward.5} parent=0 // pred_region
    _
  $region13: #{vivit_forward.5} parent=0 // pred_fallthru
    _
  // Predicated region
  $region14: #{vivit_forward.5} parent=0 // pred_check
    _
  $region15: #{vivit_forward.5} parent=0 // pred_check_branch
    %17 = sbr.rel (0) target = $region17
  $region16: #{vivit_forward.5} parent=0 // pred_region
    _
  $region17: #{vivit_forward.5} parent=0 // pred_fallthru
    _
  // Predicated region
  $region18: #{vivit_forward.5} parent=0 // pred_check
    _
  $region19: #{vivit_forward.5} parent=0 // pred_check_branch
    %19 = sbr.rel (0) target = $region21
  $region20: #{vivit_forward.5} parent=0 // pred_region
    _
  $region21: #{vivit_forward.5} parent=0 // pred_fallthru
    _
  %v20 = vld [vmem:[%s0] sm:$0xf]
  %v21 = vld [vmem:[%s0 + $0x4] sm:$0xf]
  %v22 = vld [vmem:[%s0 + $0x8] sm:$0xf]
  %v23 = vld [vmem:[%s0 + $0xc] sm:$0xf]
  %v24 = vunpack.c.l.bf16 %v20
  %v25 = vunpack.c.l.bf16 %v21
  %v26 = vunpack.c.l.bf16 %v22
  %v27 = vunpack.c.l.bf16 %v23
  %v28 = vld [vmem:[%s1] sm:$0x1]
  %v29 = vld [vmem:[%s2] sm:$0x1]
  %30 = vadd.xlane.f32.xlu0 %v24
  %v31 = vpop.xlane.xlu0 %30
  %32 = vadd.xlane.f32.xlu0 %v25
  %v33 = vpop.xlane.xlu0 %32
  %34 = vadd.xlane.f32.xlu0 %v26
  %v35 = vpop.xlane.xlu0 %34
  %36 = vadd.xlane.f32.xlu0 %v27
  %v37 = vpop.xlane.xlu0 %36
  %v38 = vrcp.pop 128.0
  %v39 = vmul.f32 128.0, %v38
  %v40 = vsub.f32 1.0, %v39
  %v41 = vmul.f32 %v38, %v40
  %v42 = vadd.f32 %v38, %v41
  %vm43 = vweird.f32 %v38
  %v44 = vsel %vm43, %v38, %v42
  %v45 = vmul.f32 %v31, %v44
  %v46 = vmul.f32 %v33, %v44
  %v47 = vmul.f32 %v35, %v44
  %v48 = vmul.f32 %v37, %v44
  %v49 = vsub.f32 %v24, %v45
  %v50 = vsub.f32 %v25, %v46
  %v51 = vsub.f32 %v26, %v47
  %v52 = vsub.f32 %v27, %v48
  %v53 = vmul.f32 %v49, %v49
  %v54 = vmul.f32 %v50, %v50
  %v55 = vmul.f32 %v51, %v51
  %v56 = vmul.f32 %v52, %v52
  %57 = vadd.xlane.f32.xlu0 %v53
  %v58 = vpop.xlane.xlu0 %57
  %59 = vadd.xlane.f32.xlu0 %v54
  %v60 = vpop.xlane.xlu0 %59
  %61 = vadd.xlane.f32.xlu0 %v55
  %v62 = vpop.xlane.xlu0 %61
  %63 = vadd.xlane.f32.xlu0 %v56
  %v64 = vpop.xlane.xlu0 %63
  %v65 = vmul.f32 %v58, %v44
  %v66 = vmul.f32 %v60, %v44
  %v67 = vmul.f32 %v62, %v44
  %v68 = vmul.f32 %v64, %v44
  %v69 = vadd.f32 %v65, 1e-05
  %v70 = vadd.f32 %v66, 1e-05
  %v71 = vadd.f32 %v67, 1e-05
  %v72 = vadd.f32 %v68, 1e-05
  %v73 = vrsqrt.pop %v69
  %v74 = vmul.f32 %v73, %v69
  %v75 = vmul.f32 %v74, %v73
  %v76 = vmul.f32 0.5, %v75
  %v77 = vsub.f32 1.5, %v76
  %v78 = vmul.f32 %v73, %v77
  %vm79 = vweird.f32 %v69
  %vm80 = vweird.f32 %v73
  %vm81 = vmor %vm79, %vm80
  %v82 = vsel %vm81, %v73, %v78
  %v83 = vrsqrt.pop %v70
  %v84 = vmul.f32 %v83, %v70
  %v85 = vmul.f32 %v84, %v83
  %v86 = vmul.f32 0.5, %v85
  %v87 = vsub.f32 1.5, %v86
  %v88 = vmul.f32 %v83, %v87
  %vm89 = vweird.f32 %v70
  %vm90 = vweird.f32 %v83
  %vm91 = vmor %vm89, %vm90
  %v92 = vsel %vm91, %v83, %v88
  %v93 = vrsqrt.pop %v71
  %v94 = vmul.f32 %v93, %v71
  %v95 = vmul.f32 %v94, %v93
  %v96 = vmul.f32 0.5, %v95
  %v97 = vsub.f32 1.5, %v96
  %v98 = vmul.f32 %v93, %v97
  %vm99 = vweird.f32 %v71
  %vm100 = vweird.f32 %v93
  %vm101 = vmor %vm99, %vm100
  %v102 = vsel %vm101, %v93, %v98
  %v103 = vrsqrt.pop %v72
  %v104 = vmul.f32 %v103, %v72
  %v105 = vmul.f32 %v104, %v103
  %v106 = vmul.f32 0.5, %v105
  %v107 = vsub.f32 1.5, %v106
  %v108 = vmul.f32 %v103, %v107
  %vm109 = vweird.f32 %v72
  %vm110 = vweird.f32 %v103
  %vm111 = vmor %vm109, %vm110
  %v112 = vsel %vm111, %v103, %v108
  %v113 = vmul.f32 %v49, %v82
  %v114 = vmul.f32 %v50, %v92
  %v115 = vmul.f32 %v51, %v102
  %v116 = vmul.f32 %v52, %v112
  %v118 = vperm.slane %v28, 0
  %v120 = vmul.f32 %v113, %v118
  %v121 = vmul.f32 %v114, %v118
  %v122 = vmul.f32 %v115, %v118
  %v123 = vmul.f32 %v116, %v118
  %v125 = vperm.slane %v29, 0
  %v127 = vadd.f32 %v120, %v125
  %v128 = vadd.f32 %v121, %v125
  %v129 = vadd.f32 %v122, %v125
  %v130 = vadd.f32 %v123, %v125
  %v131 = vpack.c.bf16 %v128, %v127
  %v132 = vpack.c.bf16 %v130, %v129
  %v133 = vld [vmem:[%s3] sm:$0xff]
  %v134 = vld [vmem:[%s3 + $0x8] sm:$0xff]
  %v135 = vld [vmem:[%s3 + $0x10] sm:$0xff]
  %v136 = vld [vmem:[%s3 + $0x18] sm:$0xff]
  %v137 = vld [vmem:[%s3 + $0x20] sm:$0xff]
  %v138 = vld [vmem:[%s3 + $0x28] sm:$0xff]
  %v139 = vld [vmem:[%s3 + $0x30] sm:$0xff]
  %v140 = vld [vmem:[%s3 + $0x38] sm:$0xff]
  %v141 = vld [vmem:[%s3 + $0x40] sm:$0xff]
  %v142 = vld [vmem:[%s3 + $0x48] sm:$0xff]
  %v143 = vld [vmem:[%s3 + $0x50] sm:$0xff]
  %v144 = vld [vmem:[%s3 + $0x58] sm:$0xff]
  %v145 = vld [vmem:[%s3 + $0x60] sm:$0xff]
  %v146 = vld [vmem:[%s3 + $0x68] sm:$0xff]
  %v147 = vld [vmem:[%s3 + $0x70] sm:$0xff]
  %v148 = vld [vmem:[%s3 + $0x78] sm:$0xff]
  %v149 = vld [vmem:[%s3 + $0x80] sm:$0xff]
  %v150 = vld [vmem:[%s3 + $0x88] sm:$0xff]
  %v151 = vld [vmem:[%s3 + $0x90] sm:$0xff]
  %v152 = vld [vmem:[%s3 + $0x98] sm:$0xff]
  %v153 = vld [vmem:[%s3 + $0xa0] sm:$0xff]
  %v154 = vld [vmem:[%s3 + $0xa8] sm:$0xff]
  %v155 = vld [vmem:[%s3 + $0xb0] sm:$0xff]
  %v156 = vld [vmem:[%s3 + $0xb8] sm:$0xff]
  %v157 = vld [vmem:[%s3 + $0xc0] sm:$0xff]
  %v158 = vld [vmem:[%s3 + $0xc8] sm:$0xff]
  %v159 = vld [vmem:[%s3 + $0xd0] sm:$0xff]
  %v160 = vld [vmem:[%s3 + $0xd8] sm:$0xff]
  %v161 = vld [vmem:[%s3 + $0xe0] sm:$0xff]
  %v162 = vld [vmem:[%s3 + $0xe8] sm:$0xff]
  %v163 = vld [vmem:[%s3 + $0xf0] sm:$0xff]
  %v164 = vld [vmem:[%s3 + $0xf8] sm:$0xff]
  %v165 = vld [vmem:[%s3 + $0x100] sm:$0xff]
  %v166 = vld [vmem:[%s3 + $0x108] sm:$0xff]
  %v167 = vld [vmem:[%s3 + $0x110] sm:$0xff]
  %v168 = vld [vmem:[%s3 + $0x118] sm:$0xff]
  %v169 = vld [vmem:[%s3 + $0x120] sm:$0xff]
  %v170 = vld [vmem:[%s3 + $0x128] sm:$0xff]
  %v171 = vld [vmem:[%s3 + $0x130] sm:$0xff]
  %v172 = vld [vmem:[%s3 + $0x138] sm:$0xff]
  %v173 = vld [vmem:[%s3 + $0x140] sm:$0xff]
  %v174 = vld [vmem:[%s3 + $0x148] sm:$0xff]
  %v175 = vld [vmem:[%s3 + $0x150] sm:$0xff]
  %v176 = vld [vmem:[%s3 + $0x158] sm:$0xff]
  %v177 = vld [vmem:[%s3 + $0x160] sm:$0xff]
  %v178 = vld [vmem:[%s3 + $0x168] sm:$0xff]
  %v179 = vld [vmem:[%s3 + $0x170] sm:$0xff]
  %v180 = vld [vmem:[%s3 + $0x178] sm:$0xff]
  %v181 = vld [vmem:[%s4] sm:$0x3f]
  %v183 = vperm.slane %v181, 0
  %v184 = vperm.slane %v181, 1
  %v185 = vperm.slane %v181, 2
  %v186 = vperm.slane %v181, 3
  %v187 = vperm.slane %v181, 4
  %v188 = vperm.slane %v181, 5
  %v243 = vunpack.c.l.b16 %v133
  %v244 = vunpack.c.h.b16 %v133
  %v245 = vunpack.c.l.b16 %v134
  %v246 = vunpack.c.h.b16 %v134
  %v247 = vunpack.c.l.b16 %v135
  %v248 = vunpack.c.h.b16 %v135
  %v249 = vunpack.c.l.b16 %v136
  %v250 = vunpack.c.h.b16 %v136
  %v251 = vunpack.c.l.b16 %v137
  %v252 = vunpack.c.h.b16 %v137
  %v253 = vunpack.c.l.b16 %v138
  %v254 = vunpack.c.h.b16 %v138
  %v255 = vunpack.c.l.b16 %v139
  %v256 = vunpack.c.h.b16 %v139
  %v257 = vunpack.c.l.b16 %v140
  %v258 = vunpack.c.h.b16 %v140
  %v259 = vunpack.c.l.b16 %v141
  %v260 = vunpack.c.h.b16 %v141
  %v261 = vunpack.c.l.b16 %v142
  %v262 = vunpack.c.h.b16 %v142
  %v263 = vunpack.c.l.b16 %v143
  %v264 = vunpack.c.h.b16 %v143
  %v265 = vunpack.c.l.b16 %v144
  %v266 = vunpack.c.h.b16 %v144
  %v267 = vunpack.c.l.b16 %v145
  %v268 = vunpack.c.h.b16 %v145
  %v269 = vunpack.c.l.b16 %v146
  %v270 = vunpack.c.h.b16 %v146
  %v271 = vunpack.c.l.b16 %v147
  %v272 = vunpack.c.h.b16 %v147
  %v273 = vunpack.c.l.b16 %v148
  %v274 = vunpack.c.h.b16 %v148
  %v275 = vunpack.c.l.b16 %v149
  %v276 = vunpack.c.h.b16 %v149
  %v277 = vunpack.c.l.b16 %v150
  %v278 = vunpack.c.h.b16 %v150
  %v279 = vunpack.c.l.b16 %v151
  %v280 = vunpack.c.h.b16 %v151
  %v281 = vunpack.c.l.b16 %v152
  %v282 = vunpack.c.h.b16 %v152
  %v283 = vunpack.c.l.b16 %v153
  %v284 = vunpack.c.h.b16 %v153
  %v285 = vunpack.c.l.b16 %v154
  %v286 = vunpack.c.h.b16 %v154
  %v287 = vunpack.c.l.b16 %v155
  %v288 = vunpack.c.h.b16 %v155
  %v289 = vunpack.c.l.b16 %v156
  %v290 = vunpack.c.h.b16 %v156
  %v291 = vunpack.c.l.b16 %v157
  %v292 = vunpack.c.h.b16 %v157
  %v293 = vunpack.c.l.b16 %v158
  %v294 = vunpack.c.h.b16 %v158
  %v295 = vunpack.c.l.b16 %v159
  %v296 = vunpack.c.h.b16 %v159
  %v297 = vunpack.c.l.b16 %v160
  %v298 = vunpack.c.h.b16 %v160
  %v299 = vunpack.c.l.b16 %v161
  %v300 = vunpack.c.h.b16 %v161
  %v301 = vunpack.c.l.b16 %v162
  %v302 = vunpack.c.h.b16 %v162
  %v303 = vunpack.c.l.b16 %v163
  %v304 = vunpack.c.h.b16 %v163
  %v305 = vunpack.c.l.b16 %v164
  %v306 = vunpack.c.h.b16 %v164
  %v307 = vunpack.c.l.b16 %v165
  %v308 = vunpack.c.h.b16 %v165
  %v309 = vunpack.c.l.b16 %v166
  %v310 = vunpack.c.h.b16 %v166
  %v311 = vunpack.c.l.b16 %v167
  %v312 = vunpack.c.h.b16 %v167
  %v313 = vunpack.c.l.b16 %v168
  %v314 = vunpack.c.h.b16 %v168
  %v315 = vunpack.c.l.b16 %v169
  %v316 = vunpack.c.h.b16 %v169
  %v317 = vunpack.c.l.b16 %v170
  %v318 = vunpack.c.h.b16 %v170
  %v319 = vunpack.c.l.b16 %v171
  %v320 = vunpack.c.h.b16 %v171
  %v321 = vunpack.c.l.b16 %v172
  %v322 = vunpack.c.h.b16 %v172
  %v323 = vunpack.c.l.b16 %v173
  %v324 = vunpack.c.h.b16 %v173
  %v325 = vunpack.c.l.b16 %v174
  %v326 = vunpack.c.h.b16 %v174
  %v327 = vunpack.c.l.b16 %v175
  %v328 = vunpack.c.h.b16 %v175
  %v329 = vunpack.c.l.b16 %v176
  %v330 = vunpack.c.h.b16 %v176
  %v331 = vunpack.c.l.b16 %v177
  %v332 = vunpack.c.h.b16 %v177
  %v333 = vunpack.c.l.b16 %v178
  %v334 = vunpack.c.h.b16 %v178
  %v335 = vunpack.c.l.b16 %v179
  %v336 = vunpack.c.h.b16 %v179
  %v337 = vunpack.c.l.b16 %v180
  %v338 = vunpack.c.h.b16 %v180
  %v339 = vpack.c.b16 %v249, %v243
  %v340 = vpack.c.b16 %v250, %v244
  %v341 = vpack.c.b16 %v251, %v245
  %v342 = vpack.c.b16 %v252, %v246
  %v343 = vpack.c.b16 %v253, %v247
  %v344 = vpack.c.b16 %v254, %v248
  %v345 = vpack.c.b16 %v261, %v255
  %v346 = vpack.c.b16 %v262, %v256
  %v347 = vpack.c.b16 %v263, %v257
  %v348 = vpack.c.b16 %v264, %v258
  %v349 = vpack.c.b16 %v265, %v259
  %v350 = vpack.c.b16 %v266, %v260
  %v351 = vpack.c.b16 %v273, %v267
  %v352 = vpack.c.b16 %v274, %v268
  %v353 = vpack.c.b16 %v275, %v269
  %v354 = vpack.c.b16 %v276, %v270
  %v355 = vpack.c.b16 %v277, %v271
  %v356 = vpack.c.b16 %v278, %v272
  %v357 = vpack.c.b16 %v285, %v279
  %v358 = vpack.c.b16 %v286, %v280
  %v359 = vpack.c.b16 %v287, %v281
  %v360 = vpack.c.b16 %v288, %v282
  %v361 = vpack.c.b16 %v289, %v283
  %v362 = vpack.c.b16 %v290, %v284
  %v363 = vpack.c.b16 %v297, %v291
  %v364 = vpack.c.b16 %v298, %v292
  %v365 = vpack.c.b16 %v299, %v293
  %v366 = vpack.c.b16 %v300, %v294
  %v367 = vpack.c.b16 %v301, %v295
  %v368 = vpack.c.b16 %v302, %v296
  %v369 = vpack.c.b16 %v309, %v303
  %v370 = vpack.c.b16 %v310, %v304
  %v371 = vpack.c.b16 %v311, %v305
  %v372 = vpack.c.b16 %v312, %v306
  %v373 = vpack.c.b16 %v313, %v307
  %v374 = vpack.c.b16 %v314, %v308
  %v375 = vpack.c.b16 %v321, %v315
  %v376 = vpack.c.b16 %v322, %v316
  %v377 = vpack.c.b16 %v323, %v317
  %v378 = vpack.c.b16 %v324, %v318
  %v379 = vpack.c.b16 %v325, %v319
  %v380 = vpack.c.b16 %v326, %v320
  %v381 = vpack.c.b16 %v333, %v327
  %v382 = vpack.c.b16 %v334, %v328
  %v383 = vpack.c.b16 %v335, %v329
  %v384 = vpack.c.b16 %v336, %v330
  %v385 = vpack.c.b16 %v337, %v331
  %v386 = vpack.c.b16 %v338, %v332
  %435 = vmatpush.bf16.msra.mxu0 %v381
  %436 = vmatpush.bf16.msra.mxu0 %v375
  %437 = vmatpush.bf16.msra.mxu0 %v369
  %438 = vmatpush.bf16.msra.mxu0 %v363
  %439 = vmatpush.bf16.msra.mxu0 %v357
  %440 = vmatpush.bf16.msra.mxu0 %v351
  %441 = vmatpush.bf16.msra.mxu0 %v345
  %442 = vmatpush.bf16.msra.mxu0 %v339
  %443 = vmatmul.bf16.gmra.mxu0 %v131
  %v444 = vpop.f32.mrf.mxu0
  %v445 = vadd.f32 %v183, %v444
  %v446 = vpop.f32.mrf.mxu0
  %v447 = vadd.f32 %v183, %v446
  %448 = vmatmul.bf16.gmra.mxu0 %v132
  %v449 = vpop.f32.mrf.mxu0
  %v450 = vadd.f32 %v183, %v449
  %v451 = vpop.f32.mrf.mxu0
  %v452 = vadd.f32 %v183, %v451
  %453 = vdwg.mxu0
  %454 = vmatpush.bf16.msra.mxu0 %v382
  %455 = vmatpush.bf16.msra.mxu0 %v376
  %456 = vmatpush.bf16.msra.mxu0 %v370
  %457 = vmatpush.bf16.msra.mxu0 %v364
  %458 = vmatpush.bf16.msra.mxu0 %v358
  %459 = vmatpush.bf16.msra.mxu0 %v352
  %460 = vmatpush.bf16.msra.mxu0 %v346
  %461 = vmatpush.bf16.msra.mxu0 %v340
  %462 = vmatmul.bf16.gmra.mxu0 %v131
  %v463 = vpop.f32.mrf.mxu0
  %v464 = vadd.f32 %v184, %v463
  %v465 = vpop.f32.mrf.mxu0
  %v466 = vadd.f32 %v184, %v465
  %467 = vmatmul.bf16.gmra.mxu0 %v132
  %v468 = vpop.f32.mrf.mxu0
  %v469 = vadd.f32 %v184, %v468
  %v470 = vpop.f32.mrf.mxu0
  %v471 = vadd.f32 %v184, %v470
  %472 = vdwg.mxu0
  %473 = vmatpush.bf16.msra.mxu0 %v383
  %474 = vmatpush.bf16.msra.mxu0 %v377
  %475 = vmatpush.bf16.msra.mxu0 %v371
  %476 = vmatpush.bf16.msra.mxu0 %v365
  %477 = vmatpush.bf16.msra.mxu0 %v359
  %478 = vmatpush.bf16.msra.mxu0 %v353
  %479 = vmatpush.bf16.msra.mxu0 %v347
  %480 = vmatpush.bf16.msra.mxu0 %v341
  %481 = vmatmul.bf16.gmra.mxu0 %v131
  %v482 = vpop.f32.mrf.mxu0
  %v483 = vadd.f32 %v185, %v482
  %v484 = vpop.f32.mrf.mxu0
  %v485 = vadd.f32 %v185, %v484
  %486 = vmatmul.bf16.gmra.mxu0 %v132
  %v487 = vpop.f32.mrf.mxu0
  %v488 = vadd.f32 %v185, %v487
  %v489 = vpop.f32.mrf.mxu0
  %v490 = vadd.f32 %v185, %v489
  %491 = vdwg.mxu0
  %492 = vmatpush.bf16.msra.mxu0 %v384
  %493 = vmatpush.bf16.msra.mxu0 %v378
  %494 = vmatpush.bf16.msra.mxu0 %v372
  %495 = vmatpush.bf16.msra.mxu0 %v366
  %496 = vmatpush.bf16.msra.mxu0 %v360
  %497 = vmatpush.bf16.msra.mxu0 %v354
  %498 = vmatpush.bf16.msra.mxu0 %v348
  %499 = vmatpush.bf16.msra.mxu0 %v342
  %500 = vmatmul.bf16.gmra.mxu0 %v131
  %v501 = vpop.f32.mrf.mxu0
  %v502 = vadd.f32 %v186, %v501
  %v503 = vpop.f32.mrf.mxu0
  %v504 = vadd.f32 %v186, %v503
  %505 = vmatmul.bf16.gmra.mxu0 %v132
  %v506 = vpop.f32.mrf.mxu0
  %v507 = vadd.f32 %v186, %v506
  %v508 = vpop.f32.mrf.mxu0
  %v509 = vadd.f32 %v186, %v508
  %510 = vdwg.mxu0
  %511 = vmatpush.bf16.msra.mxu0 %v385
  %512 = vmatpush.bf16.msra.mxu0 %v379
  %513 = vmatpush.bf16.msra.mxu0 %v373
  %514 = vmatpush.bf16.msra.mxu0 %v367
  %515 = vmatpush.bf16.msra.mxu0 %v361
  %516 = vmatpush.bf16.msra.mxu0 %v355
  %517 = vmatpush.bf16.msra.mxu0 %v349
  %518 = vmatpush.bf16.msra.mxu0 %v343
  %519 = vmatmul.bf16.gmra.mxu0 %v131
  %v520 = vpop.f32.mrf.mxu0
  %v521 = vadd.f32 %v187, %v520
  %v522 = vpop.f32.mrf.mxu0
  %v523 = vadd.f32 %v187, %v522
  %524 = vmatmul.bf16.gmra.mxu0 %v132
  %v525 = vpop.f32.mrf.mxu0
  %v526 = vadd.f32 %v187, %v525
  %v527 = vpop.f32.mrf.mxu0
  %v528 = vadd.f32 %v187, %v527
  %529 = vdwg.mxu0
  %530 = vmatpush.bf16.msra.mxu0 %v386
  %531 = vmatpush.bf16.msra.mxu0 %v380
  %532 = vmatpush.bf16.msra.mxu0 %v374
  %533 = vmatpush.bf16.msra.mxu0 %v368
  %534 = vmatpush.bf16.msra.mxu0 %v362
  %535 = vmatpush.bf16.msra.mxu0 %v356
  %536 = vmatpush.bf16.msra.mxu0 %v350
  %537 = vmatpush.bf16.msra.mxu0 %v344
  %538 = vmatmul.bf16.gmra.mxu0 %v131
  %v539 = vpop.f32.mrf.mxu0
  %v540 = vadd.f32 %v188, %v539
  %v541 = vpop.f32.mrf.mxu0
  %v542 = vadd.f32 %v188, %v541
  %543 = vmatmul.bf16.gmra.mxu0 %v132
  %v544 = vpop.f32.mrf.mxu0
  %v545 = vadd.f32 %v188, %v544
  %v546 = vpop.f32.mrf.mxu0
  %v547 = vadd.f32 %v188, %v546
  %548 = vdwg.mxu0
  %549 = vst [vmem:[%s5] sm:$0xff] %v445
  %550 = vst [vmem:[%s5 + $0x8] sm:$0xff] %v464
  %551 = vst [vmem:[%s5 + $0x10] sm:$0xff] %v483
  %552 = vst [vmem:[%s5 + $0x18] sm:$0xff] %v502
  %553 = vst [vmem:[%s5 + $0x20] sm:$0xff] %v521
  %554 = vst [vmem:[%s5 + $0x28] sm:$0xff] %v540
  %555 = vst [vmem:[%s5 + $0x30] sm:$0xff] %v447
  %556 = vst [vmem:[%s5 + $0x38] sm:$0xff] %v466
  %557 = vst [vmem:[%s5 + $0x40] sm:$0xff] %v485
  %558 = vst [vmem:[%s5 + $0x48] sm:$0xff] %v504
  %559 = vst [vmem:[%s5 + $0x50] sm:$0xff] %v523
  %560 = vst [vmem:[%s5 + $0x58] sm:$0xff] %v542
  %561 = vst [vmem:[%s5 + $0x60] sm:$0xff] %v450
  %562 = vst [vmem:[%s5 + $0x68] sm:$0xff] %v469
  %563 = vst [vmem:[%s5 + $0x70] sm:$0xff] %v488
  %564 = vst [vmem:[%s5 + $0x78] sm:$0xff] %v507
  %565 = vst [vmem:[%s5 + $0x80] sm:$0xff] %v526
  %566 = vst [vmem:[%s5 + $0x88] sm:$0xff] %v545
  %567 = vst [vmem:[%s5 + $0x90] sm:$0xff] %v452
  %568 = vst [vmem:[%s5 + $0x98] sm:$0xff] %v471
  %569 = vst [vmem:[%s5 + $0xa0] sm:$0xff] %v490
  %570 = vst [vmem:[%s5 + $0xa8] sm:$0xff] %v509
  %571 = vst [vmem:[%s5 + $0xb0] sm:$0xff] %v528
  %572 = vst [vmem:[%s5 + $0xb8] sm:$0xff] %v547
  // Predicated region
  $region22: #{vivit_forward.5} parent=0 // pred_check
    _
  $region23: #{vivit_forward.5} parent=0 // pred_check_branch
    %574 = sbr.rel (0) target = $region25
  $region24: #{vivit_forward.5} parent=0 // pred_region
    _
  $region25: #{vivit_forward.5} parent=0 // pred_fallthru
    _
  // Predicated region
  $region26: #{vivit_forward.5} parent=0 // pred_check
    _
  $region27: #{vivit_forward.5} parent=0 // pred_check_branch
    %576 = sbr.rel (0) target = $region29
  $region28: #{vivit_forward.5} parent=0 // pred_region
    _
  $region29: #{vivit_forward.5} parent=0 // pred_fallthru
    _

// kernel: vivit_forward.4
$region0: #{vivit_forward.4}
  #allocation0 [shape = 'u32[]', space=smem, size = 0x4, offset = 0x4, fixed_abs, tag = 'smem constant byte address 0x4 - core index']
  #allocation1 [shape = 'u32[72,128]{1,0:T(1,128)}', space=vmem, size = 0x9000, scoped, tag = 'internal scratch']
  #allocation2 [shape = 'f32[32,128]{1,0:T(8,128)}', space=vmem, size = 0x4000, scoped, tag = 'scratch operand']
  %s0 = inlined_call_operand.vmem [shape: bf16[32,128], index: 0, kind: input, shape index: {}]
  %s1 = inlined_call_operand.vmem [shape: f32[2,1,128], index: 1, kind: input, shape index: {}]
  %s2 = inlined_call_operand.vmem [shape: f32[2,1,128], index: 2, kind: input, shape index: {}]
  %s3 = inlined_call_operand.vmem [shape: bf16[2,4,128,32], index: 3, kind: input, shape index: {}]
  %s4 = inlined_call_operand.vmem [shape: f32[2,4,1,32], index: 4, kind: input, shape index: {}]
  %s5 = inlined_call_operand.vmem [shape: bf16[2,4,128,32], index: 5, kind: input, shape index: {}]
  %s6 = inlined_call_operand.vmem [shape: f32[2,4,1,32], index: 6, kind: input, shape index: {}]
  %s7 = inlined_call_operand.vmem [shape: bf16[2,4,128,32], index: 7, kind: input, shape index: {}]
  %s8 = inlined_call_operand.vmem [shape: f32[2,4,1,32], index: 8, kind: input, shape index: {}]
  %s9 = inlined_call_operand.vmem [shape: bf16[2,4,32,128], index: 9, kind: input, shape index: {}]
  %s10 = inlined_call_operand.vmem [shape: f32[2,1,128], index: 10, kind: input, shape index: {}]
  %s11 = inlined_call_operand.vmem [shape: f32[2,1,128], index: 11, kind: input, shape index: {}]
  %s12 = inlined_call_operand.vmem [shape: f32[2,1,128], index: 12, kind: input, shape index: {}]
  %s13 = inlined_call_operand.vmem [shape: bf16[2,128,512], index: 13, kind: input, shape index: {}]
  %s14 = inlined_call_operand.vmem [shape: f32[2,1,512], index: 14, kind: input, shape index: {}]
  %s15 = inlined_call_operand.vmem [shape: bf16[2,512,128], index: 15, kind: input, shape index: {}]
  %s16 = inlined_call_operand.vmem [shape: f32[2,1,128], index: 16, kind: input, shape index: {}]
  %s17 = inlined_call_operand.vmem [shape: bf16[32,128], index: 17, kind: output, shape index: {}]
  %s18 = sld [smem:[#allocation0]]
  $region109: #{vivit_forward.4} parent=0
    _
  %s20 = ssub.s32 1, %s18
  %s21 = scalar_select 0, %s20, %s18
  loop: start=0, step=1, limit=4
  $region2: #{vivit_forward.4} parent=0 // loop_pre_header
    _
  $region3: #{vivit_forward.4} parent=0 // loop_header
    %s23 = sphi 0, %s27
    %p24 = scmp.ge.s32.totalorder %s23, 4
    %s30 = sphi 0, %s42
    %s31 = sphi 0, %s38
    %s32 = sphi 0, %s30
    %s33 = sphi 0, %s31
    %s34 = sphi 0, %s32
    %s35 = sphi 0, %s33
    %s45 = sphi 0, %s47
    %s48 = sphi 0, %s45
    %s49 = sphi 0, %s48
    %s65 = sphi 0, %s49
    %s71 = sphi 0, %s73
    %s74 = sphi 0, %s71
    %s75 = sphi 0, %s74
    %s91 = sphi 0, %s75
    %s97 = sphi 0, %s99
    %s100 = sphi 0, %s97
    %s101 = sphi 0, %s100
    %s117 = sphi 0, %s101
    %s123 = sphi 0, %s125
    %s126 = sphi 0, %s123
    %s127 = sphi 0, %s126
    %s143 = sphi 0, %s127
    %s149 = sphi 0, %s151
    %s152 = sphi 0, %s149
    %s153 = sphi 0, %s152
    %s169 = sphi 0, %s153
    %s175 = sphi 0, %s177
    %s178 = sphi 0, %s175
    %s179 = sphi 0, %s178
    %s195 = sphi 0, %s179
    %s201 = sphi 0, %s203
    %s204 = sphi 0, %s201
    %s205 = sphi 0, %s204
    %s221 = sphi 0, %s205
    %s227 = sphi 0, %s229
    %s230 = sphi 0, %s227
    %s231 = sphi 0, %s230
    %s247 = sphi 0, %s231
    %s253 = sphi 0, %s255
    %s256 = sphi 0, %s253
    %s257 = sphi 0, %s256
    %s273 = sphi 0, %s257
    %s279 = sphi 0, %s281
    %s282 = sphi 0, %s279
    %s283 = sphi 0, %s282
    %s299 = sphi 0, %s283
    %s305 = sphi 0, %s307
    %s308 = sphi 0, %s305
    %s309 = sphi 0, %s308
    %s325 = sphi 0, %s309
    %s331 = sphi 0, %s333
    %s334 = sphi 0, %s331
    %s335 = sphi 0, %s334
    %s351 = sphi 0, %s335
    %s357 = sphi 0, %s359
    %s360 = sphi 0, %s357
    %s361 = sphi 0, %s360
    %s377 = sphi 0, %s361
    %s383 = sphi 0, %s385
    %s386 = sphi 0, %s383
    %s387 = sphi 0, %s386
    %s403 = sphi 0, %s387
    %s409 = sphi 0, %s411
    %s412 = sphi 0, %s409
    %s413 = sphi 0, %s412
    %s429 = sphi 0, %s413
    %s435 = sphi 0, %s437
    %s438 = sphi 0, %s435
    %s439 = sphi 0, %s438
    %s455 = sphi 0, %s439
    %s461 = sphi 0, %s463
    %s464 = sphi 0, %s461
    %s465 = sphi 0, %s464
    %s481 = sphi 0, %s465
    %s487 = sphi 0, %s489
    %s490 = sphi 0, %s487
    %s491 = sphi 0, %s490
    %s507 = sphi 0, %s491
  $region4: #{vivit_forward.4} parent=0 // loop_header_branch
    %26 = sbr.rel (%p24) target = $region8
  $region5: #{vivit_forward.4} parent=0 // loop_body
    %s28 = ssub.s32 %s23, 1
    %s29 = ssub.s32 %s23, 2
    %s36 = sadd.s32 1, %s31
    %p37 = scmp.ge.s32.totalorder %s36, 2
    %s38 = scalar_select %p37, 0, %s36
    %s39 = sadd.s32 1, %s30
    %s40 = scalar_select %p37, %s39, %s30
    %p41 = scmp.ge.s32.totalorder %s40, 1
    %s42 = scalar_select %p41, 0, %s40
    %s43 = ssub.s32 %s30, %s42
    %p44 = scmp.eq.s32.totalorder %s43, 0
    %s46 = sadd.s32 %s45, 1
    %s47 = scalar_select %p44, %s45, %s46
    %p50 = pneg %p44
    %p51 = scmp.eq.s32.totalorder %s23, 1
    %p52 = por %p50, %p51
    %p53 = scmp.ne.s32.totalorder %s45, %s48
    %p54 = scmp.eq.s32.totalorder %s23, 0
    %p55 = por %p53, %p54
    %p56 = scmp.ne.s32.totalorder %s45, %s48
    %p57 = scmp.eq.s32.totalorder %s28, 1
    %p58 = por %p56, %p57
    %p59 = scmp.ne.s32.totalorder %s48, %s49
    %p60 = scmp.eq.s32.totalorder %s28, 0
    %p61 = por %p59, %p60
    %p62 = scmp.ne.s32.totalorder %s48, %s49
    %p63 = scmp.eq.s32.totalorder %s29, 1
    %p64 = por %p62, %p63
    %p66 = scmp.ne.s32.totalorder %s49, %s65
    %p67 = scmp.eq.s32.totalorder %s29, 0
    %p68 = por %p66, %p67
    %s69 = ssub.s32 %s31, %s38
    %p70 = scmp.eq.s32.totalorder %s69, 0
    %s72 = sadd.s32 %s71, 1
    %s73 = scalar_select %p70, %s71, %s72
    %p76 = pneg %p70
    %p77 = scmp.eq.s32.totalorder %s23, 1
    %p78 = por %p76, %p77
    %p79 = scmp.ne.s32.totalorder %s71, %s74
    %p80 = scmp.eq.s32.totalorder %s23, 0
    %p81 = por %p79, %p80
    %p82 = scmp.ne.s32.totalorder %s71, %s74
    %p83 = scmp.eq.s32.totalorder %s28, 1
    %p84 = por %p82, %p83
    %p85 = scmp.ne.s32.totalorder %s74, %s75
    %p86 = scmp.eq.s32.totalorder %s28, 0
    %p87 = por %p85, %p86
    %p88 = scmp.ne.s32.totalorder %s74, %s75
    %p89 = scmp.eq.s32.totalorder %s29, 1
    %p90 = por %p88, %p89
    %p92 = scmp.ne.s32.totalorder %s75, %s91
    %p93 = scmp.eq.s32.totalorder %s29, 0
    %p94 = por %p92, %p93
    %s95 = ssub.s32 %s31, %s38
    %p96 = scmp.eq.s32.totalorder %s95, 0
    %s98 = sadd.s32 %s97, 1
    %s99 = scalar_select %p96, %s97, %s98
    %p102 = pneg %p96
    %p103 = scmp.eq.s32.totalorder %s23, 1
    %p104 = por %p102, %p103
    %p105 = scmp.ne.s32.totalorder %s97, %s100
    %p106 = scmp.eq.s32.totalorder %s23, 0
    %p107 = por %p105, %p106
    %p108 = scmp.ne.s32.totalorder %s97, %s100
    %p109 = scmp.eq.s32.totalorder %s28, 1
    %p110 = por %p108, %p109
    %p111 = scmp.ne.s32.totalorder %s100, %s101
    %p112 = scmp.eq.s32.totalorder %s28, 0
    %p113 = por %p111, %p112
    %p114 = scmp.ne.s32.totalorder %s100, %s101
    %p115 = scmp.eq.s32.totalorder %s29, 1
    %p116 = por %p114, %p115
    %p118 = scmp.ne.s32.totalorder %s101, %s117
    %p119 = scmp.eq.s32.totalorder %s29, 0
    %p120 = por %p118, %p119
    %s121 = ssub.s32 %s31, %s38
    %p122 = scmp.eq.s32.totalorder %s121, 0
    %s124 = sadd.s32 %s123, 1
    %s125 = scalar_select %p122, %s123, %s124
    %p128 = pneg %p122
    %p129 = scmp.eq.s32.totalorder %s23, 1
    %p130 = por %p128, %p129
    %p131 = scmp.ne.s32.totalorder %s123, %s126
    %p132 = scmp.eq.s32.totalorder %s23, 0
    %p133 = por %p131, %p132
    %p134 = scmp.ne.s32.totalorder %s123, %s126
    %p135 = scmp.eq.s32.totalorder %s28, 1
    %p136 = por %p134, %p135
    %p137 = scmp.ne.s32.totalorder %s126, %s127
    %p138 = scmp.eq.s32.totalorder %s28, 0
    %p139 = por %p137, %p138
    %p140 = scmp.ne.s32.totalorder %s126, %s127
    %p141 = scmp.eq.s32.totalorder %s29, 1
    %p142 = por %p140, %p141
    %p144 = scmp.ne.s32.totalorder %s127, %s143
    %p145 = scmp.eq.s32.totalorder %s29, 0
    %p146 = por %p144, %p145
    %s147 = ssub.s32 %s31, %s38
    %p148 = scmp.eq.s32.totalorder %s147, 0
    %s150 = sadd.s32 %s149, 1
    %s151 = scalar_select %p148, %s149, %s150
    %p154 = pneg %p148
    %p155 = scmp.eq.s32.totalorder %s23, 1
    %p156 = por %p154, %p155
    %p157 = scmp.ne.s32.totalorder %s149, %s152
    %p158 = scmp.eq.s32.totalorder %s23, 0
    %p159 = por %p157, %p158
    %p160 = scmp.ne.s32.totalorder %s149, %s152
    %p161 = scmp.eq.s32.totalorder %s28, 1
    %p162 = por %p160, %p161
    %p163 = scmp.ne.s32.totalorder %s152, %s153
    %p164 = scmp.eq.s32.totalorder %s28, 0
    %p165 = por %p163, %p164
    %p166 = scmp.ne.s32.totalorder %s152, %s153
    %p167 = scmp.eq.s32.totalorder %s29, 1
    %p168 = por %p166, %p167
    %p170 = scmp.ne.s32.totalorder %s153, %s169
    %p171 = scmp.eq.s32.totalorder %s29, 0
    %p172 = por %p170, %p171
    %s173 = ssub.s32 %s31, %s38
    %p174 = scmp.eq.s32.totalorder %s173, 0
    %s176 = sadd.s32 %s175, 1
    %s177 = scalar_select %p174, %s175, %s176
    %p180 = pneg %p174
    %p181 = scmp.eq.s32.totalorder %s23, 1
    %p182 = por %p180, %p181
    %p183 = scmp.ne.s32.totalorder %s175, %s178
    %p184 = scmp.eq.s32.totalorder %s23, 0
    %p185 = por %p183, %p184
    %p186 = scmp.ne.s32.totalorder %s175, %s178
    %p187 = scmp.eq.s32.totalorder %s28, 1
    %p188 = por %p186, %p187
    %p189 = scmp.ne.s32.totalorder %s178, %s179
    %p190 = scmp.eq.s32.totalorder %s28, 0
    %p191 = por %p189, %p190
    %p192 = scmp.ne.s32.totalorder %s178, %s179
    %p193 = scmp.eq.s32.totalorder %s29, 1
    %p194 = por %p192, %p193
    %p196 = scmp.ne.s32.totalorder %s179, %s195
    %p197 = scmp.eq.s32.totalorder %s29, 0
    %p198 = por %p196, %p197
    %s199 = ssub.s32 %s31, %s38
    %p200 = scmp.eq.s32.totalorder %s199, 0
    %s202 = sadd.s32 %s201, 1
    %s203 = scalar_select %p200, %s201, %s202
    %p206 = pneg %p200
    %p207 = scmp.eq.s32.totalorder %s23, 1
    %p208 = por %p206, %p207
    %p209 = scmp.ne.s32.totalorder %s201, %s204
    %p210 = scmp.eq.s32.totalorder %s23, 0
    %p211 = por %p209, %p210
    %p212 = scmp.ne.s32.totalorder %s201, %s204
    %p213 = scmp.eq.s32.totalorder %s28, 1
    %p214 = por %p212, %p213
    %p215 = scmp.ne.s32.totalorder %s204, %s205
    %p216 = scmp.eq.s32.totalorder %s28, 0
    %p217 = por %p215, %p216
    %p218 = scmp.ne.s32.totalorder %s204, %s205
    %p219 = scmp.eq.s32.totalorder %s29, 1
    %p220 = por %p218, %p219
    %p222 = scmp.ne.s32.totalorder %s205, %s221
    %p223 = scmp.eq.s32.totalorder %s29, 0
    %p224 = por %p222, %p223
    %s225 = ssub.s32 %s31, %s38
    %p226 = scmp.eq.s32.totalorder %s225, 0
    %s228 = sadd.s32 %s227, 1
    %s229 = scalar_select %p226, %s227, %s228
    %p232 = pneg %p226
    %p233 = scmp.eq.s32.totalorder %s23, 1
    %p234 = por %p232, %p233
    %p235 = scmp.ne.s32.totalorder %s227, %s230
    %p236 = scmp.eq.s32.totalorder %s23, 0
    %p237 = por %p235, %p236
    %p238 = scmp.ne.s32.totalorder %s227, %s230
    %p239 = scmp.eq.s32.totalorder %s28, 1
    %p240 = por %p238, %p239
    %p241 = scmp.ne.s32.totalorder %s230, %s231
    %p242 = scmp.eq.s32.totalorder %s28, 0
    %p243 = por %p241, %p242
    %p244 = scmp.ne.s32.totalorder %s230, %s231
    %p245 = scmp.eq.s32.totalorder %s29, 1
    %p246 = por %p244, %p245
    %p248 = scmp.ne.s32.totalorder %s231, %s247
    %p249 = scmp.eq.s32.totalorder %s29, 0
    %p250 = por %p248, %p249
    %s251 = ssub.s32 %s31, %s38
    %p252 = scmp.eq.s32.totalorder %s251, 0
    %s254 = sadd.s32 %s253, 1
    %s255 = scalar_select %p252, %s253, %s254
    %p258 = pneg %p252
    %p259 = scmp.eq.s32.totalorder %s23, 1
    %p260 = por %p258, %p259
    %p261 = scmp.ne.s32.totalorder %s253, %s256
    %p262 = scmp.eq.s32.totalorder %s23, 0
    %p263 = por %p261, %p262
    %p264 = scmp.ne.s32.totalorder %s253, %s256
    %p265 = scmp.eq.s32.totalorder %s28, 1
    %p266 = por %p264, %p265
    %p267 = scmp.ne.s32.totalorder %s256, %s257
    %p268 = scmp.eq.s32.totalorder %s28, 0
    %p269 = por %p267, %p268
    %p270 = scmp.ne.s32.totalorder %s256, %s257
    %p271 = scmp.eq.s32.totalorder %s29, 1
    %p272 = por %p270, %p271
    %p274 = scmp.ne.s32.totalorder %s257, %s273
    %p275 = scmp.eq.s32.totalorder %s29, 0
    %p276 = por %p274, %p275
    %s277 = ssub.s32 %s31, %s38
    %p278 = scmp.eq.s32.totalorder %s277, 0
    %s280 = sadd.s32 %s279, 1
    %s281 = scalar_select %p278, %s279, %s280
    %p284 = pneg %p278
    %p285 = scmp.eq.s32.totalorder %s23, 1
    %p286 = por %p284, %p285
    %p287 = scmp.ne.s32.totalorder %s279, %s282
    %p288 = scmp.eq.s32.totalorder %s23, 0
    %p289 = por %p287, %p288
    %p290 = scmp.ne.s32.totalorder %s279, %s282
    %p291 = scmp.eq.s32.totalorder %s28, 1
    %p292 = por %p290, %p291
    %p293 = scmp.ne.s32.totalorder %s282, %s283
    %p294 = scmp.eq.s32.totalorder %s28, 0
    %p295 = por %p293, %p294
    %p296 = scmp.ne.s32.totalorder %s282, %s283
    %p297 = scmp.eq.s32.totalorder %s29, 1
    %p298 = por %p296, %p297
    %p300 = scmp.ne.s32.totalorder %s283, %s299
    %p301 = scmp.eq.s32.totalorder %s29, 0
    %p302 = por %p300, %p301
    %s303 = ssub.s32 %s31, %s38
    %p304 = scmp.eq.s32.totalorder %s303, 0
    %s306 = sadd.s32 %s305, 1
    %s307 = scalar_select %p304, %s305, %s306
    %p310 = pneg %p304
    %p311 = scmp.eq.s32.totalorder %s23, 1
    %p312 = por %p310, %p311
    %p313 = scmp.ne.s32.totalorder %s305, %s308
    %p314 = scmp.eq.s32.totalorder %s23, 0
    %p315 = por %p313, %p314
    %p316 = scmp.ne.s32.totalorder %s305, %s308
    %p317 = scmp.eq.s32.totalorder %s28, 1
    %p318 = por %p316, %p317
    %p319 = scmp.ne.s32.totalorder %s308, %s309
    %p320 = scmp.eq.s32.totalorder %s28, 0
    %p321 = por %p319, %p320
    %p322 = scmp.ne.s32.totalorder %s308, %s309
    %p323 = scmp.eq.s32.totalorder %s29, 1
    %p324 = por %p322, %p323
    %p326 = scmp.ne.s32.totalorder %s309, %s325
    %p327 = scmp.eq.s32.totalorder %s29, 0
    %p328 = por %p326, %p327
    %s329 = ssub.s32 %s31, %s38
    %p330 = scmp.eq.s32.totalorder %s329, 0
    %s332 = sadd.s32 %s331, 1
    %s333 = scalar_select %p330, %s331, %s332
    %p336 = pneg %p330
    %p337 = scmp.eq.s32.totalorder %s23, 1
    %p338 = por %p336, %p337
    %p339 = scmp.ne.s32.totalorder %s331, %s334
    %p340 = scmp.eq.s32.totalorder %s23, 0
    %p341 = por %p339, %p340
    %p342 = scmp.ne.s32.totalorder %s331, %s334
    %p343 = scmp.eq.s32.totalorder %s28, 1
    %p344 = por %p342, %p343
    %p345 = scmp.ne.s32.totalorder %s334, %s335
    %p346 = scmp.eq.s32.totalorder %s28, 0
    %p347 = por %p345, %p346
    %p348 = scmp.ne.s32.totalorder %s334, %s335
    %p349 = scmp.eq.s32.totalorder %s29, 1
    %p350 = por %p348, %p349
    %p352 = scmp.ne.s32.totalorder %s335, %s351
    %p353 = scmp.eq.s32.totalorder %s29, 0
    %p354 = por %p352, %p353
    %s355 = ssub.s32 %s31, %s38
    %p356 = scmp.eq.s32.totalorder %s355, 0
    %s358 = sadd.s32 %s357, 1
    %s359 = scalar_select %p356, %s357, %s358
    %p362 = pneg %p356
    %p363 = scmp.eq.s32.totalorder %s23, 1
    %p364 = por %p362, %p363
    %p365 = scmp.ne.s32.totalorder %s357, %s360
    %p366 = scmp.eq.s32.totalorder %s23, 0
    %p367 = por %p365, %p366
    %p368 = scmp.ne.s32.totalorder %s357, %s360
    %p369 = scmp.eq.s32.totalorder %s28, 1
    %p370 = por %p368, %p369
    %p371 = scmp.ne.s32.totalorder %s360, %s361
    %p372 = scmp.eq.s32.totalorder %s28, 0
    %p373 = por %p371, %p372
    %p374 = scmp.ne.s32.totalorder %s360, %s361
    %p375 = scmp.eq.s32.totalorder %s29, 1
    %p376 = por %p374, %p375
    %p378 = scmp.ne.s32.totalorder %s361, %s377
    %p379 = scmp.eq.s32.totalorder %s29, 0
    %p380 = por %p378, %p379
    %s381 = ssub.s32 %s31, %s38
    %p382 = scmp.eq.s32.totalorder %s381, 0
    %s384 = sadd.s32 %s383, 1
    %s385 = scalar_select %p382, %s383, %s384
    %p388 = pneg %p382
    %p389 = scmp.eq.s32.totalorder %s23, 1
    %p390 = por %p388, %p389
    %p391 = scmp.ne.s32.totalorder %s383, %s386
    %p392 = scmp.eq.s32.totalorder %s23, 0
    %p393 = por %p391, %p392
    %p394 = scmp.ne.s32.totalorder %s383, %s386
    %p395 = scmp.eq.s32.totalorder %s28, 1
    %p396 = por %p394, %p395
    %p397 = scmp.ne.s32.totalorder %s386, %s387
    %p398 = scmp.eq.s32.totalorder %s28, 0
    %p399 = por %p397, %p398
    %p400 = scmp.ne.s32.totalorder %s386, %s387
    %p401 = scmp.eq.s32.totalorder %s29, 1
    %p402 = por %p400, %p401
    %p404 = scmp.ne.s32.totalorder %s387, %s403
    %p405 = scmp.eq.s32.totalorder %s29, 0
    %p406 = por %p404, %p405
    %s407 = ssub.s32 %s31, %s38
    %p408 = scmp.eq.s32.totalorder %s407, 0
    %s410 = sadd.s32 %s409, 1
    %s411 = scalar_select %p408, %s409, %s410
    %p414 = pneg %p408
    %p415 = scmp.eq.s32.totalorder %s23, 1
    %p416 = por %p414, %p415
    %p417 = scmp.ne.s32.totalorder %s409, %s412
    %p418 = scmp.eq.s32.totalorder %s23, 0
    %p419 = por %p417, %p418
    %p420 = scmp.ne.s32.totalorder %s409, %s412
    %p421 = scmp.eq.s32.totalorder %s28, 1
    %p422 = por %p420, %p421
    %p423 = scmp.ne.s32.totalorder %s412, %s413
    %p424 = scmp.eq.s32.totalorder %s28, 0
    %p425 = por %p423, %p424
    %p426 = scmp.ne.s32.totalorder %s412, %s413
    %p427 = scmp.eq.s32.totalorder %s29, 1
    %p428 = por %p426, %p427
    %p430 = scmp.ne.s32.totalorder %s413, %s429
    %p431 = scmp.eq.s32.totalorder %s29, 0
    %p432 = por %p430, %p431
    %s433 = ssub.s32 %s31, %s38
    %p434 = scmp.eq.s32.totalorder %s433, 0
    %s436 = sadd.s32 %s435, 1
    %s437 = scalar_select %p434, %s435, %s436
    %p440 = pneg %p434
    %p441 = scmp.eq.s32.totalorder %s23, 1
    %p442 = por %p440, %p441
    %p443 = scmp.ne.s32.totalorder %s435, %s438
    %p444 = scmp.eq.s32.totalorder %s23, 0
    %p445 = por %p443, %p444
    %p446 = scmp.ne.s32.totalorder %s435, %s438
    %p447 = scmp.eq.s32.totalorder %s28, 1
    %p448 = por %p446, %p447
    %p449 = scmp.ne.s32.totalorder %s438, %s439
    %p450 = scmp.eq.s32.totalorder %s28, 0
    %p451 = por %p449, %p450
    %p452 = scmp.ne.s32.totalorder %s438, %s439
    %p453 = scmp.eq.s32.totalorder %s29, 1
    %p454 = por %p452, %p453
    %p456 = scmp.ne.s32.totalorder %s439, %s455
    %p457 = scmp.eq.s32.totalorder %s29, 0
    %p458 = por %p456, %p457
    %s459 = ssub.s32 %s31, %s38
    %p460 = scmp.eq.s32.totalorder %s459, 0
    %s462 = sadd.s32 %s461, 1
    %s463 = scalar_select %p460, %s461, %s462
    %p466 = pneg %p460
    %p467 = scmp.eq.s32.totalorder %s23, 1
    %p468 = por %p466, %p467
    %p469 = scmp.ne.s32.totalorder %s461, %s464
    %p470 = scmp.eq.s32.totalorder %s23, 0
    %p471 = por %p469, %p470
    %p472 = scmp.ne.s32.totalorder %s461, %s464
    %p473 = scmp.eq.s32.totalorder %s28, 1
    %p474 = por %p472, %p473
    %p475 = scmp.ne.s32.totalorder %s464, %s465
    %p476 = scmp.eq.s32.totalorder %s28, 0
    %p477 = por %p475, %p476
    %p478 = scmp.ne.s32.totalorder %s464, %s465
    %p479 = scmp.eq.s32.totalorder %s29, 1
    %p480 = por %p478, %p479
    %p482 = scmp.ne.s32.totalorder %s465, %s481
    %p483 = scmp.eq.s32.totalorder %s29, 0
    %p484 = por %p482, %p483
    %s485 = ssub.s32 %s30, %s42
    %p486 = scmp.eq.s32.totalorder %s485, 0
    %s488 = sadd.s32 %s487, 1
    %s489 = scalar_select %p486, %s487, %s488
    %p492 = pneg %p486
    %p493 = scmp.eq.s32.totalorder %s23, 1
    %p494 = por %p492, %p493
    %p495 = scmp.ne.s32.totalorder %s487, %s490
    %p496 = scmp.eq.s32.totalorder %s23, 0
    %p497 = por %p495, %p496
    %p498 = scmp.ne.s32.totalorder %s487, %s490
    %p499 = scmp.eq.s32.totalorder %s28, 1
    %p500 = por %p498, %p499
    %p501 = scmp.ne.s32.totalorder %s490, %s491
    %p502 = scmp.eq.s32.totalorder %s28, 0
    %p503 = por %p501, %p502
    %p504 = scmp.ne.s32.totalorder %s490, %s491
    %p505 = scmp.eq.s32.totalorder %s29, 1
    %p506 = por %p504, %p505
    %p508 = scmp.ne.s32.totalorder %s491, %s507
    %p509 = scmp.eq.s32.totalorder %s29, 0
    %p510 = por %p508, %p509
    %p511 = scmp.le.s32.totalorder 1, %s23
    %p512 = scmp.lt.s32.totalorder %s23, 3
    %p513 = pnand %p511, %p512
    %p514 = pneg %p513
    // Predicated region
    $region9: #{vivit_forward.4} parent=5 // pred_check
      _
    $region10: #{vivit_forward.4} parent=5 // pred_check_branch
      %516 = sbr.rel (%p513) target = $region12
    $region11: #{vivit_forward.4} parent=5 // pred_region
      %s517 = ssub.s32 %s23, 1
      // Predicated region
      $region13: #{vivit_forward.4} parent=11 // pred_check
        %p518 = pneg %p61
      $region14: #{vivit_forward.4} parent=11 // pred_check_branch
        %520 = sbr.rel (%p518) target = $region16
      $region15: #{vivit_forward.4} parent=11 // pred_region
        %s521 = smul.u32 4, %s32
        %p522 = scmp.lt.s32.totalorder %s521, 3
        %s523 = scalar_select %p522, %s521, 3
        %s524 = smul.addr %s523, 4
        %s525 = scalar_lea.vmem %s0, %s524
        %s526 = smul.u32 4, %s32
      $region16: #{vivit_forward.4} parent=11 // pred_fallthru
        _
    $region12: #{vivit_forward.4} parent=5 // pred_fallthru
      _
    %p527 = scmp.lt.s32.totalorder %s23, 2
    // Predicated region
    $region17: #{vivit_forward.4} parent=5 // pred_check
      %p528 = pneg %p527
    $region18: #{vivit_forward.4} parent=5 // pred_check_branch
      %530 = sbr.rel (%p528) target = $region20
    $region19: #{vivit_forward.4} parent=5 // pred_region
      // Predicated region
      $region21: #{vivit_forward.4} parent=19 // pred_check
        %p531 = pneg %p81
      $region22: #{vivit_forward.4} parent=19 // pred_check_branch
        %533 = sbr.rel (%p531) target = $region24
      $region23: #{vivit_forward.4} parent=19 // pred_region
        %p534 = scmp.lt.s32.totalorder %s31, 1
        %s535 = scalar_select %p534, %s31, 1
        %s536 = scalar_lea.vmem %s1, %s535
      $region24: #{vivit_forward.4} parent=19 // pred_fallthru
        _
      // Predicated region
      $region25: #{vivit_forward.4} parent=19 // pred_check
        %p537 = pneg %p107
      $region26: #{vivit_forward.4} parent=19 // pred_check_branch
        %539 = sbr.rel (%p537) target = $region28
      $region27: #{vivit_forward.4} parent=19 // pred_region
        %p540 = scmp.lt.s32.totalorder %s31, 1
        %s541 = scalar_select %p540, %s31, 1
        %s542 = scalar_lea.vmem %s2, %s541
      $region28: #{vivit_forward.4} parent=19 // pred_fallthru
        _
      // Predicated region
      $region29: #{vivit_forward.4} parent=19 // pred_check
        %p543 = pneg %p133
      $region30: #{vivit_forward.4} parent=19 // pred_check_branch
        %545 = sbr.rel (%p543) target = $region32
      $region31: #{vivit_forward.4} parent=19 // pred_region
        %p546 = scmp.lt.s32.totalorder %s31, 1
        %s547 = scalar_select %p546, %s31, 1
        %s548 = smul.addr %s547, 64
        %s549 = smul.addr %s548, 4
        %s550 = scalar_lea.vmem %s3, %s549
      $region32: #{vivit_forward.4} parent=19 // pred_fallthru
        _
      // Predicated region
      $region33: #{vivit_forward.4} parent=19 // pred_check
        %p551 = pneg %p159
      $region34: #{vivit_forward.4} parent=19 // pred_check_branch
        %553 = sbr.rel (%p551) target = $region36
      $region35: #{vivit_forward.4} parent=19 // pred_region
        %p554 = scmp.lt.s32.totalorder %s31, 1
        %s555 = scalar_select %p554, %s31, 1
        %s556 = smul.addr %s555, 4
        %s557 = scalar_lea.vmem %s4, %s556
      $region36: #{vivit_forward.4} parent=19 // pred_fallthru
        _
      // Predicated region
      $region37: #{vivit_forward.4} parent=19 // pred_check
        %p558 = pneg %p185
      $region38: #{vivit_forward.4} parent=19 // pred_check_branch
        %560 = sbr.rel (%p558) target = $region40
      $region39: #{vivit_forward.4} parent=19 // pred_region
        %p561 = scmp.lt.s32.totalorder %s31, 1
        %s562 = scalar_select %p561, %s31, 1
        %s563 = smul.addr %s562, 64
        %s564 = smul.addr %s563, 4
        %s565 = scalar_lea.vmem %s5, %s564
      $region40: #{vivit_forward.4} parent=19 // pred_fallthru
        _
      // Predicated region
      $region41: #{vivit_forward.4} parent=19 // pred_check
        %p566 = pneg %p211
      $region42: #{vivit_forward.4} parent=19 // pred_check_branch
        %568 = sbr.rel (%p566) target = $region44
      $region43: #{vivit_forward.4} parent=19 // pred_region
        %p569 = scmp.lt.s32.totalorder %s31, 1
        %s570 = scalar_select %p569, %s31, 1
        %s571 = smul.addr %s570, 4
        %s572 = scalar_lea.vmem %s6, %s571
      $region44: #{vivit_forward.4} parent=19 // pred_fallthru
        _
      // Predicated region
      $region45: #{vivit_forward.4} parent=19 // pred_check
        %p573 = pneg %p237
      $region46: #{vivit_forward.4} parent=19 // pred_check_branch
        %575 = sbr.rel (%p573) target = $region48
      $region47: #{vivit_forward.4} parent=19 // pred_region
        %p576 = scmp.lt.s32.totalorder %s31, 1
        %s577 = scalar_select %p576, %s31, 1
        %s578 = smul.addr %s577, 64
        %s579 = smul.addr %s578, 4
        %s580 = scalar_lea.vmem %s7, %s579
      $region48: #{vivit_forward.4} parent=19 // pred_fallthru
        _
      // Predicated region
      $region49: #{vivit_forward.4} parent=19 // pred_check
        %p581 = pneg %p263
      $region50: #{vivit_forward.4} parent=19 // pred_check_branch
        %583 = sbr.rel (%p581) target = $region52
      $region51: #{vivit_forward.4} parent=19 // pred_region
        %p584 = scmp.lt.s32.totalorder %s31, 1
        %s585 = scalar_select %p584, %s31, 1
        %s586 = smul.addr %s585, 4
        %s587 = scalar_lea.vmem %s8, %s586
      $region52: #{vivit_forward.4} parent=19 // pred_fallthru
        _
      // Predicated region
      $region53: #{vivit_forward.4} parent=19 // pred_check
        %p588 = pneg %p289
      $region54: #{vivit_forward.4} parent=19 // pred_check_branch
        %590 = sbr.rel (%p588) target = $region56
      $region55: #{vivit_forward.4} parent=19 // pred_region
        %p591 = scmp.lt.s32.totalorder %s31, 1
        %s592 = scalar_select %p591, %s31, 1
        %s593 = smul.addr %s592, 16
        %s594 = smul.addr %s593, 4
        %s595 = scalar_lea.vmem %s9, %s594
      $region56: #{vivit_forward.4} parent=19 // pred_fallthru
        _
      // Predicated region
      $region57: #{vivit_forward.4} parent=19 // pred_check
        %p596 = pneg %p315
      $region58: #{vivit_forward.4} parent=19 // pred_check_branch
        %598 = sbr.rel (%p596) target = $region60
      $region59: #{vivit_forward.4} parent=19 // pred_region
        %p599 = scmp.lt.s32.totalorder %s31, 1
        %s600 = scalar_select %p599, %s31, 1
        %s601 = scalar_lea.vmem %s10, %s600
      $region60: #{vivit_forward.4} parent=19 // pred_fallthru
        _
      // Predicated region
      $region61: #{vivit_forward.4} parent=19 // pred_check
        %p602 = pneg %p341
      $region62: #{vivit_forward.4} parent=19 // pred_check_branch
        %604 = sbr.rel (%p602) target = $region64
      $region63: #{vivit_forward.4} parent=19 // pred_region
        %p605 = scmp.lt.s32.totalorder %s31, 1
        %s606 = scalar_select %p605, %s31, 1
        %s607 = scalar_lea.vmem %s11, %s606
      $region64: #{vivit_forward.4} parent=19 // pred_fallthru
        _
      // Predicated region
      $region65: #{vivit_forward.4} parent=19 // pred_check
        %p608 = pneg %p367
      $region66: #{vivit_forward.4} parent=19 // pred_check_branch
        %610 = sbr.rel (%p608) target = $region68
      $region67: #{vivit_forward.4} parent=19 // pred_region
        %p611 = scmp.lt.s32.totalorder %s31, 1
        %s612 = scalar_select %p611, %s31, 1
        %s613 = scalar_lea.vmem %s12, %s612
      $region68: #{vivit_forward.4} parent=19 // pred_fallthru
        _
      // Predicated region
      $region69: #{vivit_forward.4} parent=19 // pred_check
        %p614 = pneg %p393
      $region70: #{vivit_forward.4} parent=19 // pred_check_branch
        %616 = sbr.rel (%p614) target = $region72
      $region71: #{vivit_forward.4} parent=19 // pred_region
        %p617 = scmp.lt.s32.totalorder %s31, 1
        %s618 = scalar_select %p617, %s31, 1
        %s619 = smul.addr %s618, 64
        %s620 = smul.addr %s619, 4
        %s621 = scalar_lea.vmem %s13, %s620
      $region72: #{vivit_forward.4} parent=19 // pred_fallthru
        _
      // Predicated region
      $region73: #{vivit_forward.4} parent=19 // pred_check
        %p622 = pneg %p419
      $region74: #{vivit_forward.4} parent=19 // pred_check_branch
        %624 = sbr.rel (%p622) target = $region76
      $region75: #{vivit_forward.4} parent=19 // pred_region
        %p625 = scmp.lt.s32.totalorder %s31, 1
        %s626 = scalar_select %p625, %s31, 1
        %s627 = smul.addr %s626, 4
        %s628 = scalar_lea.vmem %s14, %s627
      $region76: #{vivit_forward.4} parent=19 // pred_fallthru
        _
      // Predicated region
      $region77: #{vivit_forward.4} parent=19 // pred_check
        %p629 = pneg %p445
      $region78: #{vivit_forward.4} parent=19 // pred_check_branch
        %631 = sbr.rel (%p629) target = $region80
      $region79: #{vivit_forward.4} parent=19 // pred_region
        %p632 = scmp.lt.s32.totalorder %s31, 1
        %s633 = scalar_select %p632, %s31, 1
        %s634 = smul.addr %s633, 64
        %s635 = smul.addr %s634, 4
        %s636 = scalar_lea.vmem %s15, %s635
      $region80: #{vivit_forward.4} parent=19 // pred_fallthru
        _
      // Predicated region
      $region81: #{vivit_forward.4} parent=19 // pred_check
        %p637 = pneg %p471
      $region82: #{vivit_forward.4} parent=19 // pred_check_branch
        %639 = sbr.rel (%p637) target = $region84
      $region83: #{vivit_forward.4} parent=19 // pred_region
        %p640 = scmp.lt.s32.totalorder %s31, 1
        %s641 = scalar_select %p640, %s31, 1
        %s642 = scalar_lea.vmem %s16, %s641
      $region84: #{vivit_forward.4} parent=19 // pred_fallthru
        _
    $region20: #{vivit_forward.4} parent=5 // pred_fallthru
      _
    %p643 = scmp.le.s32.totalorder 1, %s23
    %p644 = scmp.lt.s32.totalorder %s23, 3
    %p645 = pnand %p643, %p644
    %p646 = pneg %p645
    // Predicated region
    $region85: #{vivit_forward.4} parent=5 // pred_check
      _
    $region86: #{vivit_forward.4} parent=5 // pred_check_branch
      %648 = sbr.rel (%p645) target = $region88
    $region87: #{vivit_forward.4} parent=5 // pred_region
      %s649 = ssub.s32 %s23, 1
      %s650 = smul.u32 4, %s32
      %p651 = scmp.lt.s32.totalorder %s650, 3
      %s652 = scalar_select %p651, %s650, 3
      %s653 = smul.addr %s652, 4
      %s654 = scalar_lea.vmem %s0, %s653
      %p655 = pneg %p61
      %p656 = pneg %p58
      %p657 = scmp.lt.s32.totalorder %s33, 1
      %s658 = scalar_select %p657, %s33, 1
      %s659 = scalar_lea.vmem %s1, %s658
      %p660 = pneg %p87
      %p661 = pneg %p84
      %p662 = scmp.lt.s32.totalorder %s33, 1
      %s663 = scalar_select %p662, %s33, 1
      %s664 = scalar_lea.vmem %s2, %s663
      %p665 = pneg %p113
      %p666 = pneg %p110
      %p667 = scmp.lt.s32.totalorder %s33, 1
      %s668 = scalar_select %p667, %s33, 1
      %s669 = smul.addr %s668, 64
      %s670 = smul.addr %s669, 4
      %s671 = scalar_lea.vmem %s3, %s670
      %p672 = pneg %p139
      %p673 = pneg %p136
      %p674 = scmp.lt.s32.totalorder %s33, 1
      %s675 = scalar_select %p674, %s33, 1
      %s676 = smul.addr %s675, 4
      %s677 = scalar_lea.vmem %s4, %s676
      %p678 = pneg %p165
      %p679 = pneg %p162
      %p680 = scmp.lt.s32.totalorder %s33, 1
      %s681 = scalar_select %p680, %s33, 1
      %s682 = smul.addr %s681, 64
      %s683 = smul.addr %s682, 4
      %s684 = scalar_lea.vmem %s5, %s683
      %p685 = pneg %p191
      %p686 = pneg %p188
      %p687 = scmp.lt.s32.totalorder %s33, 1
      %s688 = scalar_select %p687, %s33, 1
      %s689 = smul.addr %s688, 4
      %s690 = scalar_lea.vmem %s6, %s689
      %p691 = pneg %p217
      %p692 = pneg %p214
      %p693 = scmp.lt.s32.totalorder %s33, 1
      %s694 = scalar_select %p693, %s33, 1
      %s695 = smul.addr %s694, 64
      %s696 = smul.addr %s695, 4
      %s697 = scalar_lea.vmem %s7, %s696
      %p698 = pneg %p243
      %p699 = pneg %p240
      %p700 = scmp.lt.s32.totalorder %s33, 1
      %s701 = scalar_select %p700, %s33, 1
      %s702 = smul.addr %s701, 4
      %s703 = scalar_lea.vmem %s8, %s702
      %p704 = pneg %p269
      %p705 = pneg %p266
      %p706 = scmp.lt.s32.totalorder %s33, 1
      %s707 = scalar_select %p706, %s33, 1
      %s708 = smul.addr %s707, 16
      %s709 = smul.addr %s708, 4
      %s710 = scalar_lea.vmem %s9, %s709
      %p711 = pneg %p295
      %p712 = pneg %p292
      %p713 = scmp.lt.s32.totalorder %s33, 1
      %s714 = scalar_select %p713, %s33, 1
      %s715 = scalar_lea.vmem %s10, %s714
      %p716 = pneg %p321
      %p717 = pneg %p318
      %p718 = scmp.lt.s32.totalorder %s33, 1
      %s719 = scalar_select %p718, %s33, 1
      %s720 = scalar_lea.vmem %s11, %s719
      %p721 = pneg %p347
      %p722 = pneg %p344
      %p723 = scmp.lt.s32.totalorder %s33, 1
      %s724 = scalar_select %p723, %s33, 1
      %s725 = scalar_lea.vmem %s12, %s724
      %p726 = pneg %p373
      %p727 = pneg %p370
      %p728 = scmp.lt.s32.totalorder %s33, 1
      %s729 = scalar_select %p728, %s33, 1
      %s730 = smul.addr %s729, 64
      %s731 = smul.addr %s730, 4
      %s732 = scalar_lea.vmem %s13, %s731
      %p733 = pneg %p399
      %p734 = pneg %p396
      %p735 = scmp.lt.s32.totalorder %s33, 1
      %s736 = scalar_select %p735, %s33, 1
      %s737 = smul.addr %s736, 4
      %s738 = scalar_lea.vmem %s14, %s737
      %p739 = pneg %p425
      %p740 = pneg %p422
      %p741 = scmp.lt.s32.totalorder %s33, 1
      %s742 = scalar_select %p741, %s33, 1
      %s743 = smul.addr %s742, 64
      %s744 = smul.addr %s743, 4
      %s745 = scalar_lea.vmem %s15, %s744
      %p746 = pneg %p451
      %p747 = pneg %p448
      %p748 = scmp.lt.s32.totalorder %s33, 1
      %s749 = scalar_select %p748, %s33, 1
      %s750 = scalar_lea.vmem %s16, %s749
      %p751 = pneg %p477
      %p752 = pneg %p474
      %p753 = pneg %p503
      %p754 = pneg %p500
      %s755 = smul.u32 4, %s32
      %p756 = scmp.lt.s32.totalorder %s755, 3
      %s757 = scalar_select %p756, %s755, 3
      %s758 = smul.addr %s757, 4
      %s759 = scalar_lea.vmem %s17, %s758
      %s760 = smul.u32 4, %s32
      %p761 = scmp.lt.s32.totalorder %s760, 3
      %s762 = scalar_select %p761, %s760, 3
      %s763 = smul.addr %s762, 4
      %s764 = scalar_lea.vmem %s0, %s763
      %s765 = smul.u32 4, %s32
      %p766 = scmp.lt.s32.totalorder %s33, 1
      %s767 = scalar_select %p766, %s33, 1
      %s768 = scalar_lea.vmem %s1, %s767
      %p769 = scmp.lt.s32.totalorder %s33, 1
      %s770 = scalar_select %p769, %s33, 1
      %s771 = scalar_lea.vmem %s2, %s770
      %p772 = scmp.lt.s32.totalorder %s33, 1
      %s773 = scalar_select %p772, %s33, 1
      %s774 = smul.addr %s773, 64
      %s775 = smul.addr %s774, 4
      %s776 = scalar_lea.vmem %s3, %s775
      %p777 = scmp.lt.s32.totalorder %s33, 1
      %s778 = scalar_select %p777, %s33, 1
      %s779 = smul.addr %s778, 4
      %s780 = scalar_lea.vmem %s4, %s779
      %p781 = scmp.lt.s32.totalorder %s33, 1
      %s782 = scalar_select %p781, %s33, 1
      %s783 = smul.addr %s782, 64
      %s784 = smul.addr %s783, 4
      %s785 = scalar_lea.vmem %s5, %s784
      %p786 = scmp.lt.s32.totalorder %s33, 1
      %s787 = scalar_select %p786, %s33, 1
      %s788 = smul.addr %s787, 4
      %s789 = scalar_lea.vmem %s6, %s788
      %p790 = scmp.lt.s32.totalorder %s33, 1
      %s791 = scalar_select %p790, %s33, 1
      %s792 = smul.addr %s791, 64
      %s793 = smul.addr %s792, 4
      %s794 = scalar_lea.vmem %s7, %s793
      %p795 = scmp.lt.s32.totalorder %s33, 1
      %s796 = scalar_select %p795, %s33, 1
      %s797 = smul.addr %s796, 4
      %s798 = scalar_lea.vmem %s8, %s797
      %p799 = scmp.lt.s32.totalorder %s33, 1
      %s800 = scalar_select %p799, %s33, 1
      %s801 = smul.addr %s800, 16
      %s802 = smul.addr %s801, 4
      %s803 = scalar_lea.vmem %s9, %s802
      %p804 = scmp.lt.s32.totalorder %s33, 1
      %s805 = scalar_select %p804, %s33, 1
      %s806 = scalar_lea.vmem %s10, %s805
      %p807 = scmp.lt.s32.totalorder %s33, 1
      %s808 = scalar_select %p807, %s33, 1
      %s809 = scalar_lea.vmem %s11, %s808
      %p810 = scmp.lt.s32.totalorder %s33, 1
      %s811 = scalar_select %p810, %s33, 1
      %s812 = scalar_lea.vmem %s12, %s811
      %p813 = scmp.lt.s32.totalorder %s33, 1
      %s814 = scalar_select %p813, %s33, 1
      %s815 = smul.addr %s814, 64
      %s816 = smul.addr %s815, 4
      %s817 = scalar_lea.vmem %s13, %s816
      %p818 = scmp.lt.s32.totalorder %s33, 1
      %s819 = scalar_select %p818, %s33, 1
      %s820 = smul.addr %s819, 4
      %s821 = scalar_lea.vmem %s14, %s820
      %p822 = scmp.lt.s32.totalorder %s33, 1
      %s823 = scalar_select %p822, %s33, 1
      %s824 = smul.addr %s823, 64
      %s825 = smul.addr %s824, 4
      %s826 = scalar_lea.vmem %s15, %s825
      %p827 = scmp.lt.s32.totalorder %s33, 1
      %s828 = scalar_select %p827, %s33, 1
      %s829 = scalar_lea.vmem %s16, %s828
      %s830 = smul.u32 4, %s32
      %p831 = scmp.lt.s32.totalorder %s830, 3
      %s832 = scalar_select %p831, %s830, 3
      %s833 = smul.addr %s832, 4
      %s834 = scalar_lea.vmem %s17, %s833
      %s835 = smul.u32 4, %s32
      %p837 = scmp.eq.s32.totalorder %s33, 0
      // Predicated region
      $region89: #{vivit_forward.4} parent=87 // pred_check
        %p838 = pneg %p837
      $region90: #{vivit_forward.4} parent=87 // pred_check_branch
        %840 = sbr.rel (%p838) target = $region92
      $region91: #{vivit_forward.4} parent=87 // pred_region
        %v841 = vld [vmem:[%s764] sm:$0xf]
        %v842 = vld [vmem:[%s764 + $0x4] sm:$0xf]
        %v843 = vld [vmem:[%s764 + $0x8] sm:$0xf]
        %v844 = vld [vmem:[%s764 + $0xc] sm:$0xf]
        %v845 = vunpack.c.l.bf16 %v841
        %v846 = vunpack.c.l.bf16 %v842
        %v847 = vunpack.c.l.bf16 %v843
        %v848 = vunpack.c.l.bf16 %v844
        %849 = vst [vmem:[#allocation2] sm:$0xff] %v845
        %850 = vst [vmem:[#allocation2 + $0x8] sm:$0xff] %v846
        %851 = vst [vmem:[#allocation2 + $0x10] sm:$0xff] %v847
        %852 = vst [vmem:[#allocation2 + $0x18] sm:$0xff] %v848
      $region92: #{vivit_forward.4} parent=87 // pred_fallthru
        _
      %v853 = vld [vmem:[#allocation2] sm:$0xff]
      %v854 = vld [vmem:[#allocation2 + $0x8] sm:$0xff]
      %v855 = vld [vmem:[#allocation2 + $0x10] sm:$0xff]
      %v856 = vld [vmem:[#allocation2 + $0x18] sm:$0xff]
      %v857 = vld [vmem:[%s768] sm:$0x1]
      %v858 = vld [vmem:[%s771] sm:$0x1]
      %859 = vadd.xlane.f32.xlu0 %v853
      %v860 = vpop.xlane.xlu0 %859
      %861 = vadd.xlane.f32.xlu0 %v854
      %v862 = vpop.xlane.xlu0 %861
      %863 = vadd.xlane.f32.xlu0 %v855
      %v864 = vpop.xlane.xlu0 %863
      %865 = vadd.xlane.f32.xlu0 %v856
      %v866 = vpop.xlane.xlu0 %865
      %v867 = vrcp.pop 128.0
      %v868 = vmul.f32 128.0, %v867
      %v869 = vsub.f32 1.0, %v868
      %v870 = vmul.f32 %v867, %v869
      %v871 = vadd.f32 %v867, %v870
      %vm872 = vweird.f32 %v867
      %v873 = vsel %vm872, %v867, %v871
      %v874 = vmul.f32 %v860, %v873
      %v875 = vmul.f32 %v862, %v873
      %v876 = vmul.f32 %v864, %v873
      %v877 = vmul.f32 %v866, %v873
      %v878 = vsub.f32 %v853, %v874
      %v879 = vsub.f32 %v854, %v875
      %v880 = vsub.f32 %v855, %v876
      %v881 = vsub.f32 %v856, %v877
      %v882 = vmul.f32 %v878, %v878
      %v883 = vmul.f32 %v879, %v879
      %v884 = vmul.f32 %v880, %v880
      %v885 = vmul.f32 %v881, %v881
      %886 = vadd.xlane.f32.xlu0 %v882
      %v887 = vpop.xlane.xlu0 %886
      %888 = vadd.xlane.f32.xlu0 %v883
      %v889 = vpop.xlane.xlu0 %888
      %890 = vadd.xlane.f32.xlu0 %v884
      %v891 = vpop.xlane.xlu0 %890
      %892 = vadd.xlane.f32.xlu0 %v885
      %v893 = vpop.xlane.xlu0 %892
      %v894 = vmul.f32 %v887, %v873
      %v895 = vmul.f32 %v889, %v873
      %v896 = vmul.f32 %v891, %v873
      %v897 = vmul.f32 %v893, %v873
      %v898 = vadd.f32 %v894, 1e-05
      %v899 = vadd.f32 %v895, 1e-05
      %v900 = vadd.f32 %v896, 1e-05
      %v901 = vadd.f32 %v897, 1e-05
      %v902 = vrsqrt.pop %v898
      %v903 = vmul.f32 %v902, %v898
      %v904 = vmul.f32 %v903, %v902
      %v905 = vmul.f32 0.5, %v904
      %v906 = vsub.f32 1.5, %v905
      %v907 = vmul.f32 %v902, %v906
      %vm908 = vweird.f32 %v898
      %vm909 = vweird.f32 %v902
      %vm910 = vmor %vm908, %vm909
      %v911 = vsel %vm910, %v902, %v907
      %v912 = vrsqrt.pop %v899
      %v913 = vmul.f32 %v912, %v899
      %v914 = vmul.f32 %v913, %v912
      %v915 = vmul.f32 0.5, %v914
      %v916 = vsub.f32 1.5, %v915
      %v917 = vmul.f32 %v912, %v916
      %vm918 = vweird.f32 %v899
      %vm919 = vweird.f32 %v912
      %vm920 = vmor %vm918, %vm919
      %v921 = vsel %vm920, %v912, %v917
      %v922 = vrsqrt.pop %v900
      %v923 = vmul.f32 %v922, %v900
      %v924 = vmul.f32 %v923, %v922
      %v925 = vmul.f32 0.5, %v924
      %v926 = vsub.f32 1.5, %v925
      %v927 = vmul.f32 %v922, %v926
      %vm928 = vweird.f32 %v900
      %vm929 = vweird.f32 %v922
      %vm930 = vmor %vm928, %vm929
      %v931 = vsel %vm930, %v922, %v927
      %v932 = vrsqrt.pop %v901
      %v933 = vmul.f32 %v932, %v901
      %v934 = vmul.f32 %v933, %v932
      %v935 = vmul.f32 0.5, %v934
      %v936 = vsub.f32 1.5, %v935
      %v937 = vmul.f32 %v932, %v936
      %vm938 = vweird.f32 %v901
      %vm939 = vweird.f32 %v932
      %vm940 = vmor %vm938, %vm939
      %v941 = vsel %vm940, %v932, %v937
      %v942 = vmul.f32 %v878, %v911
      %v943 = vmul.f32 %v879, %v921
      %v944 = vmul.f32 %v880, %v931
      %v945 = vmul.f32 %v881, %v941
      %v947 = vperm.slane %v857, 0
      %v949 = vmul.f32 %v942, %v947
      %v950 = vmul.f32 %v943, %v947
      %v951 = vmul.f32 %v944, %v947
      %v952 = vmul.f32 %v945, %v947
      %v954 = vperm.slane %v858, 0
      %v956 = vadd.f32 %v949, %v954
      %v957 = vadd.f32 %v950, %v954
      %v958 = vadd.f32 %v951, %v954
      %v959 = vadd.f32 %v952, %v954
      %v960 = vpack.c.bf16 %v957, %v956
      %v961 = vpack.c.bf16 %v959, %v958
      %v962 = vld [vmem:[%s776] sm:$0xf]
      %v963 = vld [vmem:[%s776 + $0x4] sm:$0xf]
      %v964 = vld [vmem:[%s776 + $0x8] sm:$0xf]
      %v965 = vld [vmem:[%s776 + $0xc] sm:$0xf]
      %v966 = vld [vmem:[%s776 + $0x10] sm:$0xf]
      %v967 = vld [vmem:[%s776 + $0x14] sm:$0xf]
      %v968 = vld [vmem:[%s776 + $0x18] sm:$0xf]
      %v969 = vld [vmem:[%s776 + $0x1c] sm:$0xf]
      %v970 = vld [vmem:[%s776 + $0x20] sm:$0xf]
      %v971 = vld [vmem:[%s776 + $0x24] sm:$0xf]
      %v972 = vld [vmem:[%s776 + $0x28] sm:$0xf]
      %v973 = vld [vmem:[%s776 + $0x2c] sm:$0xf]
      %v974 = vld [vmem:[%s776 + $0x30] sm:$0xf]
      %v975 = vld [vmem:[%s776 + $0x34] sm:$0xf]
      %v976 = vld [vmem:[%s776 + $0x38] sm:$0xf]
      %v977 = vld [vmem:[%s776 + $0x3c] sm:$0xf]
      %v978 = vld [vmem:[%s780] sm:$0x1]
      %v980 = vperm.slane %v978, 0
      %v998 = vunpack.c.l.b16 %v962
      %v999 = vunpack.c.l.b16 %v963
      %v1000 = vunpack.c.l.b16 %v964
      %v1001 = vunpack.c.l.b16 %v965
      %v1002 = vunpack.c.l.b16 %v966
      %v1003 = vunpack.c.l.b16 %v967
      %v1004 = vunpack.c.l.b16 %v968
      %v1005 = vunpack.c.l.b16 %v969
      %v1006 = vunpack.c.l.b16 %v970
      %v1007 = vunpack.c.l.b16 %v971
      %v1008 = vunpack.c.l.b16 %v972
      %v1009 = vunpack.c.l.b16 %v973
      %v1010 = vunpack.c.l.b16 %v974
      %v1011 = vunpack.c.l.b16 %v975
      %v1012 = vunpack.c.l.b16 %v976
      %v1013 = vunpack.c.l.b16 %v977
      %v1014 = vpack.c.b16 %v999, %v998
      %v1015 = vpack.c.b16 %v1001, %v1000
      %v1016 = vpack.c.b16 %v1003, %v1002
      %v1017 = vpack.c.b16 %v1005, %v1004
      %v1018 = vpack.c.b16 %v1007, %v1006
      %v1019 = vpack.c.b16 %v1009, %v1008
      %v1020 = vpack.c.b16 %v1011, %v1010
      %v1021 = vpack.c.b16 %v1013, %v1012
      %1030 = vmatpush.bf16.msra.mxu0 %v1021
      %1031 = vmatpush.bf16.msra.mxu0 %v1020
      %1032 = vmatpush.bf16.msra.mxu0 %v1019
      %1033 = vmatpush.bf16.msra.mxu0 %v1018
      %1034 = vmatpush.bf16.msra.mxu0 %v1017
      %1035 = vmatpush.bf16.msra.mxu0 %v1016
      %1036 = vmatpush.bf16.msra.mxu0 %v1015
      %1037 = vmatpush.bf16.msra.mxu0 %v1014
      %1038 = vmatmul.bf16.gmra.mxu0 %v960
      %v1039 = vpop.f32.mrf.mxu0
      %v1040 = vadd.f32 %v980, %v1039
      %v1041 = vpop.f32.mrf.mxu0
      %v1042 = vadd.f32 %v980, %v1041
      %1043 = vmatmul.bf16.gmra.mxu0 %v961
      %v1044 = vpop.f32.mrf.mxu0
      %v1045 = vadd.f32 %v980, %v1044
      %v1046 = vpop.f32.mrf.mxu0
      %v1047 = vadd.f32 %v980, %v1046
      %1048 = vdwg.mxu0
      %v1049 = vld [vmem:[%s785] sm:$0xf]
      %v1050 = vld [vmem:[%s785 + $0x4] sm:$0xf]
      %v1051 = vld [vmem:[%s785 + $0x8] sm:$0xf]
      %v1052 = vld [vmem:[%s785 + $0xc] sm:$0xf]
      %v1053 = vld [vmem:[%s785 + $0x10] sm:$0xf]
      %v1054 = vld [vmem:[%s785 + $0x14] sm:$0xf]
      %v1055 = vld [vmem:[%s785 + $0x18] sm:$0xf]
      %v1056 = vld [vmem:[%s785 + $0x1c] sm:$0xf]
      %v1057 = vld [vmem:[%s785 + $0x20] sm:$0xf]
      %v1058 = vld [vmem:[%s785 + $0x24] sm:$0xf]
      %v1059 = vld [vmem:[%s785 + $0x28] sm:$0xf]
      %v1060 = vld [vmem:[%s785 + $0x2c] sm:$0xf]
      %v1061 = vld [vmem:[%s785 + $0x30] sm:$0xf]
      %v1062 = vld [vmem:[%s785 + $0x34] sm:$0xf]
      %v1063 = vld [vmem:[%s785 + $0x38] sm:$0xf]
      %v1064 = vld [vmem:[%s785 + $0x3c] sm:$0xf]
      %v1065 = vld [vmem:[%s789] sm:$0x1]
      %v1067 = vperm.slane %v1065, 0
      %v1085 = vunpack.c.l.b16 %v1049
      %v1086 = vunpack.c.l.b16 %v1050
      %v1087 = vunpack.c.l.b16 %v1051
      %v1088 = vunpack.c.l.b16 %v1052
      %v1089 = vunpack.c.l.b16 %v1053
      %v1090 = vunpack.c.l.b16 %v1054
      %v1091 = vunpack.c.l.b16 %v1055
      %v1092 = vunpack.c.l.b16 %v1056
      %v1093 = vunpack.c.l.b16 %v1057
      %v1094 = vunpack.c.l.b16 %v1058
      %v1095 = vunpack.c.l.b16 %v1059
      %v1096 = vunpack.c.l.b16 %v1060
      %v1097 = vunpack.c.l.b16 %v1061
      %v1098 = vunpack.c.l.b16 %v1062
      %v1099 = vunpack.c.l.b16 %v1063
      %v1100 = vunpack.c.l.b16 %v1064
      %v1101 = vpack.c.b16 %v1086, %v1085
      %v1102 = vpack.c.b16 %v1088, %v1087
      %v1103 = vpack.c.b16 %v1090, %v1089
      %v1104 = vpack.c.b16 %v1092, %v1091
      %v1105 = vpack.c.b16 %v1094, %v1093
      %v1106 = vpack.c.b16 %v1096, %v1095
      %v1107 = vpack.c.b16 %v1098, %v1097
      %v1108 = vpack.c.b16 %v1100, %v1099
      %1117 = vmatpush.bf16.msra.mxu0 %v1108
      %1118 = vmatpush.bf16.msra.mxu0 %v1107
      %1119 = vmatpush.bf16.msra.mxu0 %v1106
      %1120 = vmatpush.bf16.msra.mxu0 %v1105
      %1121 = vmatpush.bf16.msra.mxu0 %v1104
      %1122 = vmatpush.bf16.msra.mxu0 %v1103
      %1123 = vmatpush.bf16.msra.mxu0 %v1102
      %1124 = vmatpush.bf16.msra.mxu0 %v1101
      %1125 = vmatmul.bf16.gmra.mxu0 %v960
      %v1126 = vpop.f32.mrf.mxu0
      %v1127 = vadd.f32 %v1067, %v1126
      %v1128 = vpop.f32.mrf.mxu0
      %v1129 = vadd.f32 %v1067, %v1128
      %1130 = vmatmul.bf16.gmra.mxu0 %v961
      %v1131 = vpop.f32.mrf.mxu0
      %v1132 = vadd.f32 %v1067, %v1131
      %v1133 = vpop.f32.mrf.mxu0
      %v1134 = vadd.f32 %v1067, %v1133
      %1135 = vdwg.mxu0
      %v1136 = vld [vmem:[%s794] sm:$0xf]
      %v1137 = vld [vmem:[%s794 + $0x4] sm:$0xf]
      %v1138 = vld [vmem:[%s794 + $0x8] sm:$0xf]
      %v1139 = vld [vmem:[%s794 + $0xc] sm:$0xf]
      %v1140 = vld [vmem:[%s794 + $0x10] sm:$0xf]
      %v1141 = vld [vmem:[%s794 + $0x14] sm:$0xf]
      %v1142 = vld [vmem:[%s794 + $0x18] sm:$0xf]
      %v1143 = vld [vmem:[%s794 + $0x1c] sm:$0xf]
      %v1144 = vld [vmem:[%s794 + $0x20] sm:$0xf]
      %v1145 = vld [vmem:[%s794 + $0x24] sm:$0xf]
      %v1146 = vld [vmem:[%s794 + $0x28] sm:$0xf]
      %v1147 = vld [vmem:[%s794 + $0x2c] sm:$0xf]
      %v1148 = vld [vmem:[%s794 + $0x30] sm:$0xf]
      %v1149 = vld [vmem:[%s794 + $0x34] sm:$0xf]
      %v1150 = vld [vmem:[%s794 + $0x38] sm:$0xf]
      %v1151 = vld [vmem:[%s794 + $0x3c] sm:$0xf]
      %v1152 = vld [vmem:[%s798] sm:$0x1]
      %v1154 = vperm.slane %v1152, 0
      %v1172 = vunpack.c.l.b16 %v1136
      %v1173 = vunpack.c.l.b16 %v1137
      %v1174 = vunpack.c.l.b16 %v1138
      %v1175 = vunpack.c.l.b16 %v1139
      %v1176 = vunpack.c.l.b16 %v1140
      %v1177 = vunpack.c.l.b16 %v1141
      %v1178 = vunpack.c.l.b16 %v1142
      %v1179 = vunpack.c.l.b16 %v1143
      %v1180 = vunpack.c.l.b16 %v1144
      %v1181 = vunpack.c.l.b16 %v1145
      %v1182 = vunpack.c.l.b16 %v1146
      %v1183 = vunpack.c.l.b16 %v1147
      %v1184 = vunpack.c.l.b16 %v1148
      %v1185 = vunpack.c.l.b16 %v1149
      %v1186 = vunpack.c.l.b16 %v1150
      %v1187 = vunpack.c.l.b16 %v1151
      %v1188 = vpack.c.b16 %v1173, %v1172
      %v1189 = vpack.c.b16 %v1175, %v1174
      %v1190 = vpack.c.b16 %v1177, %v1176
      %v1191 = vpack.c.b16 %v1179, %v1178
      %v1192 = vpack.c.b16 %v1181, %v1180
      %v1193 = vpack.c.b16 %v1183, %v1182
      %v1194 = vpack.c.b16 %v1185, %v1184
      %v1195 = vpack.c.b16 %v1187, %v1186
      %1204 = vmatpush.bf16.msra.mxu0 %v1195
      %1205 = vmatpush.bf16.msra.mxu0 %v1194
      %1206 = vmatpush.bf16.msra.mxu0 %v1193
      %1207 = vmatpush.bf16.msra.mxu0 %v1192
      %1208 = vmatpush.bf16.msra.mxu0 %v1191
      %1209 = vmatpush.bf16.msra.mxu0 %v1190
      %1210 = vmatpush.bf16.msra.mxu0 %v1189
      %1211 = vmatpush.bf16.msra.mxu0 %v1188
      %1212 = vmatmul.bf16.gmra.mxu0 %v960
      %v1213 = vpop.f32.mrf.mxu0
      %v1214 = vadd.f32 %v1154, %v1213
      %v1215 = vpop.f32.mrf.mxu0
      %v1216 = vadd.f32 %v1154, %v1215
      %1217 = vmatmul.bf16.gmra.mxu0 %v961
      %v1218 = vpop.f32.mrf.mxu0
      %v1219 = vadd.f32 %v1154, %v1218
      %v1220 = vpop.f32.mrf.mxu0
      %v1221 = vadd.f32 %v1154, %v1220
      %1222 = vdwg.mxu0
      %v1223 = vpack.c.bf16 %v1040, %v1040
      %v1224 = vpack.c.bf16 %v1042, %v1042
      %v1225 = vpack.c.bf16 %v1045, %v1045
      %v1226 = vpack.c.bf16 %v1047, %v1047
      %v1227 = vpack.c.bf16 %v1127, %v1127
      %v1228 = vpack.c.bf16 %v1129, %v1129
      %v1229 = vpack.c.bf16 %v1132, %v1132
      %v1230 = vpack.c.bf16 %v1134, %v1134
      %v1231 = vpack.c.bf16 %v1214, %v1214
      %v1232 = vpack.c.bf16 %v1216, %v1216
      %v1233 = vpack.c.bf16 %v1219, %v1219
      %v1234 = vpack.c.bf16 %v1221, %v1221
      %v1237 = vunpack.c.l.b16 %v1223
      %v1238 = vunpack.c.l.b16 %v1224
      %v1239 = vpack.c.b16 %v1238, %v1237
      %v1242 = vunpack.c.l.b16 %v1227
      %v1243 = vunpack.c.l.b16 %v1228
      %v1244 = vpack.c.b16 %v1243, %v1242
      %vm1245 = vcmask 261120
      %v1247 = vsel %vm1245, %v1239, 0
      %v1250 = vsel %vm1245, %v1244, 0
      %1252 = vmatpush.bf16.xpose.msra.mxu0 0
      %1253 = vmatpush.bf16.xpose.msra.mxu0 0
      %1254 = vmatpush.bf16.xpose.msra.mxu0 0
      %1255 = vmatpush.bf16.xpose.msra.mxu0 0
      %1256 = vmatpush.bf16.xpose.msra.mxu0 0
      %1257 = vmatpush.bf16.xpose.msra.mxu0 0
      %1258 = vmatpush.bf16.xpose.msra.mxu0 0
      %1259 = vmatpush.bf16.xpose.msra.mxu0 %v1250
      %1260 = vmatmul.bf16.gmra.mxu0 %v1247
      %v1261 = vpop.f32.mrf.mxu0
      %v1262 = vadd.f32 0.0, %v1261
      %v1263 = vpop.f32.mrf.mxu0
      %v1264 = vadd.f32 0.0, %v1263
      %1265 = vdwg.mxu0
      %v1268 = vunpack.c.l.b16 %v1225
      %v1269 = vunpack.c.l.b16 %v1226
      %v1270 = vpack.c.b16 %v1269, %v1268
      %v1273 = vunpack.c.l.b16 %v1229
      %v1274 = vunpack.c.l.b16 %v1230
      %v1275 = vpack.c.b16 %v1274, %v1273
      %v1277 = vsel %vm1245, %v1270, 0
      %v1280 = vsel %vm1245, %v1275, 0
      %1282 = vmatpush.bf16.xpose.msra.mxu0 0
      %1283 = vmatpush.bf16.xpose.msra.mxu0 0
      %1284 = vmatpush.bf16.xpose.msra.mxu0 0
      %1285 = vmatpush.bf16.xpose.msra.mxu0 0
      %1286 = vmatpush.bf16.xpose.msra.mxu0 0
      %1287 = vmatpush.bf16.xpose.msra.mxu0 0
      %1288 = vmatpush.bf16.xpose.msra.mxu0 0
      %1289 = vmatpush.bf16.xpose.msra.mxu0 %v1280
      %1290 = vmatmul.bf16.gmra.mxu0 %v1277
      %v1291 = vpop.f32.mrf.mxu0
      %v1292 = vadd.f32 0.0, %v1291
      %v1293 = vpop.f32.mrf.mxu0
      %v1294 = vadd.f32 0.0, %v1293
      %1295 = vdwg.mxu0
      %vm1296 = vcmask 130048
      %v1297 = vsel %vm1296, %v1262, -inf
      %1298 = vmax.xlane.f32.xlu0 %v1297
      %v1299 = vpop.xlane.xlu0 %1298
      %v1300 = vsel %vm1296, %v1264, -inf
      %1301 = vmax.xlane.f32.xlu0 %v1300
      %v1302 = vpop.xlane.xlu0 %1301
      %v1303 = vsel %vm1296, %v1292, -inf
      %1304 = vmax.xlane.f32.xlu0 %v1303
      %v1305 = vpop.xlane.xlu0 %1304
      %v1306 = vsel %vm1296, %v1294, -inf
      %1307 = vmax.xlane.f32.xlu0 %v1306
      %v1308 = vpop.xlane.xlu0 %1307
      %v1309 = vsub.f32 %v1262, %v1299
      %v1310 = vsub.f32 %v1264, %v1302
      %v1311 = vsub.f32 %v1292, %v1305
      %v1312 = vsub.f32 %v1294, %v1308
      %v1313 = vmul.f32 %v1309, 1.442695
      %v1314 = vpow.pop %v1313
      %v1315 = vmul.f32 %v1310, 1.442695
      %v1316 = vpow.pop %v1315
      %v1317 = vmul.f32 %v1311, 1.442695
      %v1318 = vpow.pop %v1317
      %v1319 = vmul.f32 %v1312, 1.442695
      %v1320 = vpow.pop %v1319
      %v1321 = vsel %vm1296, %v1314, 0.0
      %1322 = vadd.xlane.f32.xlu0 %v1321
      %v1323 = vpop.xlane.xlu0 %1322
      %v1324 = vsel %vm1296, %v1316, 0.0
      %1325 = vadd.xlane.f32.xlu0 %v1324
      %v1326 = vpop.xlane.xlu0 %1325
      %v1327 = vsel %vm1296, %v1318, 0.0
      %1328 = vadd.xlane.f32.xlu0 %v1327
      %v1329 = vpop.xlane.xlu0 %1328
      %v1330 = vsel %vm1296, %v1320, 0.0
      %1331 = vadd.xlane.f32.xlu0 %v1330
      %v1332 = vpop.xlane.xlu0 %1331
      %v1333 = vrcp.pop %v1323
      %v1334 = vrcp.pop %v1326
      %v1335 = vrcp.pop %v1329
      %v1336 = vrcp.pop %v1332
      %v1337 = vmul.f32 %v1314, %v1333
      %v1338 = vmul.f32 %v1316, %v1334
      %v1339 = vmul.f32 %v1318, %v1335
      %v1340 = vmul.f32 %v1320, %v1336
      %v1341 = vpack.c.bf16 %v1337, %v1337
      %v1342 = vpack.c.bf16 %v1338, %v1338
      %v1343 = vpack.c.bf16 %v1339, %v1339
      %v1344 = vpack.c.bf16 %v1340, %v1340
      %v1347 = vunpack.c.l.b16 %v1341
      %v1348 = vunpack.c.l.b16 %v1342
      %v1349 = vpack.c.b16 %v1348, %v1347
      %v1352 = vunpack.c.l.b16 %v1231
      %v1353 = vunpack.c.l.b16 %v1232
      %v1354 = vpack.c.b16 %v1353, %v1352
      %v1357 = vsel %vm1296, %v1349, 0
      %1359 = vmatpush.bf16.msra.mxu0 0
      %1360 = vmatpush.bf16.msra.mxu0 0
      %1361 = vmatpush.bf16.msra.mxu0 0
      %1362 = vmatpush.bf16.msra.mxu0 0
      %1363 = vmatpush.bf16.msra.mxu0 0
      %1364 = vmatpush.bf16.msra.mxu0 0
      %1365 = vmatpush.bf16.msra.mxu0 0
      %1366 = vmatpush.bf16.msra.mxu0 %v1354
      %1367 = vmatmul.bf16.gmra.mxu0 %v1357
      %v1368 = vpop.f32.mrf.mxu0
      %v1369 = vadd.f32 0.0, %v1368
      %v1370 = vpop.f32.mrf.mxu0
      %v1371 = vadd.f32 0.0, %v1370
      %1372 = vdwg.mxu0
      %v1375 = vunpack.c.l.b16 %v1343
      %v1376 = vunpack.c.l.b16 %v1344
      %v1377 = vpack.c.b16 %v1376, %v1375
      %v1380 = vunpack.c.l.b16 %v1233
      %v1381 = vunpack.c.l.b16 %v1234
      %v1382 = vpack.c.b16 %v1381, %v1380
      %v1385 = vsel %vm1296, %v1377, 0
      %1387 = vmatpush.bf16.msra.mxu0 0
      %1388 = vmatpush.bf16.msra.mxu0 0
      %1389 = vmatpush.bf16.msra.mxu0 0
      %1390 = vmatpush.bf16.msra.mxu0 0
      %1391 = vmatpush.bf16.msra.mxu0 0
      %1392 = vmatpush.bf16.msra.mxu0 0
      %1393 = vmatpush.bf16.msra.mxu0 0
      %1394 = vmatpush.bf16.msra.mxu0 %v1382
      %1395 = vmatmul.bf16.gmra.mxu0 %v1385
      %v1396 = vpop.f32.mrf.mxu0
      %v1397 = vadd.f32 0.0, %v1396
      %v1398 = vpop.f32.mrf.mxu0
      %v1399 = vadd.f32 0.0, %v1398
      %1400 = vdwg.mxu0
      %v1401 = vpack.c.bf16 %v1371, %v1369
      %v1402 = vpack.c.bf16 %v1399, %v1397
      %v1403 = vld [vmem:[%s803] sm:$0xf]
      %v1404 = vld [vmem:[%s803 + $0x4] sm:$0xf]
      %v1405 = vld [vmem:[%s803 + $0x8] sm:$0xf]
      %v1406 = vld [vmem:[%s803 + $0xc] sm:$0xf]
      %s1407 = scalar_lea.vmem %s776, 64
      %v1408 = vld [vmem:[%s1407] sm:$0xf]
      %v1409 = vld [vmem:[%s1407 + $0x4] sm:$0xf]
      %v1410 = vld [vmem:[%s1407 + $0x8] sm:$0xf]
      %v1411 = vld [vmem:[%s1407 + $0xc] sm:$0xf]
      %v1412 = vld [vmem:[%s1407 + $0x10] sm:$0xf]
      %v1413 = vld [vmem:[%s1407 + $0x14] sm:$0xf]
      %v1414 = vld [vmem:[%s1407 + $0x18] sm:$0xf]
      %v1415 = vld [vmem:[%s1407 + $0x1c] sm:$0xf]
      %v1416 = vld [vmem:[%s1407 + $0x20] sm:$0xf]
      %v1417 = vld [vmem:[%s1407 + $0x24] sm:$0xf]
      %v1418 = vld [vmem:[%s1407 + $0x28] sm:$0xf]
      %v1419 = vld [vmem:[%s1407 + $0x2c] sm:$0xf]
      %v1420 = vld [vmem:[%s1407 + $0x30] sm:$0xf]
      %v1421 = vld [vmem:[%s1407 + $0x34] sm:$0xf]
      %v1422 = vld [vmem:[%s1407 + $0x38] sm:$0xf]
      %v1423 = vld [vmem:[%s1407 + $0x3c] sm:$0xf]
      %s1424 = scalar_lea.vmem %s780, 1
      %v1425 = vld [vmem:[%s1424] sm:$0x1]
      %v1427 = vperm.slane %v1425, 0
      %v1445 = vunpack.c.l.b16 %v1408
      %v1446 = vunpack.c.l.b16 %v1409
      %v1447 = vunpack.c.l.b16 %v1410
      %v1448 = vunpack.c.l.b16 %v1411
      %v1449 = vunpack.c.l.b16 %v1412
      %v1450 = vunpack.c.l.b16 %v1413
      %v1451 = vunpack.c.l.b16 %v1414
      %v1452 = vunpack.c.l.b16 %v1415
      %v1453 = vunpack.c.l.b16 %v1416
      %v1454 = vunpack.c.l.b16 %v1417
      %v1455 = vunpack.c.l.b16 %v1418
      %v1456 = vunpack.c.l.b16 %v1419
      %v1457 = vunpack.c.l.b16 %v1420
      %v1458 = vunpack.c.l.b16 %v1421
      %v1459 = vunpack.c.l.b16 %v1422
      %v1460 = vunpack.c.l.b16 %v1423
      %v1461 = vpack.c.b16 %v1446, %v1445
      %v1462 = vpack.c.b16 %v1448, %v1447
      %v1463 = vpack.c.b16 %v1450, %v1449
      %v1464 = vpack.c.b16 %v1452, %v1451
      %v1465 = vpack.c.b16 %v1454, %v1453
      %v1466 = vpack.c.b16 %v1456, %v1455
      %v1467 = vpack.c.b16 %v1458, %v1457
      %v1468 = vpack.c.b16 %v1460, %v1459
      %1477 = vmatpush.bf16.msra.mxu0 %v1468
      %1478 = vmatpush.bf16.msra.mxu0 %v1467
      %1479 = vmatpush.bf16.msra.mxu0 %v1466
      %1480 = vmatpush.bf16.msra.mxu0 %v1465
      %1481 = vmatpush.bf16.msra.mxu0 %v1464
      %1482 = vmatpush.bf16.msra.mxu0 %v1463
      %1483 = vmatpush.bf16.msra.mxu0 %v1462
      %1484 = vmatpush.bf16.msra.mxu0 %v1461
      %1485 = vmatmul.bf16.gmra.mxu0 %v960
      %v1486 = vpop.f32.mrf.mxu0
      %v1487 = vadd.f32 %v1427, %v1486
      %v1488 = vpop.f32.mrf.mxu0
      %v1489 = vadd.f32 %v1427, %v1488
      %1490 = vmatmul.bf16.gmra.mxu0 %v961
      %v1491 = vpop.f32.mrf.mxu0
      %v1492 = vadd.f32 %v1427, %v1491
      %v1493 = vpop.f32.mrf.mxu0
      %v1494 = vadd.f32 %v1427, %v1493
      %1495 = vdwg.mxu0
      %s1496 = scalar_lea.vmem %s785, 64
      %v1497 = vld [vmem:[%s1496] sm:$0xf]
      %v1498 = vld [vmem:[%s1496 + $0x4] sm:$0xf]
      %v1499 = vld [vmem:[%s1496 + $0x8] sm:$0xf]
      %v1500 = vld [vmem:[%s1496 + $0xc] sm:$0xf]
      %v1501 = vld [vmem:[%s1496 + $0x10] sm:$0xf]
      %v1502 = vld [vmem:[%s1496 + $0x14] sm:$0xf]
      %v1503 = vld [vmem:[%s1496 + $0x18] sm:$0xf]
      %v1504 = vld [vmem:[%s1496 + $0x1c] sm:$0xf]
      %v1505 = vld [vmem:[%s1496 + $0x20] sm:$0xf]
      %v1506 = vld [vmem:[%s1496 + $0x24] sm:$0xf]
      %v1507 = vld [vmem:[%s1496 + $0x28] sm:$0xf]
      %v1508 = vld [vmem:[%s1496 + $0x2c] sm:$0xf]
      %v1509 = vld [vmem:[%s1496 + $0x30] sm:$0xf]
      %v1510 = vld [vmem:[%s1496 + $0x34] sm:$0xf]
      %v1511 = vld [vmem:[%s1496 + $0x38] sm:$0xf]
      %v1512 = vld [vmem:[%s1496 + $0x3c] sm:$0xf]
      %s1513 = scalar_lea.vmem %s789, 1
      %v1514 = vld [vmem:[%s1513] sm:$0x1]
      %v1516 = vperm.slane %v1514, 0
      %v1534 = vunpack.c.l.b16 %v1497
      %v1535 = vunpack.c.l.b16 %v1498
      %v1536 = vunpack.c.l.b16 %v1499
      %v1537 = vunpack.c.l.b16 %v1500
      %v1538 = vunpack.c.l.b16 %v1501
      %v1539 = vunpack.c.l.b16 %v1502
      %v1540 = vunpack.c.l.b16 %v1503
      %v1541 = vunpack.c.l.b16 %v1504
      %v1542 = vunpack.c.l.b16 %v1505
      %v1543 = vunpack.c.l.b16 %v1506
      %v1544 = vunpack.c.l.b16 %v1507
      %v1545 = vunpack.c.l.b16 %v1508
      %v1546 = vunpack.c.l.b16 %v1509
      %v1547 = vunpack.c.l.b16 %v1510
      %v1548 = vunpack.c.l.b16 %v1511
      %v1549 = vunpack.c.l.b16 %v1512
      %v1550 = vpack.c.b16 %v1535, %v1534
      %v1551 = vpack.c.b16 %v1537, %v1536
      %v1552 = vpack.c.b16 %v1539, %v1538
      %v1553 = vpack.c.b16 %v1541, %v1540
      %v1554 = vpack.c.b16 %v1543, %v1542
      %v1555 = vpack.c.b16 %v1545, %v1544
      %v1556 = vpack.c.b16 %v1547, %v1546
      %v1557 = vpack.c.b16 %v1549, %v1548
      %1566 = vmatpush.bf16.msra.mxu0 %v1557
      %1567 = vmatpush.bf16.msra.mxu0 %v1556
      %1568 = vmatpush.bf16.msra.mxu0 %v1555
      %1569 = vmatpush.bf16.msra.mxu0 %v1554
      %1570 = vmatpush.bf16.msra.mxu0 %v1553
      %1571 = vmatpush.bf16.msra.mxu0 %v1552
      %1572 = vmatpush.bf16.msra.mxu0 %v1551
      %1573 = vmatpush.bf16.msra.mxu0 %v1550
      %1574 = vmatmul.bf16.gmra.mxu0 %v960
      %v1575 = vpop.f32.mrf.mxu0
      %v1576 = vadd.f32 %v1516, %v1575
      %v1577 = vpop.f32.mrf.mxu0
      %v1578 = vadd.f32 %v1516, %v1577
      %1579 = vmatmul.bf16.gmra.mxu0 %v961
      %v1580 = vpop.f32.mrf.mxu0
      %v1581 = vadd.f32 %v1516, %v1580
      %v1582 = vpop.f32.mrf.mxu0
      %v1583 = vadd.f32 %v1516, %v1582
      %1584 = vdwg.mxu0
      %s1585 = scalar_lea.vmem %s794, 64
      %v1586 = vld [vmem:[%s1585] sm:$0xf]
      %v1587 = vld [vmem:[%s1585 + $0x4] sm:$0xf]
      %v1588 = vld [vmem:[%s1585 + $0x8] sm:$0xf]
      %v1589 = vld [vmem:[%s1585 + $0xc] sm:$0xf]
      %v1590 = vld [vmem:[%s1585 + $0x10] sm:$0xf]
      %v1591 = vld [vmem:[%s1585 + $0x14] sm:$0xf]
      %v1592 = vld [vmem:[%s1585 + $0x18] sm:$0xf]
      %v1593 = vld [vmem:[%s1585 + $0x1c] sm:$0xf]
      %v1594 = vld [vmem:[%s1585 + $0x20] sm:$0xf]
      %v1595 = vld [vmem:[%s1585 + $0x24] sm:$0xf]
      %v1596 = vld [vmem:[%s1585 + $0x28] sm:$0xf]
      %v1597 = vld [vmem:[%s1585 + $0x2c] sm:$0xf]
      %v1598 = vld [vmem:[%s1585 + $0x30] sm:$0xf]
      %v1599 = vld [vmem:[%s1585 + $0x34] sm:$0xf]
      %v1600 = vld [vmem:[%s1585 + $0x38] sm:$0xf]
      %v1601 = vld [vmem:[%s1585 + $0x3c] sm:$0xf]
      %s1602 = scalar_lea.vmem %s798, 1
      %v1603 = vld [vmem:[%s1602] sm:$0x1]
      %v1605 = vperm.slane %v1603, 0
      %v1623 = vunpack.c.l.b16 %v1586
      %v1624 = vunpack.c.l.b16 %v1587
      %v1625 = vunpack.c.l.b16 %v1588
      %v1626 = vunpack.c.l.b16 %v1589
      %v1627 = vunpack.c.l.b16 %v1590
      %v1628 = vunpack.c.l.b16 %v1591
      %v1629 = vunpack.c.l.b16 %v1592
      %v1630 = vunpack.c.l.b16 %v1593
      %v1631 = vunpack.c.l.b16 %v1594
      %v1632 = vunpack.c.l.b16 %v1595
      %v1633 = vunpack.c.l.b16 %v1596
      %v1634 = vunpack.c.l.b16 %v1597
      %v1635 = vunpack.c.l.b16 %v1598
      %v1636 = vunpack.c.l.b16 %v1599
      %v1637 = vunpack.c.l.b16 %v1600
      %v1638 = vunpack.c.l.b16 %v1601
      %v1639 = vpack.c.b16 %v1624, %v1623
      %v1640 = vpack.c.b16 %v1626, %v1625
      %v1641 = vpack.c.b16 %v1628, %v1627
      %v1642 = vpack.c.b16 %v1630, %v1629
      %v1643 = vpack.c.b16 %v1632, %v1631
      %v1644 = vpack.c.b16 %v1634, %v1633
      %v1645 = vpack.c.b16 %v1636, %v1635
      %v1646 = vpack.c.b16 %v1638, %v1637
      %1655 = vmatpush.bf16.msra.mxu0 %v1646
      %1656 = vmatpush.bf16.msra.mxu0 %v1645
      %1657 = vmatpush.bf16.msra.mxu0 %v1644
      %1658 = vmatpush.bf16.msra.mxu0 %v1643
      %1659 = vmatpush.bf16.msra.mxu0 %v1642
      %1660 = vmatpush.bf16.msra.mxu0 %v1641
      %1661 = vmatpush.bf16.msra.mxu0 %v1640
      %1662 = vmatpush.bf16.msra.mxu0 %v1639
      %1663 = vmatmul.bf16.gmra.mxu0 %v960
      %v1664 = vpop.f32.mrf.mxu0
      %v1665 = vadd.f32 %v1605, %v1664
      %v1666 = vpop.f32.mrf.mxu0
      %v1667 = vadd.f32 %v1605, %v1666
      %1668 = vmatmul.bf16.gmra.mxu0 %v961
      %v1669 = vpop.f32.mrf.mxu0
      %v1670 = vadd.f32 %v1605, %v1669
      %v1671 = vpop.f32.mrf.mxu0
      %v1672 = vadd.f32 %v1605, %v1671
      %1673 = vdwg.mxu0
      %v1674 = vpack.c.bf16 %v1487, %v1487
      %v1675 = vpack.c.bf16 %v1489, %v1489
      %v1676 = vpack.c.bf16 %v1492, %v1492
      %v1677 = vpack.c.bf16 %v1494, %v1494
      %v1678 = vpack.c.bf16 %v1576, %v1576
      %v1679 = vpack.c.bf16 %v1578, %v1578
      %v1680 = vpack.c.bf16 %v1581, %v1581
      %v1681 = vpack.c.bf16 %v1583, %v1583
      %v1682 = vpack.c.bf16 %v1665, %v1665
      %v1683 = vpack.c.bf16 %v1667, %v1667
      %v1684 = vpack.c.bf16 %v1670, %v1670
      %v1685 = vpack.c.bf16 %v1672, %v1672
      %v1688 = vunpack.c.l.b16 %v1674
      %v1689 = vunpack.c.l.b16 %v1675
      %v1690 = vpack.c.b16 %v1689, %v1688
      %v1693 = vunpack.c.l.b16 %v1678
      %v1694 = vunpack.c.l.b16 %v1679
      %v1695 = vpack.c.b16 %v1694, %v1693
      %v1697 = vsel %vm1245, %v1690, 0
      %v1700 = vsel %vm1245, %v1695, 0
      %1702 = vmatpush.bf16.xpose.msra.mxu0 0
      %1703 = vmatpush.bf16.xpose.msra.mxu0 0
      %1704 = vmatpush.bf16.xpose.msra.mxu0 0
      %1705 = vmatpush.bf16.xpose.msra.mxu0 0
      %1706 = vmatpush.bf16.xpose.msra.mxu0 0
      %1707 = vmatpush.bf16.xpose.msra.mxu0 0
      %1708 = vmatpush.bf16.xpose.msra.mxu0 0
      %1709 = vmatpush.bf16.xpose.msra.mxu0 %v1700
      %1710 = vmatmul.bf16.gmra.mxu0 %v1697
      %v1711 = vpop.f32.mrf.mxu0
      %v1712 = vadd.f32 0.0, %v1711
      %v1713 = vpop.f32.mrf.mxu0
      %v1714 = vadd.f32 0.0, %v1713
      %1715 = vdwg.mxu0
      %v1718 = vunpack.c.l.b16 %v1676
      %v1719 = vunpack.c.l.b16 %v1677
      %v1720 = vpack.c.b16 %v1719, %v1718
      %v1723 = vunpack.c.l.b16 %v1680
      %v1724 = vunpack.c.l.b16 %v1681
      %v1725 = vpack.c.b16 %v1724, %v1723
      %v1727 = vsel %vm1245, %v1720, 0
      %v1730 = vsel %vm1245, %v1725, 0
      %1732 = vmatpush.bf16.xpose.msra.mxu0 0
      %1733 = vmatpush.bf16.xpose.msra.mxu0 0
      %1734 = vmatpush.bf16.xpose.msra.mxu0 0
      %1735 = vmatpush.bf16.xpose.msra.mxu0 0
      %1736 = vmatpush.bf16.xpose.msra.mxu0 0
      %1737 = vmatpush.bf16.xpose.msra.mxu0 0
      %1738 = vmatpush.bf16.xpose.msra.mxu0 0
      %1739 = vmatpush.bf16.xpose.msra.mxu0 %v1730
      %1740 = vmatmul.bf16.gmra.mxu0 %v1727
      %v1741 = vpop.f32.mrf.mxu0
      %v1742 = vadd.f32 0.0, %v1741
      %v1743 = vpop.f32.mrf.mxu0
      %v1744 = vadd.f32 0.0, %v1743
      %1745 = vdwg.mxu0
      %v1746 = vsel %vm1296, %v1712, -inf
      %1747 = vmax.xlane.f32.xlu0 %v1746
      %v1748 = vpop.xlane.xlu0 %1747
      %v1749 = vsel %vm1296, %v1714, -inf
      %1750 = vmax.xlane.f32.xlu0 %v1749
      %v1751 = vpop.xlane.xlu0 %1750
      %v1752 = vsel %vm1296, %v1742, -inf
      %1753 = vmax.xlane.f32.xlu0 %v1752
      %v1754 = vpop.xlane.xlu0 %1753
      %v1755 = vsel %vm1296, %v1744, -inf
      %1756 = vmax.xlane.f32.xlu0 %v1755
      %v1757 = vpop.xlane.xlu0 %1756
      %v1758 = vsub.f32 %v1712, %v1748
      %v1759 = vsub.f32 %v1714, %v1751
      %v1760 = vsub.f32 %v1742, %v1754
      %v1761 = vsub.f32 %v1744, %v1757
      %v1762 = vmul.f32 %v1758, 1.442695
      %v1763 = vpow.pop %v1762
      %v1764 = vmul.f32 %v1759, 1.442695
      %v1765 = vpow.pop %v1764
      %v1766 = vmul.f32 %v1760, 1.442695
      %v1767 = vpow.pop %v1766
      %v1768 = vmul.f32 %v1761, 1.442695
      %v1769 = vpow.pop %v1768
      %v1770 = vsel %vm1296, %v1763, 0.0
      %1771 = vadd.xlane.f32.xlu0 %v1770
      %v1772 = vpop.xlane.xlu0 %1771
      %v1773 = vsel %vm1296, %v1765, 0.0
      %1774 = vadd.xlane.f32.xlu0 %v1773
      %v1775 = vpop.xlane.xlu0 %1774
      %v1776 = vsel %vm1296, %v1767, 0.0
      %1777 = vadd.xlane.f32.xlu0 %v1776
      %v1778 = vpop.xlane.xlu0 %1777
      %v1779 = vsel %vm1296, %v1769, 0.0
      %1780 = vadd.xlane.f32.xlu0 %v1779
      %v1781 = vpop.xlane.xlu0 %1780
      %v1782 = vrcp.pop %v1772
      %v1783 = vrcp.pop %v1775
      %v1784 = vrcp.pop %v1778
      %v1785 = vrcp.pop %v1781
      %v1786 = vmul.f32 %v1763, %v1782
      %v1787 = vmul.f32 %v1765, %v1783
      %v1788 = vmul.f32 %v1767, %v1784
      %v1789 = vmul.f32 %v1769, %v1785
      %v1790 = vpack.c.bf16 %v1786, %v1786
      %v1791 = vpack.c.bf16 %v1787, %v1787
      %v1792 = vpack.c.bf16 %v1788, %v1788
      %v1793 = vpack.c.bf16 %v1789, %v1789
      %v1796 = vunpack.c.l.b16 %v1790
      %v1797 = vunpack.c.l.b16 %v1791
      %v1798 = vpack.c.b16 %v1797, %v1796
      %v1801 = vunpack.c.l.b16 %v1682
      %v1802 = vunpack.c.l.b16 %v1683
      %v1803 = vpack.c.b16 %v1802, %v1801
      %v1806 = vsel %vm1296, %v1798, 0
      %1808 = vmatpush.bf16.msra.mxu0 0
      %1809 = vmatpush.bf16.msra.mxu0 0
      %1810 = vmatpush.bf16.msra.mxu0 0
      %1811 = vmatpush.bf16.msra.mxu0 0
      %1812 = vmatpush.bf16.msra.mxu0 0
      %1813 = vmatpush.bf16.msra.mxu0 0
      %1814 = vmatpush.bf16.msra.mxu0 0
      %1815 = vmatpush.bf16.msra.mxu0 %v1803
      %1816 = vmatmul.bf16.gmra.mxu0 %v1806
      %v1817 = vpop.f32.mrf.mxu0
      %v1818 = vadd.f32 0.0, %v1817
      %v1819 = vpop.f32.mrf.mxu0
      %v1820 = vadd.f32 0.0, %v1819
      %1821 = vdwg.mxu0
      %v1824 = vunpack.c.l.b16 %v1792
      %v1825 = vunpack.c.l.b16 %v1793
      %v1826 = vpack.c.b16 %v1825, %v1824
      %v1829 = vunpack.c.l.b16 %v1684
      %v1830 = vunpack.c.l.b16 %v1685
      %v1831 = vpack.c.b16 %v1830, %v1829
      %v1834 = vsel %vm1296, %v1826, 0
      %1836 = vmatpush.bf16.msra.mxu0 0
      %1837 = vmatpush.bf16.msra.mxu0 0
      %1838 = vmatpush.bf16.msra.mxu0 0
      %1839 = vmatpush.bf16.msra.mxu0 0
      %1840 = vmatpush.bf16.msra.mxu0 0
      %1841 = vmatpush.bf16.msra.mxu0 0
      %1842 = vmatpush.bf16.msra.mxu0 0
      %1843 = vmatpush.bf16.msra.mxu0 %v1831
      %1844 = vmatmul.bf16.gmra.mxu0 %v1834
      %v1845 = vpop.f32.mrf.mxu0
      %v1846 = vadd.f32 0.0, %v1845
      %v1847 = vpop.f32.mrf.mxu0
      %v1848 = vadd.f32 0.0, %v1847
      %1849 = vdwg.mxu0
      %v1850 = vpack.c.bf16 %v1820, %v1818
      %v1851 = vpack.c.bf16 %v1848, %v1846
      %s1852 = scalar_lea.vmem %s803, 16
      %v1853 = vld [vmem:[%s1852] sm:$0xf]
      %v1854 = vld [vmem:[%s1852 + $0x4] sm:$0xf]
      %v1855 = vld [vmem:[%s1852 + $0x8] sm:$0xf]
      %v1856 = vld [vmem:[%s1852 + $0xc] sm:$0xf]
      %v1861 = vunpack.c.l.b16 %v1853
      %v1862 = vunpack.c.l.b16 %v1854
      %v1863 = vunpack.c.l.b16 %v1855
      %v1864 = vunpack.c.l.b16 %v1856
      %v1865 = vpack.c.b16 %v1862, %v1861
      %v1866 = vpack.c.b16 %v1864, %v1863
      %v1870 = vsel %vm1245, %v1850, 0
      %v1873 = vsel %vm1245, %v1851, 0
      %1875 = vmatpush.bf16.msra.mxu0 0
      %1876 = vmatpush.bf16.msra.mxu0 0
      %1877 = vmatpush.bf16.msra.mxu0 0
      %1878 = vmatpush.bf16.msra.mxu0 0
      %1879 = vmatpush.bf16.msra.mxu0 0
      %1880 = vmatpush.bf16.msra.mxu0 0
      %1881 = vmatpush.bf16.msra.mxu0 %v1866
      %1882 = vmatpush.bf16.msra.mxu0 %v1865
      %1883 = vmatmul.bf16.gmra.mxu0 %v1870
      %v1884 = vpop.f32.mrf.mxu0
      %v1885 = vadd.f32 0.0, %v1884
      %v1886 = vpop.f32.mrf.mxu0
      %v1887 = vadd.f32 0.0, %v1886
      %1888 = vmatmul.bf16.gmra.mxu0 %v1873
      %v1889 = vpop.f32.mrf.mxu0
      %v1890 = vadd.f32 0.0, %v1889
      %v1891 = vpop.f32.mrf.mxu0
      %v1892 = vadd.f32 0.0, %v1891
      %1893 = vdwg.mxu0
      %v1898 = vunpack.c.l.b16 %v1403
      %v1899 = vunpack.c.l.b16 %v1404
      %v1900 = vunpack.c.l.b16 %v1405
      %v1901 = vunpack.c.l.b16 %v1406
      %v1902 = vpack.c.b16 %v1899, %v1898
      %v1903 = vpack.c.b16 %v1901, %v1900
      %v1907 = vsel %vm1245, %v1401, 0
      %v1910 = vsel %vm1245, %v1402, 0
      %1912 = vmatpush.bf16.msra.mxu0 0
      %1913 = vmatpush.bf16.msra.mxu0 0
      %1914 = vmatpush.bf16.msra.mxu0 0
      %1915 = vmatpush.bf16.msra.mxu0 0
      %1916 = vmatpush.bf16.msra.mxu0 0
      %1917 = vmatpush.bf16.msra.mxu0 0
      %1918 = vmatpush.bf16.msra.mxu0 %v1903
      %1919 = vmatpush.bf16.msra.mxu0 %v1902
      %1920 = vmatmul.bf16.gmra.mxu0 %v1907
      %v1921 = vpop.f32.mrf.mxu0
      %v1922 = vadd.f32 %v1885, %v1921
      %v1923 = vpop.f32.mrf.mxu0
      %v1924 = vadd.f32 %v1887, %v1923
      %1925 = vmatmul.bf16.gmra.mxu0 %v1910
      %v1926 = vpop.f32.mrf.mxu0
      %v1927 = vadd.f32 %v1890, %v1926
      %v1928 = vpop.f32.mrf.mxu0
      %v1929 = vadd.f32 %v1892, %v1928
      %1930 = vdwg.mxu0
      %s1931 = scalar_lea.vmem %s776, 128
      %v1932 = vld [vmem:[%s1931] sm:$0xf]
      %v1933 = vld [vmem:[%s1931 + $0x4] sm:$0xf]
      %v1934 = vld [vmem:[%s1931 + $0x8] sm:$0xf]
      %v1935 = vld [vmem:[%s1931 + $0xc] sm:$0xf]
      %v1936 = vld [vmem:[%s1931 + $0x10] sm:$0xf]
      %v1937 = vld [vmem:[%s1931 + $0x14] sm:$0xf]
      %v1938 = vld [vmem:[%s1931 + $0x18] sm:$0xf]
      %v1939 = vld [vmem:[%s1931 + $0x1c] sm:$0xf]
      %v1940 = vld [vmem:[%s1931 + $0x20] sm:$0xf]
      %v1941 = vld [vmem:[%s1931 + $0x24] sm:$0xf]
      %v1942 = vld [vmem:[%s1931 + $0x28] sm:$0xf]
      %v1943 = vld [vmem:[%s1931 + $0x2c] sm:$0xf]
      %v1944 = vld [vmem:[%s1931 + $0x30] sm:$0xf]
      %v1945 = vld [vmem:[%s1931 + $0x34] sm:$0xf]
      %v1946 = vld [vmem:[%s1931 + $0x38] sm:$0xf]
      %v1947 = vld [vmem:[%s1931 + $0x3c] sm:$0xf]
      %s1948 = scalar_lea.vmem %s780, 2
      %v1949 = vld [vmem:[%s1948] sm:$0x1]
      %v1951 = vperm.slane %v1949, 0
      %v1969 = vunpack.c.l.b16 %v1932
      %v1970 = vunpack.c.l.b16 %v1933
      %v1971 = vunpack.c.l.b16 %v1934
      %v1972 = vunpack.c.l.b16 %v1935
      %v1973 = vunpack.c.l.b16 %v1936
      %v1974 = vunpack.c.l.b16 %v1937
      %v1975 = vunpack.c.l.b16 %v1938
      %v1976 = vunpack.c.l.b16 %v1939
      %v1977 = vunpack.c.l.b16 %v1940
      %v1978 = vunpack.c.l.b16 %v1941
      %v1979 = vunpack.c.l.b16 %v1942
      %v1980 = vunpack.c.l.b16 %v1943
      %v1981 = vunpack.c.l.b16 %v1944
      %v1982 = vunpack.c.l.b16 %v1945
      %v1983 = vunpack.c.l.b16 %v1946
      %v1984 = vunpack.c.l.b16 %v1947
      %v1985 = vpack.c.b16 %v1970, %v1969
      %v1986 = vpack.c.b16 %v1972, %v1971
      %v1987 = vpack.c.b16 %v1974, %v1973
      %v1988 = vpack.c.b16 %v1976, %v1975
      %v1989 = vpack.c.b16 %v1978, %v1977
      %v1990 = vpack.c.b16 %v1980, %v1979
      %v1991 = vpack.c.b16 %v1982, %v1981
      %v1992 = vpack.c.b16 %v1984, %v1983
      %2001 = vmatpush.bf16.msra.mxu0 %v1992
      %2002 = vmatpush.bf16.msra.mxu0 %v1991
      %2003 = vmatpush.bf16.msra.mxu0 %v1990
      %2004 = vmatpush.bf16.msra.mxu0 %v1989
      %2005 = vmatpush.bf16.msra.mxu0 %v1988
      %2006 = vmatpush.bf16.msra.mxu0 %v1987
      %2007 = vmatpush.bf16.msra.mxu0 %v1986
      %2008 = vmatpush.bf16.msra.mxu0 %v1985
      %2009 = vmatmul.bf16.gmra.mxu0 %v960
      %v2010 = vpop.f32.mrf.mxu0
      %v2011 = vadd.f32 %v1951, %v2010
      %v2012 = vpop.f32.mrf.mxu0
      %v2013 = vadd.f32 %v1951, %v2012
      %2014 = vmatmul.bf16.gmra.mxu0 %v961
      %v2015 = vpop.f32.mrf.mxu0
      %v2016 = vadd.f32 %v1951, %v2015
      %v2017 = vpop.f32.mrf.mxu0
      %v2018 = vadd.f32 %v1951, %v2017
      %2019 = vdwg.mxu0
      %s2020 = scalar_lea.vmem %s785, 128
      %v2021 = vld [vmem:[%s2020] sm:$0xf]
      %v2022 = vld [vmem:[%s2020 + $0x4] sm:$0xf]
      %v2023 = vld [vmem:[%s2020 + $0x8] sm:$0xf]
      %v2024 = vld [vmem:[%s2020 + $0xc] sm:$0xf]
      %v2025 = vld [vmem:[%s2020 + $0x10] sm:$0xf]
      %v2026 = vld [vmem:[%s2020 + $0x14] sm:$0xf]
      %v2027 = vld [vmem:[%s2020 + $0x18] sm:$0xf]
      %v2028 = vld [vmem:[%s2020 + $0x1c] sm:$0xf]
      %v2029 = vld [vmem:[%s2020 + $0x20] sm:$0xf]
      %v2030 = vld [vmem:[%s2020 + $0x24] sm:$0xf]
      %v2031 = vld [vmem:[%s2020 + $0x28] sm:$0xf]
      %v2032 = vld [vmem:[%s2020 + $0x2c] sm:$0xf]
      %v2033 = vld [vmem:[%s2020 + $0x30] sm:$0xf]
      %v2034 = vld [vmem:[%s2020 + $0x34] sm:$0xf]
      %v2035 = vld [vmem:[%s2020 + $0x38] sm:$0xf]
      %v2036 = vld [vmem:[%s2020 + $0x3c] sm:$0xf]
      %s2037 = scalar_lea.vmem %s789, 2
      %v2038 = vld [vmem:[%s2037] sm:$0x1]
      %v2040 = vperm.slane %v2038, 0
      %v2058 = vunpack.c.l.b16 %v2021
      %v2059 = vunpack.c.l.b16 %v2022
      %v2060 = vunpack.c.l.b16 %v2023
      %v2061 = vunpack.c.l.b16 %v2024
      %v2062 = vunpack.c.l.b16 %v2025
      %v2063 = vunpack.c.l.b16 %v2026
      %v2064 = vunpack.c.l.b16 %v2027
      %v2065 = vunpack.c.l.b16 %v2028
      %v2066 = vunpack.c.l.b16 %v2029
      %v2067 = vunpack.c.l.b16 %v2030
      %v2068 = vunpack.c.l.b16 %v2031
      %v2069 = vunpack.c.l.b16 %v2032
      %v2070 = vunpack.c.l.b16 %v2033
      %v2071 = vunpack.c.l.b16 %v2034
      %v2072 = vunpack.c.l.b16 %v2035
      %v2073 = vunpack.c.l.b16 %v2036
      %v2074 = vpack.c.b16 %v2059, %v2058
      %v2075 = vpack.c.b16 %v2061, %v2060
      %v2076 = vpack.c.b16 %v2063, %v2062
      %v2077 = vpack.c.b16 %v2065, %v2064
      %v2078 = vpack.c.b16 %v2067, %v2066
      %v2079 = vpack.c.b16 %v2069, %v2068
      %v2080 = vpack.c.b16 %v2071, %v2070
      %v2081 = vpack.c.b16 %v2073, %v2072
      %2090 = vmatpush.bf16.msra.mxu0 %v2081
      %2091 = vmatpush.bf16.msra.mxu0 %v2080
      %2092 = vmatpush.bf16.msra.mxu0 %v2079
      %2093 = vmatpush.bf16.msra.mxu0 %v2078
      %2094 = vmatpush.bf16.msra.mxu0 %v2077
      %2095 = vmatpush.bf16.msra.mxu0 %v2076
      %2096 = vmatpush.bf16.msra.mxu0 %v2075
      %2097 = vmatpush.bf16.msra.mxu0 %v2074
      %2098 = vmatmul.bf16.gmra.mxu0 %v960
      %v2099 = vpop.f32.mrf.mxu0
      %v2100 = vadd.f32 %v2040, %v2099
      %v2101 = vpop.f32.mrf.mxu0
      %v2102 = vadd.f32 %v2040, %v2101
      %2103 = vmatmul.bf16.gmra.mxu0 %v961
      %v2104 = vpop.f32.mrf.mxu0
      %v2105 = vadd.f32 %v2040, %v2104
      %v2106 = vpop.f32.mrf.mxu0
      %v2107 = vadd.f32 %v2040, %v2106
      %2108 = vdwg.mxu0
      %s2109 = scalar_lea.vmem %s794, 128
      %v2110 = vld [vmem:[%s2109] sm:$0xf]
      %v2111 = vld [vmem:[%s2109 + $0x4] sm:$0xf]
      %v2112 = vld [vmem:[%s2109 + $0x8] sm:$0xf]
      %v2113 = vld [vmem:[%s2109 + $0xc] sm:$0xf]
      %v2114 = vld [vmem:[%s2109 + $0x10] sm:$0xf]
      %v2115 = vld [vmem:[%s2109 + $0x14] sm:$0xf]
      %v2116 = vld [vmem:[%s2109 + $0x18] sm:$0xf]
      %v2117 = vld [vmem:[%s2109 + $0x1c] sm:$0xf]
      %v2118 = vld [vmem:[%s2109 + $0x20] sm:$0xf]
      %v2119 = vld [vmem:[%s2109 + $0x24] sm:$0xf]
      %v2120 = vld [vmem:[%s2109 + $0x28] sm:$0xf]
      %v2121 = vld [vmem:[%s2109 + $0x2c] sm:$0xf]
      %v2122 = vld [vmem:[%s2109 + $0x30] sm:$0xf]
      %v2123 = vld [vmem:[%s2109 + $0x34] sm:$0xf]
      %v2124 = vld [vmem:[%s2109 + $0x38] sm:$0xf]
      %v2125 = vld [vmem:[%s2109 + $0x3c] sm:$0xf]
      %s2126 = scalar_lea.vmem %s798, 2
      %v2127 = vld [vmem:[%s2126] sm:$0x1]
      %v2129 = vperm.slane %v2127, 0
      %v2147 = vunpack.c.l.b16 %v2110
      %v2148 = vunpack.c.l.b16 %v2111
      %v2149 = vunpack.c.l.b16 %v2112
      %v2150 = vunpack.c.l.b16 %v2113
      %v2151 = vunpack.c.l.b16 %v2114
      %v2152 = vunpack.c.l.b16 %v2115
      %v2153 = vunpack.c.l.b16 %v2116
      %v2154 = vunpack.c.l.b16 %v2117
      %v2155 = vunpack.c.l.b16 %v2118
      %v2156 = vunpack.c.l.b16 %v2119
      %v2157 = vunpack.c.l.b16 %v2120
      %v2158 = vunpack.c.l.b16 %v2121
      %v2159 = vunpack.c.l.b16 %v2122
      %v2160 = vunpack.c.l.b16 %v2123
      %v2161 = vunpack.c.l.b16 %v2124
      %v2162 = vunpack.c.l.b16 %v2125
      %v2163 = vpack.c.b16 %v2148, %v2147
      %v2164 = vpack.c.b16 %v2150, %v2149
      %v2165 = vpack.c.b16 %v2152, %v2151
      %v2166 = vpack.c.b16 %v2154, %v2153
      %v2167 = vpack.c.b16 %v2156, %v2155
      %v2168 = vpack.c.b16 %v2158, %v2157
      %v2169 = vpack.c.b16 %v2160, %v2159
      %v2170 = vpack.c.b16 %v2162, %v2161
      %2179 = vmatpush.bf16.msra.mxu0 %v2170
      %2180 = vmatpush.bf16.msra.mxu0 %v2169
      %2181 = vmatpush.bf16.msra.mxu0 %v2168
      %2182 = vmatpush.bf16.msra.mxu0 %v2167
      %2183 = vmatpush.bf16.msra.mxu0 %v2166
      %2184 = vmatpush.bf16.msra.mxu0 %v2165
      %2185 = vmatpush.bf16.msra.mxu0 %v2164
      %2186 = vmatpush.bf16.msra.mxu0 %v2163
      %2187 = vmatmul.bf16.gmra.mxu0 %v960
      %v2188 = vpop.f32.mrf.mxu0
      %v2189 = vadd.f32 %v2129, %v2188
      %v2190 = vpop.f32.mrf.mxu0
      %v2191 = vadd.f32 %v2129, %v2190
      %2192 = vmatmul.bf16.gmra.mxu0 %v961
      %v2193 = vpop.f32.mrf.mxu0
      %v2194 = vadd.f32 %v2129, %v2193
      %v2195 = vpop.f32.mrf.mxu0
      %v2196 = vadd.f32 %v2129, %v2195
      %2197 = vdwg.mxu0
      %v2198 = vpack.c.bf16 %v2011, %v2011
      %v2199 = vpack.c.bf16 %v2013, %v2013
      %v2200 = vpack.c.bf16 %v2016, %v2016
      %v2201 = vpack.c.bf16 %v2018, %v2018
      %v2202 = vpack.c.bf16 %v2100, %v2100
      %v2203 = vpack.c.bf16 %v2102, %v2102
      %v2204 = vpack.c.bf16 %v2105, %v2105
      %v2205 = vpack.c.bf16 %v2107, %v2107
      %v2206 = vpack.c.bf16 %v2189, %v2189
      %v2207 = vpack.c.bf16 %v2191, %v2191
      %v2208 = vpack.c.bf16 %v2194, %v2194
      %v2209 = vpack.c.bf16 %v2196, %v2196
      %v2212 = vunpack.c.l.b16 %v2198
      %v2213 = vunpack.c.l.b16 %v2199
      %v2214 = vpack.c.b16 %v2213, %v2212
      %v2217 = vunpack.c.l.b16 %v2202
      %v2218 = vunpack.c.l.b16 %v2203
      %v2219 = vpack.c.b16 %v2218, %v2217
      %v2221 = vsel %vm1245, %v2214, 0
      %v2224 = vsel %vm1245, %v2219, 0
      %2226 = vmatpush.bf16.xpose.msra.mxu0 0
      %2227 = vmatpush.bf16.xpose.msra.mxu0 0
      %2228 = vmatpush.bf16.xpose.msra.mxu0 0
      %2229 = vmatpush.bf16.xpose.msra.mxu0 0
      %2230 = vmatpush.bf16.xpose.msra.mxu0 0
      %2231 = vmatpush.bf16.xpose.msra.mxu0 0
      %2232 = vmatpush.bf16.xpose.msra.mxu0 0
      %2233 = vmatpush.bf16.xpose.msra.mxu0 %v2224
      %2234 = vmatmul.bf16.gmra.mxu0 %v2221
      %v2235 = vpop.f32.mrf.mxu0
      %v2236 = vadd.f32 0.0, %v2235
      %v2237 = vpop.f32.mrf.mxu0
      %v2238 = vadd.f32 0.0, %v2237
      %2239 = vdwg.mxu0
      %v2242 = vunpack.c.l.b16 %v2200
      %v2243 = vunpack.c.l.b16 %v2201
      %v2244 = vpack.c.b16 %v2243, %v2242
      %v2247 = vunpack.c.l.b16 %v2204
      %v2248 = vunpack.c.l.b16 %v2205
      %v2249 = vpack.c.b16 %v2248, %v2247
      %v2251 = vsel %vm1245, %v2244, 0
      %v2254 = vsel %vm1245, %v2249, 0
      %2256 = vmatpush.bf16.xpose.msra.mxu0 0
      %2257 = vmatpush.bf16.xpose.msra.mxu0 0
      %2258 = vmatpush.bf16.xpose.msra.mxu0 0
      %2259 = vmatpush.bf16.xpose.msra.mxu0 0
      %2260 = vmatpush.bf16.xpose.msra.mxu0 0
      %2261 = vmatpush.bf16.xpose.msra.mxu0 0
      %2262 = vmatpush.bf16.xpose.msra.mxu0 0
      %2263 = vmatpush.bf16.xpose.msra.mxu0 %v2254
      %2264 = vmatmul.bf16.gmra.mxu0 %v2251
      %v2265 = vpop.f32.mrf.mxu0
      %v2266 = vadd.f32 0.0, %v2265
      %v2267 = vpop.f32.mrf.mxu0
      %v2268 = vadd.f32 0.0, %v2267
      %2269 = vdwg.mxu0
      %v2270 = vsel %vm1296, %v2236, -inf
      %2271 = vmax.xlane.f32.xlu0 %v2270
      %v2272 = vpop.xlane.xlu0 %2271
      %v2273 = vsel %vm1296, %v2238, -inf
      %2274 = vmax.xlane.f32.xlu0 %v2273
      %v2275 = vpop.xlane.xlu0 %2274
      %v2276 = vsel %vm1296, %v2266, -inf
      %2277 = vmax.xlane.f32.xlu0 %v2276
      %v2278 = vpop.xlane.xlu0 %2277
      %v2279 = vsel %vm1296, %v2268, -inf
      %2280 = vmax.xlane.f32.xlu0 %v2279
      %v2281 = vpop.xlane.xlu0 %2280
      %v2282 = vsub.f32 %v2236, %v2272
      %v2283 = vsub.f32 %v2238, %v2275
      %v2284 = vsub.f32 %v2266, %v2278
      %v2285 = vsub.f32 %v2268, %v2281
      %v2286 = vmul.f32 %v2282, 1.442695
      %v2287 = vpow.pop %v2286
      %v2288 = vmul.f32 %v2283, 1.442695
      %v2289 = vpow.pop %v2288
      %v2290 = vmul.f32 %v2284, 1.442695
      %v2291 = vpow.pop %v2290
      %v2292 = vmul.f32 %v2285, 1.442695
      %v2293 = vpow.pop %v2292
      %v2294 = vsel %vm1296, %v2287, 0.0
      %2295 = vadd.xlane.f32.xlu0 %v2294
      %v2296 = vpop.xlane.xlu0 %2295
      %v2297 = vsel %vm1296, %v2289, 0.0
      %2298 = vadd.xlane.f32.xlu0 %v2297
      %v2299 = vpop.xlane.xlu0 %2298
      %v2300 = vsel %vm1296, %v2291, 0.0
      %2301 = vadd.xlane.f32.xlu0 %v2300
      %v2302 = vpop.xlane.xlu0 %2301
      %v2303 = vsel %vm1296, %v2293, 0.0
      %2304 = vadd.xlane.f32.xlu0 %v2303
      %v2305 = vpop.xlane.xlu0 %2304
      %v2306 = vrcp.pop %v2296
      %v2307 = vrcp.pop %v2299
      %v2308 = vrcp.pop %v2302
      %v2309 = vrcp.pop %v2305
      %v2310 = vmul.f32 %v2287, %v2306
      %v2311 = vmul.f32 %v2289, %v2307
      %v2312 = vmul.f32 %v2291, %v2308
      %v2313 = vmul.f32 %v2293, %v2309
      %v2314 = vpack.c.bf16 %v2310, %v2310
      %v2315 = vpack.c.bf16 %v2311, %v2311
      %v2316 = vpack.c.bf16 %v2312, %v2312
      %v2317 = vpack.c.bf16 %v2313, %v2313
      %v2320 = vunpack.c.l.b16 %v2314
      %v2321 = vunpack.c.l.b16 %v2315
      %v2322 = vpack.c.b16 %v2321, %v2320
      %v2325 = vunpack.c.l.b16 %v2206
      %v2326 = vunpack.c.l.b16 %v2207
      %v2327 = vpack.c.b16 %v2326, %v2325
      %v2330 = vsel %vm1296, %v2322, 0
      %2332 = vmatpush.bf16.msra.mxu0 0
      %2333 = vmatpush.bf16.msra.mxu0 0
      %2334 = vmatpush.bf16.msra.mxu0 0
      %2335 = vmatpush.bf16.msra.mxu0 0
      %2336 = vmatpush.bf16.msra.mxu0 0
      %2337 = vmatpush.bf16.msra.mxu0 0
      %2338 = vmatpush.bf16.msra.mxu0 0
      %2339 = vmatpush.bf16.msra.mxu0 %v2327
      %2340 = vmatmul.bf16.gmra.mxu0 %v2330
      %v2341 = vpop.f32.mrf.mxu0
      %v2342 = vadd.f32 0.0, %v2341
      %v2343 = vpop.f32.mrf.mxu0
      %v2344 = vadd.f32 0.0, %v2343
      %2345 = vdwg.mxu0
      %v2348 = vunpack.c.l.b16 %v2316
      %v2349 = vunpack.c.l.b16 %v2317
      %v2350 = vpack.c.b16 %v2349, %v2348
      %v2353 = vunpack.c.l.b16 %v2208
      %v2354 = vunpack.c.l.b16 %v2209
      %v2355 = vpack.c.b16 %v2354, %v2353
      %v2358 = vsel %vm1296, %v2350, 0
      %2360 = vmatpush.bf16.msra.mxu0 0
      %2361 = vmatpush.bf16.msra.mxu0 0
      %2362 = vmatpush.bf16.msra.mxu0 0
      %2363 = vmatpush.bf16.msra.mxu0 0
      %2364 = vmatpush.bf16.msra.mxu0 0
      %2365 = vmatpush.bf16.msra.mxu0 0
      %2366 = vmatpush.bf16.msra.mxu0 0
      %2367 = vmatpush.bf16.msra.mxu0 %v2355
      %2368 = vmatmul.bf16.gmra.mxu0 %v2358
      %v2369 = vpop.f32.mrf.mxu0
      %v2370 = vadd.f32 0.0, %v2369
      %v2371 = vpop.f32.mrf.mxu0
      %v2372 = vadd.f32 0.0, %v2371
      %2373 = vdwg.mxu0
      %v2374 = vpack.c.bf16 %v2344, %v2342
      %v2375 = vpack.c.bf16 %v2372, %v2370
      %s2376 = scalar_lea.vmem %s803, 32
      %v2377 = vld [vmem:[%s2376] sm:$0xf]
      %v2378 = vld [vmem:[%s2376 + $0x4] sm:$0xf]
      %v2379 = vld [vmem:[%s2376 + $0x8] sm:$0xf]
      %v2380 = vld [vmem:[%s2376 + $0xc] sm:$0xf]
      %v2385 = vunpack.c.l.b16 %v2377
      %v2386 = vunpack.c.l.b16 %v2378
      %v2387 = vunpack.c.l.b16 %v2379
      %v2388 = vunpack.c.l.b16 %v2380
      %v2389 = vpack.c.b16 %v2386, %v2385
      %v2390 = vpack.c.b16 %v2388, %v2387
      %v2394 = vsel %vm1245, %v2374, 0
      %v2397 = vsel %vm1245, %v2375, 0
      %2399 = vmatpush.bf16.msra.mxu0 0
      %2400 = vmatpush.bf16.msra.mxu0 0
      %2401 = vmatpush.bf16.msra.mxu0 0
      %2402 = vmatpush.bf16.msra.mxu0 0
      %2403 = vmatpush.bf16.msra.mxu0 0
      %2404 = vmatpush.bf16.msra.mxu0 0
      %2405 = vmatpush.bf16.msra.mxu0 %v2390
      %2406 = vmatpush.bf16.msra.mxu0 %v2389
      %2407 = vmatmul.bf16.gmra.mxu0 %v2394
      %v2408 = vpop.f32.mrf.mxu0
      %v2409 = vadd.f32 0.0, %v2408
      %v2410 = vpop.f32.mrf.mxu0
      %v2411 = vadd.f32 0.0, %v2410
      %2412 = vmatmul.bf16.gmra.mxu0 %v2397
      %v2413 = vpop.f32.mrf.mxu0
      %v2414 = vadd.f32 0.0, %v2413
      %v2415 = vpop.f32.mrf.mxu0
      %v2416 = vadd.f32 0.0, %v2415
      %2417 = vdwg.mxu0
      %v2418 = vadd.f32 %v1922, %v2409
      %v2419 = vadd.f32 %v1924, %v2411
      %v2420 = vadd.f32 %v1927, %v2414
      %v2421 = vadd.f32 %v1929, %v2416
      %s2422 = scalar_lea.vmem %s776, 192
      %v2423 = vld [vmem:[%s2422] sm:$0xf]
      %v2424 = vld [vmem:[%s2422 + $0x4] sm:$0xf]
      %v2425 = vld [vmem:[%s2422 + $0x8] sm:$0xf]
      %v2426 = vld [vmem:[%s2422 + $0xc] sm:$0xf]
      %v2427 = vld [vmem:[%s2422 + $0x10] sm:$0xf]
      %v2428 = vld [vmem:[%s2422 + $0x14] sm:$0xf]
      %v2429 = vld [vmem:[%s2422 + $0x18] sm:$0xf]
      %v2430 = vld [vmem:[%s2422 + $0x1c] sm:$0xf]
      %v2431 = vld [vmem:[%s2422 + $0x20] sm:$0xf]
      %v2432 = vld [vmem:[%s2422 + $0x24] sm:$0xf]
      %v2433 = vld [vmem:[%s2422 + $0x28] sm:$0xf]
      %v2434 = vld [vmem:[%s2422 + $0x2c] sm:$0xf]
      %v2435 = vld [vmem:[%s2422 + $0x30] sm:$0xf]
      %v2436 = vld [vmem:[%s2422 + $0x34] sm:$0xf]
      %v2437 = vld [vmem:[%s2422 + $0x38] sm:$0xf]
      %v2438 = vld [vmem:[%s2422 + $0x3c] sm:$0xf]
      %s2439 = scalar_lea.vmem %s780, 3
      %v2440 = vld [vmem:[%s2439] sm:$0x1]
      %v2442 = vperm.slane %v2440, 0
      %v2460 = vunpack.c.l.b16 %v2423
      %v2461 = vunpack.c.l.b16 %v2424
      %v2462 = vunpack.c.l.b16 %v2425
      %v2463 = vunpack.c.l.b16 %v2426
      %v2464 = vunpack.c.l.b16 %v2427
      %v2465 = vunpack.c.l.b16 %v2428
      %v2466 = vunpack.c.l.b16 %v2429
      %v2467 = vunpack.c.l.b16 %v2430
      %v2468 = vunpack.c.l.b16 %v2431
      %v2469 = vunpack.c.l.b16 %v2432
      %v2470 = vunpack.c.l.b16 %v2433
      %v2471 = vunpack.c.l.b16 %v2434
      %v2472 = vunpack.c.l.b16 %v2435
      %v2473 = vunpack.c.l.b16 %v2436
      %v2474 = vunpack.c.l.b16 %v2437
      %v2475 = vunpack.c.l.b16 %v2438
      %v2476 = vpack.c.b16 %v2461, %v2460
      %v2477 = vpack.c.b16 %v2463, %v2462
      %v2478 = vpack.c.b16 %v2465, %v2464
      %v2479 = vpack.c.b16 %v2467, %v2466
      %v2480 = vpack.c.b16 %v2469, %v2468
      %v2481 = vpack.c.b16 %v2471, %v2470
      %v2482 = vpack.c.b16 %v2473, %v2472
      %v2483 = vpack.c.b16 %v2475, %v2474
      %2492 = vmatpush.bf16.msra.mxu0 %v2483
      %2493 = vmatpush.bf16.msra.mxu0 %v2482
      %2494 = vmatpush.bf16.msra.mxu0 %v2481
      %2495 = vmatpush.bf16.msra.mxu0 %v2480
      %2496 = vmatpush.bf16.msra.mxu0 %v2479
      %2497 = vmatpush.bf16.msra.mxu0 %v2478
      %2498 = vmatpush.bf16.msra.mxu0 %v2477
      %2499 = vmatpush.bf16.msra.mxu0 %v2476
      %2500 = vmatmul.bf16.gmra.mxu0 %v960
      %v2501 = vpop.f32.mrf.mxu0
      %v2502 = vadd.f32 %v2442, %v2501
      %v2503 = vpop.f32.mrf.mxu0
      %v2504 = vadd.f32 %v2442, %v2503
      %2505 = vmatmul.bf16.gmra.mxu0 %v961
      %v2506 = vpop.f32.mrf.mxu0
      %v2507 = vadd.f32 %v2442, %v2506
      %v2508 = vpop.f32.mrf.mxu0
      %v2509 = vadd.f32 %v2442, %v2508
      %2510 = vdwg.mxu0
      %s2511 = scalar_lea.vmem %s785, 192
      %v2512 = vld [vmem:[%s2511] sm:$0xf]
      %v2513 = vld [vmem:[%s2511 + $0x4] sm:$0xf]
      %v2514 = vld [vmem:[%s2511 + $0x8] sm:$0xf]
      %v2515 = vld [vmem:[%s2511 + $0xc] sm:$0xf]
      %v2516 = vld [vmem:[%s2511 + $0x10] sm:$0xf]
      %v2517 = vld [vmem:[%s2511 + $0x14] sm:$0xf]
      %v2518 = vld [vmem:[%s2511 + $0x18] sm:$0xf]
      %v2519 = vld [vmem:[%s2511 + $0x1c] sm:$0xf]
      %v2520 = vld [vmem:[%s2511 + $0x20] sm:$0xf]
      %v2521 = vld [vmem:[%s2511 + $0x24] sm:$0xf]
      %v2522 = vld [vmem:[%s2511 + $0x28] sm:$0xf]
      %v2523 = vld [vmem:[%s2511 + $0x2c] sm:$0xf]
      %v2524 = vld [vmem:[%s2511 + $0x30] sm:$0xf]
      %v2525 = vld [vmem:[%s2511 + $0x34] sm:$0xf]
      %v2526 = vld [vmem:[%s2511 + $0x38] sm:$0xf]
      %v2527 = vld [vmem:[%s2511 + $0x3c] sm:$0xf]
      %s2528 = scalar_lea.vmem %s789, 3
      %v2529 = vld [vmem:[%s2528] sm:$0x1]
      %v2531 = vperm.slane %v2529, 0
      %v2549 = vunpack.c.l.b16 %v2512
      %v2550 = vunpack.c.l.b16 %v2513
      %v2551 = vunpack.c.l.b16 %v2514
      %v2552 = vunpack.c.l.b16 %v2515
      %v2553 = vunpack.c.l.b16 %v2516
      %v2554 = vunpack.c.l.b16 %v2517
      %v2555 = vunpack.c.l.b16 %v2518
      %v2556 = vunpack.c.l.b16 %v2519
      %v2557 = vunpack.c.l.b16 %v2520
      %v2558 = vunpack.c.l.b16 %v2521
      %v2559 = vunpack.c.l.b16 %v2522
      %v2560 = vunpack.c.l.b16 %v2523
      %v2561 = vunpack.c.l.b16 %v2524
      %v2562 = vunpack.c.l.b16 %v2525
      %v2563 = vunpack.c.l.b16 %v2526
      %v2564 = vunpack.c.l.b16 %v2527
      %v2565 = vpack.c.b16 %v2550, %v2549
      %v2566 = vpack.c.b16 %v2552, %v2551
      %v2567 = vpack.c.b16 %v2554, %v2553
      %v2568 = vpack.c.b16 %v2556, %v2555
      %v2569 = vpack.c.b16 %v2558, %v2557
      %v2570 = vpack.c.b16 %v2560, %v2559
      %v2571 = vpack.c.b16 %v2562, %v2561
      %v2572 = vpack.c.b16 %v2564, %v2563
      %2581 = vmatpush.bf16.msra.mxu0 %v2572
      %2582 = vmatpush.bf16.msra.mxu0 %v2571
      %2583 = vmatpush.bf16.msra.mxu0 %v2570
      %2584 = vmatpush.bf16.msra.mxu0 %v2569
      %2585 = vmatpush.bf16.msra.mxu0 %v2568
      %2586 = vmatpush.bf16.msra.mxu0 %v2567
      %2587 = vmatpush.bf16.msra.mxu0 %v2566
      %2588 = vmatpush.bf16.msra.mxu0 %v2565
      %2589 = vmatmul.bf16.gmra.mxu0 %v960
      %v2590 = vpop.f32.mrf.mxu0
      %v2591 = vadd.f32 %v2531, %v2590
      %v2592 = vpop.f32.mrf.mxu0
      %v2593 = vadd.f32 %v2531, %v2592
      %2594 = vmatmul.bf16.gmra.mxu0 %v961
      %v2595 = vpop.f32.mrf.mxu0
      %v2596 = vadd.f32 %v2531, %v2595
      %v2597 = vpop.f32.mrf.mxu0
      %v2598 = vadd.f32 %v2531, %v2597
      %2599 = vdwg.mxu0
      %s2600 = scalar_lea.vmem %s794, 192
      %v2601 = vld [vmem:[%s2600] sm:$0xf]
      %v2602 = vld [vmem:[%s2600 + $0x4] sm:$0xf]
      %v2603 = vld [vmem:[%s2600 + $0x8] sm:$0xf]
      %v2604 = vld [vmem:[%s2600 + $0xc] sm:$0xf]
      %v2605 = vld [vmem:[%s2600 + $0x10] sm:$0xf]
      %v2606 = vld [vmem:[%s2600 + $0x14] sm:$0xf]
      %v2607 = vld [vmem:[%s2600 + $0x18] sm:$0xf]
      %v2608 = vld [vmem:[%s2600 + $0x1c] sm:$0xf]
      %v2609 = vld [vmem:[%s2600 + $0x20] sm:$0xf]
      %v2610 = vld [vmem:[%s2600 + $0x24] sm:$0xf]
      %v2611 = vld [vmem:[%s2600 + $0x28] sm:$0xf]
      %v2612 = vld [vmem:[%s2600 + $0x2c] sm:$0xf]
      %v2613 = vld [vmem:[%s2600 + $0x30] sm:$0xf]
      %v2614 = vld [vmem:[%s2600 + $0x34] sm:$0xf]
      %v2615 = vld [vmem:[%s2600 + $0x38] sm:$0xf]
      %v2616 = vld [vmem:[%s2600 + $0x3c] sm:$0xf]
      %s2617 = scalar_lea.vmem %s798, 3
      %v2618 = vld [vmem:[%s2617] sm:$0x1]
      %v2620 = vperm.slane %v2618, 0
      %v2638 = vunpack.c.l.b16 %v2601
      %v2639 = vunpack.c.l.b16 %v2602
      %v2640 = vunpack.c.l.b16 %v2603
      %v2641 = vunpack.c.l.b16 %v2604
      %v2642 = vunpack.c.l.b16 %v2605
      %v2643 = vunpack.c.l.b16 %v2606
      %v2644 = vunpack.c.l.b16 %v2607
      %v2645 = vunpack.c.l.b16 %v2608
      %v2646 = vunpack.c.l.b16 %v2609
      %v2647 = vunpack.c.l.b16 %v2610
      %v2648 = vunpack.c.l.b16 %v2611
      %v2649 = vunpack.c.l.b16 %v2612
      %v2650 = vunpack.c.l.b16 %v2613
      %v2651 = vunpack.c.l.b16 %v2614
      %v2652 = vunpack.c.l.b16 %v2615
      %v2653 = vunpack.c.l.b16 %v2616
      %v2654 = vpack.c.b16 %v2639, %v2638
      %v2655 = vpack.c.b16 %v2641, %v2640
      %v2656 = vpack.c.b16 %v2643, %v2642
      %v2657 = vpack.c.b16 %v2645, %v2644
      %v2658 = vpack.c.b16 %v2647, %v2646
      %v2659 = vpack.c.b16 %v2649, %v2648
      %v2660 = vpack.c.b16 %v2651, %v2650
      %v2661 = vpack.c.b16 %v2653, %v2652
      %2670 = vmatpush.bf16.msra.mxu0 %v2661
      %2671 = vmatpush.bf16.msra.mxu0 %v2660
      %2672 = vmatpush.bf16.msra.mxu0 %v2659
      %2673 = vmatpush.bf16.msra.mxu0 %v2658
      %2674 = vmatpush.bf16.msra.mxu0 %v2657
      %2675 = vmatpush.bf16.msra.mxu0 %v2656
      %2676 = vmatpush.bf16.msra.mxu0 %v2655
      %2677 = vmatpush.bf16.msra.mxu0 %v2654
      %2678 = vmatmul.bf16.gmra.mxu0 %v960
      %v2679 = vpop.f32.mrf.mxu0
      %v2680 = vadd.f32 %v2620, %v2679
      %v2681 = vpop.f32.mrf.mxu0
      %v2682 = vadd.f32 %v2620, %v2681
      %2683 = vmatmul.bf16.gmra.mxu0 %v961
      %v2684 = vpop.f32.mrf.mxu0
      %v2685 = vadd.f32 %v2620, %v2684
      %v2686 = vpop.f32.mrf.mxu0
      %v2687 = vadd.f32 %v2620, %v2686
      %2688 = vdwg.mxu0
      %v2689 = vpack.c.bf16 %v2502, %v2502
      %v2690 = vpack.c.bf16 %v2504, %v2504
      %v2691 = vpack.c.bf16 %v2507, %v2507
      %v2692 = vpack.c.bf16 %v2509, %v2509
      %v2693 = vpack.c.bf16 %v2591, %v2591
      %v2694 = vpack.c.bf16 %v2593, %v2593
      %v2695 = vpack.c.bf16 %v2596, %v2596
      %v2696 = vpack.c.bf16 %v2598, %v2598
      %v2697 = vpack.c.bf16 %v2680, %v2680
      %v2698 = vpack.c.bf16 %v2682, %v2682
      %v2699 = vpack.c.bf16 %v2685, %v2685
      %v2700 = vpack.c.bf16 %v2687, %v2687
      %v2703 = vunpack.c.l.b16 %v2689
      %v2704 = vunpack.c.l.b16 %v2690
      %v2705 = vpack.c.b16 %v2704, %v2703
      %v2708 = vunpack.c.l.b16 %v2693
      %v2709 = vunpack.c.l.b16 %v2694
      %v2710 = vpack.c.b16 %v2709, %v2708
      %v2712 = vsel %vm1245, %v2705, 0
      %v2715 = vsel %vm1245, %v2710, 0
      %2717 = vmatpush.bf16.xpose.msra.mxu0 0
      %2718 = vmatpush.bf16.xpose.msra.mxu0 0
      %2719 = vmatpush.bf16.xpose.msra.mxu0 0
      %2720 = vmatpush.bf16.xpose.msra.mxu0 0
      %2721 = vmatpush.bf16.xpose.msra.mxu0 0
      %2722 = vmatpush.bf16.xpose.msra.mxu0 0
      %2723 = vmatpush.bf16.xpose.msra.mxu0 0
      %2724 = vmatpush.bf16.xpose.msra.mxu0 %v2715
      %2725 = vmatmul.bf16.gmra.mxu0 %v2712
      %v2726 = vpop.f32.mrf.mxu0
      %v2727 = vadd.f32 0.0, %v2726
      %v2728 = vpop.f32.mrf.mxu0
      %v2729 = vadd.f32 0.0, %v2728
      %2730 = vdwg.mxu0
      %v2733 = vunpack.c.l.b16 %v2691
      %v2734 = vunpack.c.l.b16 %v2692
      %v2735 = vpack.c.b16 %v2734, %v2733
      %v2738 = vunpack.c.l.b16 %v2695
      %v2739 = vunpack.c.l.b16 %v2696
      %v2740 = vpack.c.b16 %v2739, %v2738
      %v2742 = vsel %vm1245, %v2735, 0
      %v2745 = vsel %vm1245, %v2740, 0
      %2747 = vmatpush.bf16.xpose.msra.mxu0 0
      %2748 = vmatpush.bf16.xpose.msra.mxu0 0
      %2749 = vmatpush.bf16.xpose.msra.mxu0 0
      %2750 = vmatpush.bf16.xpose.msra.mxu0 0
      %2751 = vmatpush.bf16.xpose.msra.mxu0 0
      %2752 = vmatpush.bf16.xpose.msra.mxu0 0
      %2753 = vmatpush.bf16.xpose.msra.mxu0 0
      %2754 = vmatpush.bf16.xpose.msra.mxu0 %v2745
      %2755 = vmatmul.bf16.gmra.mxu0 %v2742
      %v2756 = vpop.f32.mrf.mxu0
      %v2757 = vadd.f32 0.0, %v2756
      %v2758 = vpop.f32.mrf.mxu0
      %v2759 = vadd.f32 0.0, %v2758
      %2760 = vdwg.mxu0
      %v2761 = vsel %vm1296, %v2727, -inf
      %2762 = vmax.xlane.f32.xlu0 %v2761
      %v2763 = vpop.xlane.xlu0 %2762
      %v2764 = vsel %vm1296, %v2729, -inf
      %2765 = vmax.xlane.f32.xlu0 %v2764
      %v2766 = vpop.xlane.xlu0 %2765
      %v2767 = vsel %vm1296, %v2757, -inf
      %2768 = vmax.xlane.f32.xlu0 %v2767
      %v2769 = vpop.xlane.xlu0 %2768
      %v2770 = vsel %vm1296, %v2759, -inf
      %2771 = vmax.xlane.f32.xlu0 %v2770
      %v2772 = vpop.xlane.xlu0 %2771
      %v2773 = vsub.f32 %v2727, %v2763
      %v2774 = vsub.f32 %v2729, %v2766
      %v2775 = vsub.f32 %v2757, %v2769
      %v2776 = vsub.f32 %v2759, %v2772
      %v2777 = vmul.f32 %v2773, 1.442695
      %v2778 = vpow.pop %v2777
      %v2779 = vmul.f32 %v2774, 1.442695
      %v2780 = vpow.pop %v2779
      %v2781 = vmul.f32 %v2775, 1.442695
      %v2782 = vpow.pop %v2781
      %v2783 = vmul.f32 %v2776, 1.442695
      %v2784 = vpow.pop %v2783
      %v2785 = vsel %vm1296, %v2778, 0.0
      %2786 = vadd.xlane.f32.xlu0 %v2785
      %v2787 = vpop.xlane.xlu0 %2786
      %v2788 = vsel %vm1296, %v2780, 0.0
      %2789 = vadd.xlane.f32.xlu0 %v2788
      %v2790 = vpop.xlane.xlu0 %2789
      %v2791 = vsel %vm1296, %v2782, 0.0
      %2792 = vadd.xlane.f32.xlu0 %v2791
      %v2793 = vpop.xlane.xlu0 %2792
      %v2794 = vsel %vm1296, %v2784, 0.0
      %2795 = vadd.xlane.f32.xlu0 %v2794
      %v2796 = vpop.xlane.xlu0 %2795
      %v2797 = vrcp.pop %v2787
      %v2798 = vrcp.pop %v2790
      %v2799 = vrcp.pop %v2793
      %v2800 = vrcp.pop %v2796
      %v2801 = vmul.f32 %v2778, %v2797
      %v2802 = vmul.f32 %v2780, %v2798
      %v2803 = vmul.f32 %v2782, %v2799
      %v2804 = vmul.f32 %v2784, %v2800
      %v2805 = vpack.c.bf16 %v2801, %v2801
      %v2806 = vpack.c.bf16 %v2802, %v2802
      %v2807 = vpack.c.bf16 %v2803, %v2803
      %v2808 = vpack.c.bf16 %v2804, %v2804
      %v2811 = vunpack.c.l.b16 %v2805
      %v2812 = vunpack.c.l.b16 %v2806
      %v2813 = vpack.c.b16 %v2812, %v2811
      %v2816 = vunpack.c.l.b16 %v2697
      %v2817 = vunpack.c.l.b16 %v2698
      %v2818 = vpack.c.b16 %v2817, %v2816
      %v2821 = vsel %vm1296, %v2813, 0
      %2823 = vmatpush.bf16.msra.mxu0 0
      %2824 = vmatpush.bf16.msra.mxu0 0
      %2825 = vmatpush.bf16.msra.mxu0 0
      %2826 = vmatpush.bf16.msra.mxu0 0
      %2827 = vmatpush.bf16.msra.mxu0 0
      %2828 = vmatpush.bf16.msra.mxu0 0
      %2829 = vmatpush.bf16.msra.mxu0 0
      %2830 = vmatpush.bf16.msra.mxu0 %v2818
      %2831 = vmatmul.bf16.gmra.mxu0 %v2821
      %v2832 = vpop.f32.mrf.mxu0
      %v2833 = vadd.f32 0.0, %v2832
      %v2834 = vpop.f32.mrf.mxu0
      %v2835 = vadd.f32 0.0, %v2834
      %2836 = vdwg.mxu0
      %v2839 = vunpack.c.l.b16 %v2807
      %v2840 = vunpack.c.l.b16 %v2808
      %v2841 = vpack.c.b16 %v2840, %v2839
      %v2844 = vunpack.c.l.b16 %v2699
      %v2845 = vunpack.c.l.b16 %v2700
      %v2846 = vpack.c.b16 %v2845, %v2844
      %v2849 = vsel %vm1296, %v2841, 0
      %2851 = vmatpush.bf16.msra.mxu0 0
      %2852 = vmatpush.bf16.msra.mxu0 0
      %2853 = vmatpush.bf16.msra.mxu0 0
      %2854 = vmatpush.bf16.msra.mxu0 0
      %2855 = vmatpush.bf16.msra.mxu0 0
      %2856 = vmatpush.bf16.msra.mxu0 0
      %2857 = vmatpush.bf16.msra.mxu0 0
      %2858 = vmatpush.bf16.msra.mxu0 %v2846
      %2859 = vmatmul.bf16.gmra.mxu0 %v2849
      %v2860 = vpop.f32.mrf.mxu0
      %v2861 = vadd.f32 0.0, %v2860
      %v2862 = vpop.f32.mrf.mxu0
      %v2863 = vadd.f32 0.0, %v2862
      %2864 = vdwg.mxu0
      %v2865 = vpack.c.bf16 %v2835, %v2833
      %v2866 = vpack.c.bf16 %v2863, %v2861
      %s2867 = scalar_lea.vmem %s803, 48
      %v2868 = vld [vmem:[%s2867] sm:$0xf]
      %v2869 = vld [vmem:[%s2867 + $0x4] sm:$0xf]
      %v2870 = vld [vmem:[%s2867 + $0x8] sm:$0xf]
      %v2871 = vld [vmem:[%s2867 + $0xc] sm:$0xf]
      %v2876 = vunpack.c.l.b16 %v2868
      %v2877 = vunpack.c.l.b16 %v2869
      %v2878 = vunpack.c.l.b16 %v2870
      %v2879 = vunpack.c.l.b16 %v2871
      %v2880 = vpack.c.b16 %v2877, %v2876
      %v2881 = vpack.c.b16 %v2879, %v2878
      %v2885 = vsel %vm1245, %v2865, 0
      %v2888 = vsel %vm1245, %v2866, 0
      %2890 = vmatpush.bf16.msra.mxu0 0
      %2891 = vmatpush.bf16.msra.mxu0 0
      %2892 = vmatpush.bf16.msra.mxu0 0
      %2893 = vmatpush.bf16.msra.mxu0 0
      %2894 = vmatpush.bf16.msra.mxu0 0
      %2895 = vmatpush.bf16.msra.mxu0 0
      %2896 = vmatpush.bf16.msra.mxu0 %v2881
      %2897 = vmatpush.bf16.msra.mxu0 %v2880
      %2898 = vmatmul.bf16.gmra.mxu0 %v2885
      %v2899 = vpop.f32.mrf.mxu0
      %v2900 = vadd.f32 0.0, %v2899
      %v2901 = vpop.f32.mrf.mxu0
      %v2902 = vadd.f32 0.0, %v2901
      %2903 = vmatmul.bf16.gmra.mxu0 %v2888
      %v2904 = vpop.f32.mrf.mxu0
      %v2905 = vadd.f32 0.0, %v2904
      %v2906 = vpop.f32.mrf.mxu0
      %v2907 = vadd.f32 0.0, %v2906
      %2908 = vdwg.mxu0
      %v2909 = vadd.f32 %v2418, %v2900
      %v2910 = vadd.f32 %v2419, %v2902
      %v2911 = vadd.f32 %v2420, %v2905
      %v2912 = vadd.f32 %v2421, %v2907
      %v2913 = vadd.f32 %v853, %v2909
      %v2914 = vadd.f32 %v854, %v2910
      %v2915 = vadd.f32 %v855, %v2911
      %v2916 = vadd.f32 %v856, %v2912
      %v2917 = vld [vmem:[%s806] sm:$0x1]
      %v2919 = vperm.slane %v2917, 0
      %v2921 = vadd.f32 %v2913, %v2919
      %v2922 = vadd.f32 %v2914, %v2919
      %v2923 = vadd.f32 %v2915, %v2919
      %v2924 = vadd.f32 %v2916, %v2919
      %v2925 = vld [vmem:[%s809] sm:$0x1]
      %v2926 = vld [vmem:[%s812] sm:$0x1]
      %2927 = vadd.xlane.f32.xlu0 %v2921
      %v2928 = vpop.xlane.xlu0 %2927
      %2929 = vadd.xlane.f32.xlu0 %v2922
      %v2930 = vpop.xlane.xlu0 %2929
      %2931 = vadd.xlane.f32.xlu0 %v2923
      %v2932 = vpop.xlane.xlu0 %2931
      %2933 = vadd.xlane.f32.xlu0 %v2924
      %v2934 = vpop.xlane.xlu0 %2933
      %v2935 = vmul.f32 %v2928, %v873
      %v2936 = vmul.f32 %v2930, %v873
      %v2937 = vmul.f32 %v2932, %v873
      %v2938 = vmul.f32 %v2934, %v873
      %v2939 = vsub.f32 %v2921, %v2935
      %v2940 = vsub.f32 %v2922, %v2936
      %v2941 = vsub.f32 %v2923, %v2937
      %v2942 = vsub.f32 %v2924, %v2938
      %v2943 = vmul.f32 %v2939, %v2939
      %v2944 = vmul.f32 %v2940, %v2940
      %v2945 = vmul.f32 %v2941, %v2941
      %v2946 = vmul.f32 %v2942, %v2942
      %2947 = vadd.xlane.f32.xlu0 %v2943
      %v2948 = vpop.xlane.xlu0 %2947
      %2949 = vadd.xlane.f32.xlu0 %v2944
      %v2950 = vpop.xlane.xlu0 %2949
      %2951 = vadd.xlane.f32.xlu0 %v2945
      %v2952 = vpop.xlane.xlu0 %2951
      %2953 = vadd.xlane.f32.xlu0 %v2946
      %v2954 = vpop.xlane.xlu0 %2953
      %v2955 = vmul.f32 %v2948, %v873
      %v2956 = vmul.f32 %v2950, %v873
      %v2957 = vmul.f32 %v2952, %v873
      %v2958 = vmul.f32 %v2954, %v873
      %v2959 = vadd.f32 %v2955, 1e-05
      %v2960 = vadd.f32 %v2956, 1e-05
      %v2961 = vadd.f32 %v2957, 1e-05
      %v2962 = vadd.f32 %v2958, 1e-05
      %v2963 = vrsqrt.pop %v2959
      %v2964 = vmul.f32 %v2963, %v2959
      %v2965 = vmul.f32 %v2964, %v2963
      %v2966 = vmul.f32 0.5, %v2965
      %v2967 = vsub.f32 1.5, %v2966
      %v2968 = vmul.f32 %v2963, %v2967
      %vm2969 = vweird.f32 %v2959
      %vm2970 = vweird.f32 %v2963
      %vm2971 = vmor %vm2969, %vm2970
      %v2972 = vsel %vm2971, %v2963, %v2968
      %v2973 = vrsqrt.pop %v2960
      %v2974 = vmul.f32 %v2973, %v2960
      %v2975 = vmul.f32 %v2974, %v2973
      %v2976 = vmul.f32 0.5, %v2975
      %v2977 = vsub.f32 1.5, %v2976
      %v2978 = vmul.f32 %v2973, %v2977
      %vm2979 = vweird.f32 %v2960
      %vm2980 = vweird.f32 %v2973
      %vm2981 = vmor %vm2979, %vm2980
      %v2982 = vsel %vm2981, %v2973, %v2978
      %v2983 = vrsqrt.pop %v2961
      %v2984 = vmul.f32 %v2983, %v2961
      %v2985 = vmul.f32 %v2984, %v2983
      %v2986 = vmul.f32 0.5, %v2985
      %v2987 = vsub.f32 1.5, %v2986
      %v2988 = vmul.f32 %v2983, %v2987
      %vm2989 = vweird.f32 %v2961
      %vm2990 = vweird.f32 %v2983
      %vm2991 = vmor %vm2989, %vm2990
      %v2992 = vsel %vm2991, %v2983, %v2988
      %v2993 = vrsqrt.pop %v2962
      %v2994 = vmul.f32 %v2993, %v2962
      %v2995 = vmul.f32 %v2994, %v2993
      %v2996 = vmul.f32 0.5, %v2995
      %v2997 = vsub.f32 1.5, %v2996
      %v2998 = vmul.f32 %v2993, %v2997
      %vm2999 = vweird.f32 %v2962
      %vm3000 = vweird.f32 %v2993
      %vm3001 = vmor %vm2999, %vm3000
      %v3002 = vsel %vm3001, %v2993, %v2998
      %v3003 = vmul.f32 %v2939, %v2972
      %v3004 = vmul.f32 %v2940, %v2982
      %v3005 = vmul.f32 %v2941, %v2992
      %v3006 = vmul.f32 %v2942, %v3002
      %v3008 = vperm.slane %v2925, 0
      %v3010 = vmul.f32 %v3003, %v3008
      %v3011 = vmul.f32 %v3004, %v3008
      %v3012 = vmul.f32 %v3005, %v3008
      %v3013 = vmul.f32 %v3006, %v3008
      %v3015 = vperm.slane %v2926, 0
      %v3017 = vadd.f32 %v3010, %v3015
      %v3018 = vadd.f32 %v3011, %v3015
      %v3019 = vadd.f32 %v3012, %v3015
      %v3020 = vadd.f32 %v3013, %v3015
      %v3021 = vpack.c.bf16 %v3018, %v3017
      %v3022 = vpack.c.bf16 %v3020, %v3019
      %v3023 = vld [vmem:[%s817] sm:$0xff]
      %v3024 = vld [vmem:[%s817 + $0x8] sm:$0xff]
      %v3025 = vld [vmem:[%s817 + $0x10] sm:$0xff]
      %v3026 = vld [vmem:[%s817 + $0x18] sm:$0xff]
      %v3027 = vld [vmem:[%s817 + $0x20] sm:$0xff]
      %v3028 = vld [vmem:[%s817 + $0x28] sm:$0xff]
      %v3029 = vld [vmem:[%s817 + $0x30] sm:$0xff]
      %v3030 = vld [vmem:[%s817 + $0x38] sm:$0xff]
      %v3031 = vld [vmem:[%s817 + $0x40] sm:$0xff]
      %v3032 = vld [vmem:[%s817 + $0x48] sm:$0xff]
      %v3033 = vld [vmem:[%s817 + $0x50] sm:$0xff]
      %v3034 = vld [vmem:[%s817 + $0x58] sm:$0xff]
      %v3035 = vld [vmem:[%s817 + $0x60] sm:$0xff]
      %v3036 = vld [vmem:[%s817 + $0x68] sm:$0xff]
      %v3037 = vld [vmem:[%s817 + $0x70] sm:$0xff]
      %v3038 = vld [vmem:[%s817 + $0x78] sm:$0xff]
      %v3039 = vld [vmem:[%s817 + $0x80] sm:$0xff]
      %v3040 = vld [vmem:[%s817 + $0x88] sm:$0xff]
      %v3041 = vld [vmem:[%s817 + $0x90] sm:$0xff]
      %v3042 = vld [vmem:[%s817 + $0x98] sm:$0xff]
      %v3043 = vld [vmem:[%s817 + $0xa0] sm:$0xff]
      %v3044 = vld [vmem:[%s817 + $0xa8] sm:$0xff]
      %v3045 = vld [vmem:[%s817 + $0xb0] sm:$0xff]
      %v3046 = vld [vmem:[%s817 + $0xb8] sm:$0xff]
      %v3047 = vld [vmem:[%s817 + $0xc0] sm:$0xff]
      %v3048 = vld [vmem:[%s817 + $0xc8] sm:$0xff]
      %v3049 = vld [vmem:[%s817 + $0xd0] sm:$0xff]
      %v3050 = vld [vmem:[%s817 + $0xd8] sm:$0xff]
      %v3051 = vld [vmem:[%s817 + $0xe0] sm:$0xff]
      %v3052 = vld [vmem:[%s817 + $0xe8] sm:$0xff]
      %v3053 = vld [vmem:[%s817 + $0xf0] sm:$0xff]
      %v3054 = vld [vmem:[%s817 + $0xf8] sm:$0xff]
      %v3055 = vld [vmem:[%s821] sm:$0xf]
      %v3057 = vperm.slane %v3055, 0
      %v3058 = vperm.slane %v3055, 1
      %v3059 = vperm.slane %v3055, 2
      %v3060 = vperm.slane %v3055, 3
      %v3097 = vunpack.c.l.b16 %v3023
      %v3098 = vunpack.c.h.b16 %v3023
      %v3099 = vunpack.c.l.b16 %v3024
      %v3100 = vunpack.c.h.b16 %v3024
      %v3101 = vunpack.c.l.b16 %v3025
      %v3102 = vunpack.c.h.b16 %v3025
      %v3103 = vunpack.c.l.b16 %v3026
      %v3104 = vunpack.c.h.b16 %v3026
      %v3105 = vunpack.c.l.b16 %v3027
      %v3106 = vunpack.c.h.b16 %v3027
      %v3107 = vunpack.c.l.b16 %v3028
      %v3108 = vunpack.c.h.b16 %v3028
      %v3109 = vunpack.c.l.b16 %v3029
      %v3110 = vunpack.c.h.b16 %v3029
      %v3111 = vunpack.c.l.b16 %v3030
      %v3112 = vunpack.c.h.b16 %v3030
      %v3113 = vunpack.c.l.b16 %v3031
      %v3114 = vunpack.c.h.b16 %v3031
      %v3115 = vunpack.c.l.b16 %v3032
      %v3116 = vunpack.c.h.b16 %v3032
      %v3117 = vunpack.c.l.b16 %v3033
      %v3118 = vunpack.c.h.b16 %v3033
      %v3119 = vunpack.c.l.b16 %v3034
      %v3120 = vunpack.c.h.b16 %v3034
      %v3121 = vunpack.c.l.b16 %v3035
      %v3122 = vunpack.c.h.b16 %v3035
      %v3123 = vunpack.c.l.b16 %v3036
      %v3124 = vunpack.c.h.b16 %v3036
      %v3125 = vunpack.c.l.b16 %v3037
      %v3126 = vunpack.c.h.b16 %v3037
      %v3127 = vunpack.c.l.b16 %v3038
      %v3128 = vunpack.c.h.b16 %v3038
      %v3129 = vunpack.c.l.b16 %v3039
      %v3130 = vunpack.c.h.b16 %v3039
      %v3131 = vunpack.c.l.b16 %v3040
      %v3132 = vunpack.c.h.b16 %v3040
      %v3133 = vunpack.c.l.b16 %v3041
      %v3134 = vunpack.c.h.b16 %v3041
      %v3135 = vunpack.c.l.b16 %v3042
      %v3136 = vunpack.c.h.b16 %v3042
      %v3137 = vunpack.c.l.b16 %v3043
      %v3138 = vunpack.c.h.b16 %v3043
      %v3139 = vunpack.c.l.b16 %v3044
      %v3140 = vunpack.c.h.b16 %v3044
      %v3141 = vunpack.c.l.b16 %v3045
      %v3142 = vunpack.c.h.b16 %v3045
      %v3143 = vunpack.c.l.b16 %v3046
      %v3144 = vunpack.c.h.b16 %v3046
      %v3145 = vunpack.c.l.b16 %v3047
      %v3146 = vunpack.c.h.b16 %v3047
      %v3147 = vunpack.c.l.b16 %v3048
      %v3148 = vunpack.c.h.b16 %v3048
      %v3149 = vunpack.c.l.b16 %v3049
      %v3150 = vunpack.c.h.b16 %v3049
      %v3151 = vunpack.c.l.b16 %v3050
      %v3152 = vunpack.c.h.b16 %v3050
      %v3153 = vunpack.c.l.b16 %v3051
      %v3154 = vunpack.c.h.b16 %v3051
      %v3155 = vunpack.c.l.b16 %v3052
      %v3156 = vunpack.c.h.b16 %v3052
      %v3157 = vunpack.c.l.b16 %v3053
      %v3158 = vunpack.c.h.b16 %v3053
      %v3159 = vunpack.c.l.b16 %v3054
      %v3160 = vunpack.c.h.b16 %v3054
      %v3161 = vpack.c.b16 %v3101, %v3097
      %v3162 = vpack.c.b16 %v3102, %v3098
      %v3163 = vpack.c.b16 %v3103, %v3099
      %v3164 = vpack.c.b16 %v3104, %v3100
      %v3165 = vpack.c.b16 %v3109, %v3105
      %v3166 = vpack.c.b16 %v3110, %v3106
      %v3167 = vpack.c.b16 %v3111, %v3107
      %v3168 = vpack.c.b16 %v3112, %v3108
      %v3169 = vpack.c.b16 %v3117, %v3113
      %v3170 = vpack.c.b16 %v3118, %v3114
      %v3171 = vpack.c.b16 %v3119, %v3115
      %v3172 = vpack.c.b16 %v3120, %v3116
      %v3173 = vpack.c.b16 %v3125, %v3121
      %v3174 = vpack.c.b16 %v3126, %v3122
      %v3175 = vpack.c.b16 %v3127, %v3123
      %v3176 = vpack.c.b16 %v3128, %v3124
      %v3177 = vpack.c.b16 %v3133, %v3129
      %v3178 = vpack.c.b16 %v3134, %v3130
      %v3179 = vpack.c.b16 %v3135, %v3131
      %v3180 = vpack.c.b16 %v3136, %v3132
      %v3181 = vpack.c.b16 %v3141, %v3137
      %v3182 = vpack.c.b16 %v3142, %v3138
      %v3183 = vpack.c.b16 %v3143, %v3139
      %v3184 = vpack.c.b16 %v3144, %v3140
      %v3185 = vpack.c.b16 %v3149, %v3145
      %v3186 = vpack.c.b16 %v3150, %v3146
      %v3187 = vpack.c.b16 %v3151, %v3147
      %v3188 = vpack.c.b16 %v3152, %v3148
      %v3189 = vpack.c.b16 %v3157, %v3153
      %v3190 = vpack.c.b16 %v3158, %v3154
      %v3191 = vpack.c.b16 %v3159, %v3155
      %v3192 = vpack.c.b16 %v3160, %v3156
      %3225 = vmatpush.bf16.msra.mxu0 %v3189
      %3226 = vmatpush.bf16.msra.mxu0 %v3185
      %3227 = vmatpush.bf16.msra.mxu0 %v3181
      %3228 = vmatpush.bf16.msra.mxu0 %v3177
      %3229 = vmatpush.bf16.msra.mxu0 %v3173
      %3230 = vmatpush.bf16.msra.mxu0 %v3169
      %3231 = vmatpush.bf16.msra.mxu0 %v3165
      %3232 = vmatpush.bf16.msra.mxu0 %v3161
      %3233 = vmatmul.bf16.gmra.mxu0 %v3021
      %v3234 = vpop.f32.mrf.mxu0
      %v3235 = vadd.f32 %v3057, %v3234
      %v3236 = vpop.f32.mrf.mxu0
      %v3237 = vadd.f32 %v3057, %v3236
      %3238 = vmatmul.bf16.gmra.mxu0 %v3022
      %v3239 = vpop.f32.mrf.mxu0
      %v3240 = vadd.f32 %v3057, %v3239
      %v3241 = vpop.f32.mrf.mxu0
      %v3242 = vadd.f32 %v3057, %v3241
      %3243 = vdwg.mxu0
      %3244 = vmatpush.bf16.msra.mxu0 %v3190
      %3245 = vmatpush.bf16.msra.mxu0 %v3186
      %3246 = vmatpush.bf16.msra.mxu0 %v3182
      %3247 = vmatpush.bf16.msra.mxu0 %v3178
      %3248 = vmatpush.bf16.msra.mxu0 %v3174
      %3249 = vmatpush.bf16.msra.mxu0 %v3170
      %3250 = vmatpush.bf16.msra.mxu0 %v3166
      %3251 = vmatpush.bf16.msra.mxu0 %v3162
      %3252 = vmatmul.bf16.gmra.mxu0 %v3021
      %v3253 = vpop.f32.mrf.mxu0
      %v3254 = vadd.f32 %v3058, %v3253
      %v3255 = vpop.f32.mrf.mxu0
      %v3256 = vadd.f32 %v3058, %v3255
      %3257 = vmatmul.bf16.gmra.mxu0 %v3022
      %v3258 = vpop.f32.mrf.mxu0
      %v3259 = vadd.f32 %v3058, %v3258
      %v3260 = vpop.f32.mrf.mxu0
      %v3261 = vadd.f32 %v3058, %v3260
      %3262 = vdwg.mxu0
      %3263 = vmatpush.bf16.msra.mxu0 %v3191
      %3264 = vmatpush.bf16.msra.mxu0 %v3187
      %3265 = vmatpush.bf16.msra.mxu0 %v3183
      %3266 = vmatpush.bf16.msra.mxu0 %v3179
      %3267 = vmatpush.bf16.msra.mxu0 %v3175
      %3268 = vmatpush.bf16.msra.mxu0 %v3171
      %3269 = vmatpush.bf16.msra.mxu0 %v3167
      %3270 = vmatpush.bf16.msra.mxu0 %v3163
      %3271 = vmatmul.bf16.gmra.mxu0 %v3021
      %v3272 = vpop.f32.mrf.mxu0
      %v3273 = vadd.f32 %v3059, %v3272
      %v3274 = vpop.f32.mrf.mxu0
      %v3275 = vadd.f32 %v3059, %v3274
      %3276 = vmatmul.bf16.gmra.mxu0 %v3022
      %v3277 = vpop.f32.mrf.mxu0
      %v3278 = vadd.f32 %v3059, %v3277
      %v3279 = vpop.f32.mrf.mxu0
      %v3280 = vadd.f32 %v3059, %v3279
      %3281 = vdwg.mxu0
      %3282 = vmatpush.bf16.msra.mxu0 %v3192
      %3283 = vmatpush.bf16.msra.mxu0 %v3188
      %3284 = vmatpush.bf16.msra.mxu0 %v3184
      %3285 = vmatpush.bf16.msra.mxu0 %v3180
      %3286 = vmatpush.bf16.msra.mxu0 %v3176
      %3287 = vmatpush.bf16.msra.mxu0 %v3172
      %3288 = vmatpush.bf16.msra.mxu0 %v3168
      %3289 = vmatpush.bf16.msra.mxu0 %v3164
      %3290 = vmatmul.bf16.gmra.mxu0 %v3021
      %v3291 = vpop.f32.mrf.mxu0
      %v3292 = vadd.f32 %v3060, %v3291
      %v3293 = vpop.f32.mrf.mxu0
      %v3294 = vadd.f32 %v3060, %v3293
      %3295 = vmatmul.bf16.gmra.mxu0 %v3022
      %v3296 = vpop.f32.mrf.mxu0
      %v3297 = vadd.f32 %v3060, %v3296
      %v3298 = vpop.f32.mrf.mxu0
      %v3299 = vadd.f32 %v3060, %v3298
      %3300 = vdwg.mxu0
      %v3301 = vmul.f32 %v3235, 0.5
      %v3302 = vmul.f32 %v3254, 0.5
      %v3303 = vmul.f32 %v3273, 0.5
      %v3304 = vmul.f32 %v3292, 0.5
      %v3305 = vmul.f32 %v3237, 0.5
      %v3306 = vmul.f32 %v3256, 0.5
      %v3307 = vmul.f32 %v3275, 0.5
      %v3308 = vmul.f32 %v3294, 0.5
      %v3309 = vmul.f32 %v3240, 0.5
      %v3310 = vmul.f32 %v3259, 0.5
      %v3311 = vmul.f32 %v3278, 0.5
      %v3312 = vmul.f32 %v3297, 0.5
      %v3313 = vmul.f32 %v3242, 0.5
      %v3314 = vmul.f32 %v3261, 0.5
      %v3315 = vmul.f32 %v3280, 0.5
      %v3316 = vmul.f32 %v3299, 0.5
      %v3317 = vmul.f32 %v3235, 0.70710677
      %v3318 = vmul.f32 %v3254, 0.70710677
      %v3319 = vmul.f32 %v3273, 0.70710677
      %v3320 = vmul.f32 %v3292, 0.70710677
      %v3321 = vmul.f32 %v3237, 0.70710677
      %v3322 = vmul.f32 %v3256, 0.70710677
      %v3323 = vmul.f32 %v3275, 0.70710677
      %v3324 = vmul.f32 %v3294, 0.70710677
      %v3325 = vmul.f32 %v3240, 0.70710677
      %v3326 = vmul.f32 %v3259, 0.70710677
      %v3327 = vmul.f32 %v3278, 0.70710677
      %v3328 = vmul.f32 %v3297, 0.70710677
      %v3329 = vmul.f32 %v3242, 0.70710677
      %v3330 = vmul.f32 %v3261, 0.70710677
      %v3331 = vmul.f32 %v3280, 0.70710677
      %v3332 = vmul.f32 %v3299, 0.70710677
      %v3333 = vmul.f32 %v3317, %v3317
      %v3334 = vmin.f32 16.0, %v3333
      %v3335 = vmul.f32 %v3334, 2.1237322e-06
      %v3336 = vadd.f32 %v3335, 0.00028619796
      %v3337 = vmul.f32 %v3334, %v3336
      %v3338 = vadd.f32 %v3337, 0.0036580483
      %v3339 = vmul.f32 %v3334, %v3338
      %v3340 = vadd.f32 %v3339, 0.05243302
      %v3341 = vmul.f32 %v3334, %v3340
      %v3342 = vadd.f32 %v3341, 0.18741608
      %v3343 = vmul.f32 %v3334, %v3342
      %v3344 = vadd.f32 %v3343, 1.1283791
      %v3345 = vmul.f32 %v3317, %v3344
      %v3346 = vmul.f32 %v3334, 3.8918573e-05
      %v3347 = vadd.f32 %v3346, 0.001143296
      %v3348 = vmul.f32 %v3334, %v3347
      %v3349 = vadd.f32 %v3348, 0.014752088
      %v3350 = vmul.f32 %v3334, %v3349
      %v3351 = vadd.f32 %v3350, 0.112945676
      %v3352 = vmul.f32 %v3334, %v3351
      %v3353 = vadd.f32 %v3352, 0.4994258
      %v3354 = vmul.f32 %v3334, %v3353
      %v3355 = vadd.f32 %v3354, 1.0
      %v3356 = vrcp.pop %v3355
      %v3357 = vmul.f32 %v3355, %v3356
      %v3358 = vsub.f32 1.0, %v3357
      %v3359 = vmul.f32 %v3356, %v3358
      %v3360 = vadd.f32 %v3356, %v3359
      %vm3361 = vweird.f32 %v3355
      %vm3362 = vweird.f32 %v3356
      %vm3363 = vmor %vm3361, %vm3362
      %v3364 = vsel %vm3363, %v3356, %v3360
      %v3365 = vand.u32 2147483647, %v3355
      %vm3366 = vcmp.eq.f32.partialorder %v3365, 8.507059e+37
      %v3367 = vand.u32 %v3355, 2147483648
      %v3368 = vor.u32 1.1754944e-38, %v3367
      %v3369 = vsel %vm3366, %v3368, %v3364
      %v3370 = vmul.f32 %v3345, %v3369
      %v3371 = vmin.f32 %v3370, 1.0
      %v3372 = vmax.f32 %v3371, -1.0
      %v3373 = vmul.f32 %v3318, %v3318
      %v3374 = vmin.f32 16.0, %v3373
      %v3375 = vmul.f32 %v3374, 2.1237322e-06
      %v3376 = vadd.f32 %v3375, 0.00028619796
      %v3377 = vmul.f32 %v3374, %v3376
      %v3378 = vadd.f32 %v3377, 0.0036580483
      %v3379 = vmul.f32 %v3374, %v3378
      %v3380 = vadd.f32 %v3379, 0.05243302
      %v3381 = vmul.f32 %v3374, %v3380
      %v3382 = vadd.f32 %v3381, 0.18741608
      %v3383 = vmul.f32 %v3374, %v3382
      %v3384 = vadd.f32 %v3383, 1.1283791
      %v3385 = vmul.f32 %v3318, %v3384
      %v3386 = vmul.f32 %v3374, 3.8918573e-05
      %v3387 = vadd.f32 %v3386, 0.001143296
      %v3388 = vmul.f32 %v3374, %v3387
      %v3389 = vadd.f32 %v3388, 0.014752088
      %v3390 = vmul.f32 %v3374, %v3389
      %v3391 = vadd.f32 %v3390, 0.112945676
      %v3392 = vmul.f32 %v3374, %v3391
      %v3393 = vadd.f32 %v3392, 0.4994258
      %v3394 = vmul.f32 %v3374, %v3393
      %v3395 = vadd.f32 %v3394, 1.0
      %v3396 = vrcp.pop %v3395
      %v3397 = vmul.f32 %v3395, %v3396
      %v3398 = vsub.f32 1.0, %v3397
      %v3399 = vmul.f32 %v3396, %v3398
      %v3400 = vadd.f32 %v3396, %v3399
      %vm3401 = vweird.f32 %v3395
      %vm3402 = vweird.f32 %v3396
      %vm3403 = vmor %vm3401, %vm3402
      %v3404 = vsel %vm3403, %v3396, %v3400
      %v3405 = vand.u32 2147483647, %v3395
      %vm3406 = vcmp.eq.f32.partialorder %v3405, 8.507059e+37
      %v3407 = vand.u32 %v3395, 2147483648
      %v3408 = vor.u32 1.1754944e-38, %v3407
      %v3409 = vsel %vm3406, %v3408, %v3404
      %v3410 = vmul.f32 %v3385, %v3409
      %v3411 = vmin.f32 %v3410, 1.0
      %v3412 = vmax.f32 %v3411, -1.0
      %v3413 = vmul.f32 %v3319, %v3319
      %v3414 = vmin.f32 16.0, %v3413
      %v3415 = vmul.f32 %v3414, 2.1237322e-06
      %v3416 = vadd.f32 %v3415, 0.00028619796
      %v3417 = vmul.f32 %v3414, %v3416
      %v3418 = vadd.f32 %v3417, 0.0036580483
      %v3419 = vmul.f32 %v3414, %v3418
      %v3420 = vadd.f32 %v3419, 0.05243302
      %v3421 = vmul.f32 %v3414, %v3420
      %v3422 = vadd.f32 %v3421, 0.18741608
      %v3423 = vmul.f32 %v3414, %v3422
      %v3424 = vadd.f32 %v3423, 1.1283791
      %v3425 = vmul.f32 %v3319, %v3424
      %v3426 = vmul.f32 %v3414, 3.8918573e-05
      %v3427 = vadd.f32 %v3426, 0.001143296
      %v3428 = vmul.f32 %v3414, %v3427
      %v3429 = vadd.f32 %v3428, 0.014752088
      %v3430 = vmul.f32 %v3414, %v3429
      %v3431 = vadd.f32 %v3430, 0.112945676
      %v3432 = vmul.f32 %v3414, %v3431
      %v3433 = vadd.f32 %v3432, 0.4994258
      %v3434 = vmul.f32 %v3414, %v3433
      %v3435 = vadd.f32 %v3434, 1.0
      %v3436 = vrcp.pop %v3435
      %v3437 = vmul.f32 %v3435, %v3436
      %v3438 = vsub.f32 1.0, %v3437
      %v3439 = vmul.f32 %v3436, %v3438
      %v3440 = vadd.f32 %v3436, %v3439
      %vm3441 = vweird.f32 %v3435
      %vm3442 = vweird.f32 %v3436
      %vm3443 = vmor %vm3441, %vm3442
      %v3444 = vsel %vm3443, %v3436, %v3440
      %v3445 = vand.u32 2147483647, %v3435
      %vm3446 = vcmp.eq.f32.partialorder %v3445, 8.507059e+37
      %v3447 = vand.u32 %v3435, 2147483648
      %v3448 = vor.u32 1.1754944e-38, %v3447
      %v3449 = vsel %vm3446, %v3448, %v3444
      %v3450 = vmul.f32 %v3425, %v3449
      %v3451 = vmin.f32 %v3450, 1.0
      %v3452 = vmax.f32 %v3451, -1.0
      %v3453 = vmul.f32 %v3320, %v3320
      %v3454 = vmin.f32 16.0, %v3453
      %v3455 = vmul.f32 %v3454, 2.1237322e-06
      %v3456 = vadd.f32 %v3455, 0.00028619796
      %v3457 = vmul.f32 %v3454, %v3456
      %v3458 = vadd.f32 %v3457, 0.0036580483
      %v3459 = vmul.f32 %v3454, %v3458
      %v3460 = vadd.f32 %v3459, 0.05243302
      %v3461 = vmul.f32 %v3454, %v3460
      %v3462 = vadd.f32 %v3461, 0.18741608
      %v3463 = vmul.f32 %v3454, %v3462
      %v3464 = vadd.f32 %v3463, 1.1283791
      %v3465 = vmul.f32 %v3320, %v3464
      %v3466 = vmul.f32 %v3454, 3.8918573e-05
      %v3467 = vadd.f32 %v3466, 0.001143296
      %v3468 = vmul.f32 %v3454, %v3467
      %v3469 = vadd.f32 %v3468, 0.014752088
      %v3470 = vmul.f32 %v3454, %v3469
      %v3471 = vadd.f32 %v3470, 0.112945676
      %v3472 = vmul.f32 %v3454, %v3471
      %v3473 = vadd.f32 %v3472, 0.4994258
      %v3474 = vmul.f32 %v3454, %v3473
      %v3475 = vadd.f32 %v3474, 1.0
      %v3476 = vrcp.pop %v3475
      %v3477 = vmul.f32 %v3475, %v3476
      %v3478 = vsub.f32 1.0, %v3477
      %v3479 = vmul.f32 %v3476, %v3478
      %v3480 = vadd.f32 %v3476, %v3479
      %vm3481 = vweird.f32 %v3475
      %vm3482 = vweird.f32 %v3476
      %vm3483 = vmor %vm3481, %vm3482
      %v3484 = vsel %vm3483, %v3476, %v3480
      %v3485 = vand.u32 2147483647, %v3475
      %vm3486 = vcmp.eq.f32.partialorder %v3485, 8.507059e+37
      %v3487 = vand.u32 %v3475, 2147483648
      %v3488 = vor.u32 1.1754944e-38, %v3487
      %v3489 = vsel %vm3486, %v3488, %v3484
      %v3490 = vmul.f32 %v3465, %v3489
      %v3491 = vmin.f32 %v3490, 1.0
      %v3492 = vmax.f32 %v3491, -1.0
      %v3493 = vmul.f32 %v3321, %v3321
      %v3494 = vmin.f32 16.0, %v3493
      %v3495 = vmul.f32 %v3494, 2.1237322e-06
      %v3496 = vadd.f32 %v3495, 0.00028619796
      %v3497 = vmul.f32 %v3494, %v3496
      %v3498 = vadd.f32 %v3497, 0.0036580483
      %v3499 = vmul.f32 %v3494, %v3498
      %v3500 = vadd.f32 %v3499, 0.05243302
      %v3501 = vmul.f32 %v3494, %v3500
      %v3502 = vadd.f32 %v3501, 0.18741608
      %v3503 = vmul.f32 %v3494, %v3502
      %v3504 = vadd.f32 %v3503, 1.1283791
      %v3505 = vmul.f32 %v3321, %v3504
      %v3506 = vmul.f32 %v3494, 3.8918573e-05
      %v3507 = vadd.f32 %v3506, 0.001143296
      %v3508 = vmul.f32 %v3494, %v3507
      %v3509 = vadd.f32 %v3508, 0.014752088
      %v3510 = vmul.f32 %v3494, %v3509
      %v3511 = vadd.f32 %v3510, 0.112945676
      %v3512 = vmul.f32 %v3494, %v3511
      %v3513 = vadd.f32 %v3512, 0.4994258
      %v3514 = vmul.f32 %v3494, %v3513
      %v3515 = vadd.f32 %v3514, 1.0
      %v3516 = vrcp.pop %v3515
      %v3517 = vmul.f32 %v3515, %v3516
      %v3518 = vsub.f32 1.0, %v3517
      %v3519 = vmul.f32 %v3516, %v3518
      %v3520 = vadd.f32 %v3516, %v3519
      %vm3521 = vweird.f32 %v3515
      %vm3522 = vweird.f32 %v3516
      %vm3523 = vmor %vm3521, %vm3522
      %v3524 = vsel %vm3523, %v3516, %v3520
      %v3525 = vand.u32 2147483647, %v3515
      %vm3526 = vcmp.eq.f32.partialorder %v3525, 8.507059e+37
      %v3527 = vand.u32 %v3515, 2147483648
      %v3528 = vor.u32 1.1754944e-38, %v3527
      %v3529 = vsel %vm3526, %v3528, %v3524
      %v3530 = vmul.f32 %v3505, %v3529
      %v3531 = vmin.f32 %v3530, 1.0
      %v3532 = vmax.f32 %v3531, -1.0
      %v3533 = vmul.f32 %v3322, %v3322
      %v3534 = vmin.f32 16.0, %v3533
      %v3535 = vmul.f32 %v3534, 2.1237322e-06
      %v3536 = vadd.f32 %v3535, 0.00028619796
      %v3537 = vmul.f32 %v3534, %v3536
      %v3538 = vadd.f32 %v3537, 0.0036580483
      %v3539 = vmul.f32 %v3534, %v3538
      %v3540 = vadd.f32 %v3539, 0.05243302
      %v3541 = vmul.f32 %v3534, %v3540
      %v3542 = vadd.f32 %v3541, 0.18741608
      %v3543 = vmul.f32 %v3534, %v3542
      %v3544 = vadd.f32 %v3543, 1.1283791
      %v3545 = vmul.f32 %v3322, %v3544
      %v3546 = vmul.f32 %v3534, 3.8918573e-05
      %v3547 = vadd.f32 %v3546, 0.001143296
      %v3548 = vmul.f32 %v3534, %v3547
      %v3549 = vadd.f32 %v3548, 0.014752088
      %v3550 = vmul.f32 %v3534, %v3549
      %v3551 = vadd.f32 %v3550, 0.112945676
      %v3552 = vmul.f32 %v3534, %v3551
      %v3553 = vadd.f32 %v3552, 0.4994258
      %v3554 = vmul.f32 %v3534, %v3553
      %v3555 = vadd.f32 %v3554, 1.0
      %v3556 = vrcp.pop %v3555
      %v3557 = vmul.f32 %v3555, %v3556
      %v3558 = vsub.f32 1.0, %v3557
      %v3559 = vmul.f32 %v3556, %v3558
      %v3560 = vadd.f32 %v3556, %v3559
      %vm3561 = vweird.f32 %v3555
      %vm3562 = vweird.f32 %v3556
      %vm3563 = vmor %vm3561, %vm3562
      %v3564 = vsel %vm3563, %v3556, %v3560
      %v3565 = vand.u32 2147483647, %v3555
      %vm3566 = vcmp.eq.f32.partialorder %v3565, 8.507059e+37
      %v3567 = vand.u32 %v3555, 2147483648
      %v3568 = vor.u32 1.1754944e-38, %v3567
      %v3569 = vsel %vm3566, %v3568, %v3564
      %v3570 = vmul.f32 %v3545, %v3569
      %v3571 = vmin.f32 %v3570, 1.0
      %v3572 = vmax.f32 %v3571, -1.0
      %v3573 = vmul.f32 %v3323, %v3323
      %v3574 = vmin.f32 16.0, %v3573
      %v3575 = vmul.f32 %v3574, 2.1237322e-06
      %v3576 = vadd.f32 %v3575, 0.00028619796
      %v3577 = vmul.f32 %v3574, %v3576
      %v3578 = vadd.f32 %v3577, 0.0036580483
      %v3579 = vmul.f32 %v3574, %v3578
      %v3580 = vadd.f32 %v3579, 0.05243302
      %v3581 = vmul.f32 %v3574, %v3580
      %v3582 = vadd.f32 %v3581, 0.18741608
      %v3583 = vmul.f32 %v3574, %v3582
      %v3584 = vadd.f32 %v3583, 1.1283791
      %v3585 = vmul.f32 %v3323, %v3584
      %v3586 = vmul.f32 %v3574, 3.8918573e-05
      %v3587 = vadd.f32 %v3586, 0.001143296
      %v3588 = vmul.f32 %v3574, %v3587
      %v3589 = vadd.f32 %v3588, 0.014752088
      %v3590 = vmul.f32 %v3574, %v3589
      %v3591 = vadd.f32 %v3590, 0.112945676
      %v3592 = vmul.f32 %v3574, %v3591
      %v3593 = vadd.f32 %v3592, 0.4994258
      %v3594 = vmul.f32 %v3574, %v3593
      %v3595 = vadd.f32 %v3594, 1.0
      %v3596 = vrcp.pop %v3595
      %v3597 = vmul.f32 %v3595, %v3596
      %v3598 = vsub.f32 1.0, %v3597
      %v3599 = vmul.f32 %v3596, %v3598
      %v3600 = vadd.f32 %v3596, %v3599
      %vm3601 = vweird.f32 %v3595
      %vm3602 = vweird.f32 %v3596
      %vm3603 = vmor %vm3601, %vm3602
      %v3604 = vsel %vm3603, %v3596, %v3600
      %v3605 = vand.u32 2147483647, %v3595
      %vm3606 = vcmp.eq.f32.partialorder %v3605, 8.507059e+37
      %v3607 = vand.u32 %v3595, 2147483648
      %v3608 = vor.u32 1.1754944e-38, %v3607
      %v3609 = vsel %vm3606, %v3608, %v3604
      %v3610 = vmul.f32 %v3585, %v3609
      %v3611 = vmin.f32 %v3610, 1.0
      %v3612 = vmax.f32 %v3611, -1.0
      %v3613 = vmul.f32 %v3324, %v3324
      %v3614 = vmin.f32 16.0, %v3613
      %v3615 = vmul.f32 %v3614, 2.1237322e-06
      %v3616 = vadd.f32 %v3615, 0.00028619796
      %v3617 = vmul.f32 %v3614, %v3616
      %v3618 = vadd.f32 %v3617, 0.0036580483
      %v3619 = vmul.f32 %v3614, %v3618
      %v3620 = vadd.f32 %v3619, 0.05243302
      %v3621 = vmul.f32 %v3614, %v3620
      %v3622 = vadd.f32 %v3621, 0.18741608
      %v3623 = vmul.f32 %v3614, %v3622
      %v3624 = vadd.f32 %v3623, 1.1283791
      %v3625 = vmul.f32 %v3324, %v3624
      %v3626 = vmul.f32 %v3614, 3.8918573e-05
      %v3627 = vadd.f32 %v3626, 0.001143296
      %v3628 = vmul.f32 %v3614, %v3627
      %v3629 = vadd.f32 %v3628, 0.014752088
      %v3630 = vmul.f32 %v3614, %v3629
      %v3631 = vadd.f32 %v3630, 0.112945676
      %v3632 = vmul.f32 %v3614, %v3631
      %v3633 = vadd.f32 %v3632, 0.4994258
      %v3634 = vmul.f32 %v3614, %v3633
      %v3635 = vadd.f32 %v3634, 1.0
      %v3636 = vrcp.pop %v3635
      %v3637 = vmul.f32 %v3635, %v3636
      %v3638 = vsub.f32 1.0, %v3637
      %v3639 = vmul.f32 %v3636, %v3638
      %v3640 = vadd.f32 %v3636, %v3639
      %vm3641 = vweird.f32 %v3635
      %vm3642 = vweird.f32 %v3636
      %vm3643 = vmor %vm3641, %vm3642
      %v3644 = vsel %vm3643, %v3636, %v3640
      %v3645 = vand.u32 2147483647, %v3635
      %vm3646 = vcmp.eq.f32.partialorder %v3645, 8.507059e+37
      %v3647 = vand.u32 %v3635, 2147483648
      %v3648 = vor.u32 1.1754944e-38, %v3647
      %v3649 = vsel %vm3646, %v3648, %v3644
      %v3650 = vmul.f32 %v3625, %v3649
      %v3651 = vmin.f32 %v3650, 1.0
      %v3652 = vmax.f32 %v3651, -1.0
      %v3653 = vmul.f32 %v3325, %v3325
      %v3654 = vmin.f32 16.0, %v3653
      %v3655 = vmul.f32 %v3654, 2.1237322e-06
      %v3656 = vadd.f32 %v3655, 0.00028619796
      %v3657 = vmul.f32 %v3654, %v3656
      %v3658 = vadd.f32 %v3657, 0.0036580483
      %v3659 = vmul.f32 %v3654, %v3658
      %v3660 = vadd.f32 %v3659, 0.05243302
      %v3661 = vmul.f32 %v3654, %v3660
      %v3662 = vadd.f32 %v3661, 0.18741608
      %v3663 = vmul.f32 %v3654, %v3662
      %v3664 = vadd.f32 %v3663, 1.1283791
      %v3665 = vmul.f32 %v3325, %v3664
      %v3666 = vmul.f32 %v3654, 3.8918573e-05
      %v3667 = vadd.f32 %v3666, 0.001143296
      %v3668 = vmul.f32 %v3654, %v3667
      %v3669 = vadd.f32 %v3668, 0.014752088
      %v3670 = vmul.f32 %v3654, %v3669
      %v3671 = vadd.f32 %v3670, 0.112945676
      %v3672 = vmul.f32 %v3654, %v3671
      %v3673 = vadd.f32 %v3672, 0.4994258
      %v3674 = vmul.f32 %v3654, %v3673
      %v3675 = vadd.f32 %v3674, 1.0
      %v3676 = vrcp.pop %v3675
      %v3677 = vmul.f32 %v3675, %v3676
      %v3678 = vsub.f32 1.0, %v3677
      %v3679 = vmul.f32 %v3676, %v3678
      %v3680 = vadd.f32 %v3676, %v3679
      %vm3681 = vweird.f32 %v3675
      %vm3682 = vweird.f32 %v3676
      %vm3683 = vmor %vm3681, %vm3682
      %v3684 = vsel %vm3683, %v3676, %v3680
      %v3685 = vand.u32 2147483647, %v3675
      %vm3686 = vcmp.eq.f32.partialorder %v3685, 8.507059e+37
      %v3687 = vand.u32 %v3675, 2147483648
      %v3688 = vor.u32 1.1754944e-38, %v3687
      %v3689 = vsel %vm3686, %v3688, %v3684
      %v3690 = vmul.f32 %v3665, %v3689
      %v3691 = vmin.f32 %v3690, 1.0
      %v3692 = vmax.f32 %v3691, -1.0
      %v3693 = vmul.f32 %v3326, %v3326
      %v3694 = vmin.f32 16.0, %v3693
      %v3695 = vmul.f32 %v3694, 2.1237322e-06
      %v3696 = vadd.f32 %v3695, 0.00028619796
      %v3697 = vmul.f32 %v3694, %v3696
      %v3698 = vadd.f32 %v3697, 0.0036580483
      %v3699 = vmul.f32 %v3694, %v3698
      %v3700 = vadd.f32 %v3699, 0.05243302
      %v3701 = vmul.f32 %v3694, %v3700
      %v3702 = vadd.f32 %v3701, 0.18741608
      %v3703 = vmul.f32 %v3694, %v3702
      %v3704 = vadd.f32 %v3703, 1.1283791
      %v3705 = vmul.f32 %v3326, %v3704
      %v3706 = vmul.f32 %v3694, 3.8918573e-05
      %v3707 = vadd.f32 %v3706, 0.001143296
      %v3708 = vmul.f32 %v3694, %v3707
      %v3709 = vadd.f32 %v3708, 0.014752088
      %v3710 = vmul.f32 %v3694, %v3709
      %v3711 = vadd.f32 %v3710, 0.112945676
      %v3712 = vmul.f32 %v3694, %v3711
      %v3713 = vadd.f32 %v3712, 0.4994258
      %v3714 = vmul.f32 %v3694, %v3713
      %v3715 = vadd.f32 %v3714, 1.0
      %v3716 = vrcp.pop %v3715
      %v3717 = vmul.f32 %v3715, %v3716
      %v3718 = vsub.f32 1.0, %v3717
      %v3719 = vmul.f32 %v3716, %v3718
      %v3720 = vadd.f32 %v3716, %v3719
      %vm3721 = vweird.f32 %v3715
      %vm3722 = vweird.f32 %v3716
      %vm3723 = vmor %vm3721, %vm3722
      %v3724 = vsel %vm3723, %v3716, %v3720
      %v3725 = vand.u32 2147483647, %v3715
      %vm3726 = vcmp.eq.f32.partialorder %v3725, 8.507059e+37
      %v3727 = vand.u32 %v3715, 2147483648
      %v3728 = vor.u32 1.1754944e-38, %v3727
      %v3729 = vsel %vm3726, %v3728, %v3724
      %v3730 = vmul.f32 %v3705, %v3729
      %v3731 = vmin.f32 %v3730, 1.0
      %v3732 = vmax.f32 %v3731, -1.0
      %v3733 = vmul.f32 %v3327, %v3327
      %v3734 = vmin.f32 16.0, %v3733
      %v3735 = vmul.f32 %v3734, 2.1237322e-06
      %v3736 = vadd.f32 %v3735, 0.00028619796
      %v3737 = vmul.f32 %v3734, %v3736
      %v3738 = vadd.f32 %v3737, 0.0036580483
      %v3739 = vmul.f32 %v3734, %v3738
      %v3740 = vadd.f32 %v3739, 0.05243302
      %v3741 = vmul.f32 %v3734, %v3740
      %v3742 = vadd.f32 %v3741, 0.18741608
      %v3743 = vmul.f32 %v3734, %v3742
      %v3744 = vadd.f32 %v3743, 1.1283791
      %v3745 = vmul.f32 %v3327, %v3744
      %v3746 = vmul.f32 %v3734, 3.8918573e-05
      %v3747 = vadd.f32 %v3746, 0.001143296
      %v3748 = vmul.f32 %v3734, %v3747
      %v3749 = vadd.f32 %v3748, 0.014752088
      %v3750 = vmul.f32 %v3734, %v3749
      %v3751 = vadd.f32 %v3750, 0.112945676
      %v3752 = vmul.f32 %v3734, %v3751
      %v3753 = vadd.f32 %v3752, 0.4994258
      %v3754 = vmul.f32 %v3734, %v3753
      %v3755 = vadd.f32 %v3754, 1.0
      %v3756 = vrcp.pop %v3755
      %v3757 = vmul.f32 %v3755, %v3756
      %v3758 = vsub.f32 1.0, %v3757
      %v3759 = vmul.f32 %v3756, %v3758
      %v3760 = vadd.f32 %v3756, %v3759
      %vm3761 = vweird.f32 %v3755
      %vm3762 = vweird.f32 %v3756
      %vm3763 = vmor %vm3761, %vm3762
      %v3764 = vsel %vm3763, %v3756, %v3760
      %v3765 = vand.u32 2147483647, %v3755
      %vm3766 = vcmp.eq.f32.partialorder %v3765, 8.507059e+37
      %v3767 = vand.u32 %v3755, 2147483648
      %v3768 = vor.u32 1.1754944e-38, %v3767
      %v3769 = vsel %vm3766, %v3768, %v3764
      %v3770 = vmul.f32 %v3745, %v3769
      %v3771 = vmin.f32 %v3770, 1.0
      %v3772 = vmax.f32 %v3771, -1.0
      %v3773 = vmul.f32 %v3328, %v3328
      %v3774 = vmin.f32 16.0, %v3773
      %v3775 = vmul.f32 %v3774, 2.1237322e-06
      %v3776 = vadd.f32 %v3775, 0.00028619796
      %v3777 = vmul.f32 %v3774, %v3776
      %v3778 = vadd.f32 %v3777, 0.0036580483
      %v3779 = vmul.f32 %v3774, %v3778
      %v3780 = vadd.f32 %v3779, 0.05243302
      %v3781 = vmul.f32 %v3774, %v3780
      %v3782 = vadd.f32 %v3781, 0.18741608
      %v3783 = vmul.f32 %v3774, %v3782
      %v3784 = vadd.f32 %v3783, 1.1283791
      %v3785 = vmul.f32 %v3328, %v3784
      %v3786 = vmul.f32 %v3774, 3.8918573e-05
      %v3787 = vadd.f32 %v3786, 0.001143296
      %v3788 = vmul.f32 %v3774, %v3787
      %v3789 = vadd.f32 %v3788, 0.014752088
      %v3790 = vmul.f32 %v3774, %v3789
      %v3791 = vadd.f32 %v3790, 0.112945676
      %v3792 = vmul.f32 %v3774, %v3791
      %v3793 = vadd.f32 %v3792, 0.4994258
      %v3794 = vmul.f32 %v3774, %v3793
      %v3795 = vadd.f32 %v3794, 1.0
      %v3796 = vrcp.pop %v3795
      %v3797 = vmul.f32 %v3795, %v3796
      %v3798 = vsub.f32 1.0, %v3797
      %v3799 = vmul.f32 %v3796, %v3798
      %v3800 = vadd.f32 %v3796, %v3799
      %vm3801 = vweird.f32 %v3795
      %vm3802 = vweird.f32 %v3796
      %vm3803 = vmor %vm3801, %vm3802
      %v3804 = vsel %vm3803, %v3796, %v3800
      %v3805 = vand.u32 2147483647, %v3795
      %vm3806 = vcmp.eq.f32.partialorder %v3805, 8.507059e+37
      %v3807 = vand.u32 %v3795, 2147483648
      %v3808 = vor.u32 1.1754944e-38, %v3807
      %v3809 = vsel %vm3806, %v3808, %v3804
      %v3810 = vmul.f32 %v3785, %v3809
      %v3811 = vmin.f32 %v3810, 1.0
      %v3812 = vmax.f32 %v3811, -1.0
      %v3813 = vmul.f32 %v3329, %v3329
      %v3814 = vmin.f32 16.0, %v3813
      %v3815 = vmul.f32 %v3814, 2.1237322e-06
      %v3816 = vadd.f32 %v3815, 0.00028619796
      %v3817 = vmul.f32 %v3814, %v3816
      %v3818 = vadd.f32 %v3817, 0.0036580483
      %v3819 = vmul.f32 %v3814, %v3818
      %v3820 = vadd.f32 %v3819, 0.05243302
      %v3821 = vmul.f32 %v3814, %v3820
      %v3822 = vadd.f32 %v3821, 0.18741608
      %v3823 = vmul.f32 %v3814, %v3822
      %v3824 = vadd.f32 %v3823, 1.1283791
      %v3825 = vmul.f32 %v3329, %v3824
      %v3826 = vmul.f32 %v3814, 3.8918573e-05
      %v3827 = vadd.f32 %v3826, 0.001143296
      %v3828 = vmul.f32 %v3814, %v3827
      %v3829 = vadd.f32 %v3828, 0.014752088
      %v3830 = vmul.f32 %v3814, %v3829
      %v3831 = vadd.f32 %v3830, 0.112945676
      %v3832 = vmul.f32 %v3814, %v3831
      %v3833 = vadd.f32 %v3832, 0.4994258
      %v3834 = vmul.f32 %v3814, %v3833
      %v3835 = vadd.f32 %v3834, 1.0
      %v3836 = vrcp.pop %v3835
      %v3837 = vmul.f32 %v3835, %v3836
      %v3838 = vsub.f32 1.0, %v3837
      %v3839 = vmul.f32 %v3836, %v3838
      %v3840 = vadd.f32 %v3836, %v3839
      %vm3841 = vweird.f32 %v3835
      %vm3842 = vweird.f32 %v3836
      %vm3843 = vmor %vm3841, %vm3842
      %v3844 = vsel %vm3843, %v3836, %v3840
      %v3845 = vand.u32 2147483647, %v3835
      %vm3846 = vcmp.eq.f32.partialorder %v3845, 8.507059e+37
      %v3847 = vand.u32 %v3835, 2147483648
      %v3848 = vor.u32 1.1754944e-38, %v3847
      %v3849 = vsel %vm3846, %v3848, %v3844
      %v3850 = vmul.f32 %v3825, %v3849
      %v3851 = vmin.f32 %v3850, 1.0
      %v3852 = vmax.f32 %v3851, -1.0
      %v3853 = vmul.f32 %v3330, %v3330
      %v3854 = vmin.f32 16.0, %v3853
      %v3855 = vmul.f32 %v3854, 2.1237322e-06
      %v3856 = vadd.f32 %v3855, 0.00028619796
      %v3857 = vmul.f32 %v3854, %v3856
      %v3858 = vadd.f32 %v3857, 0.0036580483
      %v3859 = vmul.f32 %v3854, %v3858
      %v3860 = vadd.f32 %v3859, 0.05243302
      %v3861 = vmul.f32 %v3854, %v3860
      %v3862 = vadd.f32 %v3861, 0.18741608
      %v3863 = vmul.f32 %v3854, %v3862
      %v3864 = vadd.f32 %v3863, 1.1283791
      %v3865 = vmul.f32 %v3330, %v3864
      %v3866 = vmul.f32 %v3854, 3.8918573e-05
      %v3867 = vadd.f32 %v3866, 0.001143296
      %v3868 = vmul.f32 %v3854, %v3867
      %v3869 = vadd.f32 %v3868, 0.014752088
      %v3870 = vmul.f32 %v3854, %v3869
      %v3871 = vadd.f32 %v3870, 0.112945676
      %v3872 = vmul.f32 %v3854, %v3871
      %v3873 = vadd.f32 %v3872, 0.4994258
      %v3874 = vmul.f32 %v3854, %v3873
      %v3875 = vadd.f32 %v3874, 1.0
      %v3876 = vrcp.pop %v3875
      %v3877 = vmul.f32 %v3875, %v3876
      %v3878 = vsub.f32 1.0, %v3877
      %v3879 = vmul.f32 %v3876, %v3878
      %v3880 = vadd.f32 %v3876, %v3879
      %vm3881 = vweird.f32 %v3875
      %vm3882 = vweird.f32 %v3876
      %vm3883 = vmor %vm3881, %vm3882
      %v3884 = vsel %vm3883, %v3876, %v3880
      %v3885 = vand.u32 2147483647, %v3875
      %vm3886 = vcmp.eq.f32.partialorder %v3885, 8.507059e+37
      %v3887 = vand.u32 %v3875, 2147483648
      %v3888 = vor.u32 1.1754944e-38, %v3887
      %v3889 = vsel %vm3886, %v3888, %v3884
      %v3890 = vmul.f32 %v3865, %v3889
      %v3891 = vmin.f32 %v3890, 1.0
      %v3892 = vmax.f32 %v3891, -1.0
      %v3893 = vmul.f32 %v3331, %v3331
      %v3894 = vmin.f32 16.0, %v3893
      %v3895 = vmul.f32 %v3894, 2.1237322e-06
      %v3896 = vadd.f32 %v3895, 0.00028619796
      %v3897 = vmul.f32 %v3894, %v3896
      %v3898 = vadd.f32 %v3897, 0.0036580483
      %v3899 = vmul.f32 %v3894, %v3898
      %v3900 = vadd.f32 %v3899, 0.05243302
      %v3901 = vmul.f32 %v3894, %v3900
      %v3902 = vadd.f32 %v3901, 0.18741608
      %v3903 = vmul.f32 %v3894, %v3902
      %v3904 = vadd.f32 %v3903, 1.1283791
      %v3905 = vmul.f32 %v3331, %v3904
      %v3906 = vmul.f32 %v3894, 3.8918573e-05
      %v3907 = vadd.f32 %v3906, 0.001143296
      %v3908 = vmul.f32 %v3894, %v3907
      %v3909 = vadd.f32 %v3908, 0.014752088
      %v3910 = vmul.f32 %v3894, %v3909
      %v3911 = vadd.f32 %v3910, 0.112945676
      %v3912 = vmul.f32 %v3894, %v3911
      %v3913 = vadd.f32 %v3912, 0.4994258
      %v3914 = vmul.f32 %v3894, %v3913
      %v3915 = vadd.f32 %v3914, 1.0
      %v3916 = vrcp.pop %v3915
      %v3917 = vmul.f32 %v3915, %v3916
      %v3918 = vsub.f32 1.0, %v3917
      %v3919 = vmul.f32 %v3916, %v3918
      %v3920 = vadd.f32 %v3916, %v3919
      %vm3921 = vweird.f32 %v3915
      %vm3922 = vweird.f32 %v3916
      %vm3923 = vmor %vm3921, %vm3922
      %v3924 = vsel %vm3923, %v3916, %v3920
      %v3925 = vand.u32 2147483647, %v3915
      %vm3926 = vcmp.eq.f32.partialorder %v3925, 8.507059e+37
      %v3927 = vand.u32 %v3915, 2147483648
      %v3928 = vor.u32 1.1754944e-38, %v3927
      %v3929 = vsel %vm3926, %v3928, %v3924
      %v3930 = vmul.f32 %v3905, %v3929
      %v3931 = vmin.f32 %v3930, 1.0
      %v3932 = vmax.f32 %v3931, -1.0
      %v3933 = vmul.f32 %v3332, %v3332
      %v3934 = vmin.f32 16.0, %v3933
      %v3935 = vmul.f32 %v3934, 2.1237322e-06
      %v3936 = vadd.f32 %v3935, 0.00028619796
      %v3937 = vmul.f32 %v3934, %v3936
      %v3938 = vadd.f32 %v3937, 0.0036580483
      %v3939 = vmul.f32 %v3934, %v3938
      %v3940 = vadd.f32 %v3939, 0.05243302
      %v3941 = vmul.f32 %v3934, %v3940
      %v3942 = vadd.f32 %v3941, 0.18741608
      %v3943 = vmul.f32 %v3934, %v3942
      %v3944 = vadd.f32 %v3943, 1.1283791
      %v3945 = vmul.f32 %v3332, %v3944
      %v3946 = vmul.f32 %v3934, 3.8918573e-05
      %v3947 = vadd.f32 %v3946, 0.001143296
      %v3948 = vmul.f32 %v3934, %v3947
      %v3949 = vadd.f32 %v3948, 0.014752088
      %v3950 = vmul.f32 %v3934, %v3949
      %v3951 = vadd.f32 %v3950, 0.112945676
      %v3952 = vmul.f32 %v3934, %v3951
      %v3953 = vadd.f32 %v3952, 0.4994258
      %v3954 = vmul.f32 %v3934, %v3953
      %v3955 = vadd.f32 %v3954, 1.0
      %v3956 = vrcp.pop %v3955
      %v3957 = vmul.f32 %v3955, %v3956
      %v3958 = vsub.f32 1.0, %v3957
      %v3959 = vmul.f32 %v3956, %v3958
      %v3960 = vadd.f32 %v3956, %v3959
      %vm3961 = vweird.f32 %v3955
      %vm3962 = vweird.f32 %v3956
      %vm3963 = vmor %vm3961, %vm3962
      %v3964 = vsel %vm3963, %v3956, %v3960
      %v3965 = vand.u32 2147483647, %v3955
      %vm3966 = vcmp.eq.f32.partialorder %v3965, 8.507059e+37
      %v3967 = vand.u32 %v3955, 2147483648
      %v3968 = vor.u32 1.1754944e-38, %v3967
      %v3969 = vsel %vm3966, %v3968, %v3964
      %v3970 = vmul.f32 %v3945, %v3969
      %v3971 = vmin.f32 %v3970, 1.0
      %v3972 = vmax.f32 %v3971, -1.0
      %v3973 = vadd.f32 %v3372, 1.0
      %v3974 = vadd.f32 %v3412, 1.0
      %v3975 = vadd.f32 %v3452, 1.0
      %v3976 = vadd.f32 %v3492, 1.0
      %v3977 = vadd.f32 %v3532, 1.0
      %v3978 = vadd.f32 %v3572, 1.0
      %v3979 = vadd.f32 %v3612, 1.0
      %v3980 = vadd.f32 %v3652, 1.0
      %v3981 = vadd.f32 %v3692, 1.0
      %v3982 = vadd.f32 %v3732, 1.0
      %v3983 = vadd.f32 %v3772, 1.0
      %v3984 = vadd.f32 %v3812, 1.0
      %v3985 = vadd.f32 %v3852, 1.0
      %v3986 = vadd.f32 %v3892, 1.0
      %v3987 = vadd.f32 %v3932, 1.0
      %v3988 = vadd.f32 %v3972, 1.0
      %v3989 = vmul.f32 %v3301, %v3973
      %v3990 = vmul.f32 %v3302, %v3974
      %v3991 = vmul.f32 %v3303, %v3975
      %v3992 = vmul.f32 %v3304, %v3976
      %v3993 = vmul.f32 %v3305, %v3977
      %v3994 = vmul.f32 %v3306, %v3978
      %v3995 = vmul.f32 %v3307, %v3979
      %v3996 = vmul.f32 %v3308, %v3980
      %v3997 = vmul.f32 %v3309, %v3981
      %v3998 = vmul.f32 %v3310, %v3982
      %v3999 = vmul.f32 %v3311, %v3983
      %v4000 = vmul.f32 %v3312, %v3984
      %v4001 = vmul.f32 %v3313, %v3985
      %v4002 = vmul.f32 %v3314, %v3986
      %v4003 = vmul.f32 %v3315, %v3987
      %v4004 = vmul.f32 %v3316, %v3988
      %v4005 = vpack.c.bf16 %v3993, %v3989
      %v4006 = vpack.c.bf16 %v3994, %v3990
      %v4007 = vpack.c.bf16 %v3995, %v3991
      %v4008 = vpack.c.bf16 %v3996, %v3992
      %v4009 = vpack.c.bf16 %v4001, %v3997
      %v4010 = vpack.c.bf16 %v4002, %v3998
      %v4011 = vpack.c.bf16 %v4003, %v3999
      %v4012 = vpack.c.bf16 %v4004, %v4000
      %v4013 = vld [vmem:[%s826] sm:$0xf]
      %v4014 = vld [vmem:[%s826 + $0x4] sm:$0xf]
      %v4015 = vld [vmem:[%s826 + $0x8] sm:$0xf]
      %v4016 = vld [vmem:[%s826 + $0xc] sm:$0xf]
      %v4017 = vld [vmem:[%s826 + $0x10] sm:$0xf]
      %v4018 = vld [vmem:[%s826 + $0x14] sm:$0xf]
      %v4019 = vld [vmem:[%s826 + $0x18] sm:$0xf]
      %v4020 = vld [vmem:[%s826 + $0x1c] sm:$0xf]
      %v4021 = vld [vmem:[%s826 + $0x20] sm:$0xf]
      %v4022 = vld [vmem:[%s826 + $0x24] sm:$0xf]
      %v4023 = vld [vmem:[%s826 + $0x28] sm:$0xf]
      %v4024 = vld [vmem:[%s826 + $0x2c] sm:$0xf]
      %v4025 = vld [vmem:[%s826 + $0x30] sm:$0xf]
      %v4026 = vld [vmem:[%s826 + $0x34] sm:$0xf]
      %v4027 = vld [vmem:[%s826 + $0x38] sm:$0xf]
      %v4028 = vld [vmem:[%s826 + $0x3c] sm:$0xf]
      %v4029 = vld [vmem:[%s826 + $0x40] sm:$0xf]
      %v4030 = vld [vmem:[%s826 + $0x44] sm:$0xf]
      %v4031 = vld [vmem:[%s826 + $0x48] sm:$0xf]
      %v4032 = vld [vmem:[%s826 + $0x4c] sm:$0xf]
      %v4033 = vld [vmem:[%s826 + $0x50] sm:$0xf]
      %v4034 = vld [vmem:[%s826 + $0x54] sm:$0xf]
      %v4035 = vld [vmem:[%s826 + $0x58] sm:$0xf]
      %v4036 = vld [vmem:[%s826 + $0x5c] sm:$0xf]
      %v4037 = vld [vmem:[%s826 + $0x60] sm:$0xf]
      %v4038 = vld [vmem:[%s826 + $0x64] sm:$0xf]
      %v4039 = vld [vmem:[%s826 + $0x68] sm:$0xf]
      %v4040 = vld [vmem:[%s826 + $0x6c] sm:$0xf]
      %v4041 = vld [vmem:[%s826 + $0x70] sm:$0xf]
      %v4042 = vld [vmem:[%s826 + $0x74] sm:$0xf]
      %v4043 = vld [vmem:[%s826 + $0x78] sm:$0xf]
      %v4044 = vld [vmem:[%s826 + $0x7c] sm:$0xf]
      %v4045 = vld [vmem:[%s826 + $0x80] sm:$0xf]
      %v4046 = vld [vmem:[%s826 + $0x84] sm:$0xf]
      %v4047 = vld [vmem:[%s826 + $0x88] sm:$0xf]
      %v4048 = vld [vmem:[%s826 + $0x8c] sm:$0xf]
      %v4049 = vld [vmem:[%s826 + $0x90] sm:$0xf]
      %v4050 = vld [vmem:[%s826 + $0x94] sm:$0xf]
      %v4051 = vld [vmem:[%s826 + $0x98] sm:$0xf]
      %v4052 = vld [vmem:[%s826 + $0x9c] sm:$0xf]
      %v4053 = vld [vmem:[%s826 + $0xa0] sm:$0xf]
      %v4054 = vld [vmem:[%s826 + $0xa4] sm:$0xf]
      %v4055 = vld [vmem:[%s826 + $0xa8] sm:$0xf]
      %v4056 = vld [vmem:[%s826 + $0xac] sm:$0xf]
      %v4057 = vld [vmem:[%s826 + $0xb0] sm:$0xf]
      %v4058 = vld [vmem:[%s826 + $0xb4] sm:$0xf]
      %v4059 = vld [vmem:[%s826 + $0xb8] sm:$0xf]
      %v4060 = vld [vmem:[%s826 + $0xbc] sm:$0xf]
      %v4061 = vld [vmem:[%s826 + $0xc0] sm:$0xf]
      %v4062 = vld [vmem:[%s826 + $0xc4] sm:$0xf]
      %v4063 = vld [vmem:[%s826 + $0xc8] sm:$0xf]
      %v4064 = vld [vmem:[%s826 + $0xcc] sm:$0xf]
      %v4065 = vld [vmem:[%s826 + $0xd0] sm:$0xf]
      %v4066 = vld [vmem:[%s826 + $0xd4] sm:$0xf]
      %v4067 = vld [vmem:[%s826 + $0xd8] sm:$0xf]
      %v4068 = vld [vmem:[%s826 + $0xdc] sm:$0xf]
      %v4069 = vld [vmem:[%s826 + $0xe0] sm:$0xf]
      %v4070 = vld [vmem:[%s826 + $0xe4] sm:$0xf]
      %v4071 = vld [vmem:[%s826 + $0xe8] sm:$0xf]
      %v4072 = vld [vmem:[%s826 + $0xec] sm:$0xf]
      %v4073 = vld [vmem:[%s826 + $0xf0] sm:$0xf]
      %v4074 = vld [vmem:[%s826 + $0xf4] sm:$0xf]
      %v4075 = vld [vmem:[%s826 + $0xf8] sm:$0xf]
      %v4076 = vld [vmem:[%s826 + $0xfc] sm:$0xf]
      %v4077 = vld [vmem:[%s829] sm:$0x1]
      %v4079 = vperm.slane %v4077, 0
      %v4145 = vunpack.c.l.b16 %v4013
      %v4146 = vunpack.c.l.b16 %v4014
      %v4147 = vunpack.c.l.b16 %v4015
      %v4148 = vunpack.c.l.b16 %v4016
      %v4149 = vunpack.c.l.b16 %v4017
      %v4150 = vunpack.c.l.b16 %v4018
      %v4151 = vunpack.c.l.b16 %v4019
      %v4152 = vunpack.c.l.b16 %v4020
      %v4153 = vunpack.c.l.b16 %v4021
      %v4154 = vunpack.c.l.b16 %v4022
      %v4155 = vunpack.c.l.b16 %v4023
      %v4156 = vunpack.c.l.b16 %v4024
      %v4157 = vunpack.c.l.b16 %v4025
      %v4158 = vunpack.c.l.b16 %v4026
      %v4159 = vunpack.c.l.b16 %v4027
      %v4160 = vunpack.c.l.b16 %v4028
      %v4161 = vunpack.c.l.b16 %v4029
      %v4162 = vunpack.c.l.b16 %v4030
      %v4163 = vunpack.c.l.b16 %v4031
      %v4164 = vunpack.c.l.b16 %v4032
      %v4165 = vunpack.c.l.b16 %v4033
      %v4166 = vunpack.c.l.b16 %v4034
      %v4167 = vunpack.c.l.b16 %v4035
      %v4168 = vunpack.c.l.b16 %v4036
      %v4169 = vunpack.c.l.b16 %v4037
      %v4170 = vunpack.c.l.b16 %v4038
      %v4171 = vunpack.c.l.b16 %v4039
      %v4172 = vunpack.c.l.b16 %v4040
      %v4173 = vunpack.c.l.b16 %v4041
      %v4174 = vunpack.c.l.b16 %v4042
      %v4175 = vunpack.c.l.b16 %v4043
      %v4176 = vunpack.c.l.b16 %v4044
      %v4177 = vunpack.c.l.b16 %v4045
      %v4178 = vunpack.c.l.b16 %v4046
      %v4179 = vunpack.c.l.b16 %v4047
      %v4180 = vunpack.c.l.b16 %v4048
      %v4181 = vunpack.c.l.b16 %v4049
      %v4182 = vunpack.c.l.b16 %v4050
      %v4183 = vunpack.c.l.b16 %v4051
      %v4184 = vunpack.c.l.b16 %v4052
      %v4185 = vunpack.c.l.b16 %v4053
      %v4186 = vunpack.c.l.b16 %v4054
      %v4187 = vunpack.c.l.b16 %v4055
      %v4188 = vunpack.c.l.b16 %v4056
      %v4189 = vunpack.c.l.b16 %v4057
      %v4190 = vunpack.c.l.b16 %v4058
      %v4191 = vunpack.c.l.b16 %v4059
      %v4192 = vunpack.c.l.b16 %v4060
      %v4193 = vunpack.c.l.b16 %v4061
      %v4194 = vunpack.c.l.b16 %v4062
      %v4195 = vunpack.c.l.b16 %v4063
      %v4196 = vunpack.c.l.b16 %v4064
      %v4197 = vunpack.c.l.b16 %v4065
      %v4198 = vunpack.c.l.b16 %v4066
      %v4199 = vunpack.c.l.b16 %v4067
      %v4200 = vunpack.c.l.b16 %v4068
      %v4201 = vunpack.c.l.b16 %v4069
      %v4202 = vunpack.c.l.b16 %v4070
      %v4203 = vunpack.c.l.b16 %v4071
      %v4204 = vunpack.c.l.b16 %v4072
      %v4205 = vunpack.c.l.b16 %v4073
      %v4206 = vunpack.c.l.b16 %v4074
      %v4207 = vunpack.c.l.b16 %v4075
      %v4208 = vunpack.c.l.b16 %v4076
      %v4209 = vpack.c.b16 %v4146, %v4145
      %v4210 = vpack.c.b16 %v4148, %v4147
      %v4211 = vpack.c.b16 %v4150, %v4149
      %v4212 = vpack.c.b16 %v4152, %v4151
      %v4213 = vpack.c.b16 %v4154, %v4153
      %v4214 = vpack.c.b16 %v4156, %v4155
      %v4215 = vpack.c.b16 %v4158, %v4157
      %v4216 = vpack.c.b16 %v4160, %v4159
      %v4217 = vpack.c.b16 %v4162, %v4161
      %v4218 = vpack.c.b16 %v4164, %v4163
      %v4219 = vpack.c.b16 %v4166, %v4165
      %v4220 = vpack.c.b16 %v4168, %v4167
      %v4221 = vpack.c.b16 %v4170, %v4169
      %v4222 = vpack.c.b16 %v4172, %v4171
      %v4223 = vpack.c.b16 %v4174, %v4173
      %v4224 = vpack.c.b16 %v4176, %v4175
      %v4225 = vpack.c.b16 %v4178, %v4177
      %v4226 = vpack.c.b16 %v4180, %v4179
      %v4227 = vpack.c.b16 %v4182, %v4181
      %v4228 = vpack.c.b16 %v4184, %v4183
      %v4229 = vpack.c.b16 %v4186, %v4185
      %v4230 = vpack.c.b16 %v4188, %v4187
      %v4231 = vpack.c.b16 %v4190, %v4189
      %v4232 = vpack.c.b16 %v4192, %v4191
      %v4233 = vpack.c.b16 %v4194, %v4193
      %v4234 = vpack.c.b16 %v4196, %v4195
      %v4235 = vpack.c.b16 %v4198, %v4197
      %v4236 = vpack.c.b16 %v4200, %v4199
      %v4237 = vpack.c.b16 %v4202, %v4201
      %v4238 = vpack.c.b16 %v4204, %v4203
      %v4239 = vpack.c.b16 %v4206, %v4205
      %v4240 = vpack.c.b16 %v4208, %v4207
      %4273 = vmatpush.bf16.msra.mxu0 %v4216
      %4274 = vmatpush.bf16.msra.mxu0 %v4215
      %4275 = vmatpush.bf16.msra.mxu0 %v4214
      %4276 = vmatpush.bf16.msra.mxu0 %v4213
      %4277 = vmatpush.bf16.msra.mxu0 %v4212
      %4278 = vmatpush.bf16.msra.mxu0 %v4211
      %4279 = vmatpush.bf16.msra.mxu0 %v4210
      %4280 = vmatpush.bf16.msra.mxu0 %v4209
      %4281 = vmatmul.bf16.gmra.mxu0 %v4005
      %v4282 = vpop.f32.mrf.mxu0
      %v4283 = vadd.f32 %v4079, %v4282
      %v4284 = vpop.f32.mrf.mxu0
      %v4285 = vadd.f32 %v4079, %v4284
      %4286 = vmatmul.bf16.gmra.mxu0 %v4009
      %v4287 = vpop.f32.mrf.mxu0
      %v4288 = vadd.f32 %v4079, %v4287
      %v4289 = vpop.f32.mrf.mxu0
      %v4290 = vadd.f32 %v4079, %v4289
      %4291 = vdwg.mxu0
      %4292 = vmatpush.bf16.msra.mxu0 %v4224
      %4293 = vmatpush.bf16.msra.mxu0 %v4223
      %4294 = vmatpush.bf16.msra.mxu0 %v4222
      %4295 = vmatpush.bf16.msra.mxu0 %v4221
      %4296 = vmatpush.bf16.msra.mxu0 %v4220
      %4297 = vmatpush.bf16.msra.mxu0 %v4219
      %4298 = vmatpush.bf16.msra.mxu0 %v4218
      %4299 = vmatpush.bf16.msra.mxu0 %v4217
      %4300 = vmatmul.bf16.gmra.mxu0 %v4006
      %v4301 = vpop.f32.mrf.mxu0
      %v4302 = vadd.f32 %v4283, %v4301
      %v4303 = vpop.f32.mrf.mxu0
      %v4304 = vadd.f32 %v4285, %v4303
      %4305 = vmatmul.bf16.gmra.mxu0 %v4010
      %v4306 = vpop.f32.mrf.mxu0
      %v4307 = vadd.f32 %v4288, %v4306
      %v4308 = vpop.f32.mrf.mxu0
      %v4309 = vadd.f32 %v4290, %v4308
      %4310 = vdwg.mxu0
      %4311 = vmatpush.bf16.msra.mxu0 %v4232
      %4312 = vmatpush.bf16.msra.mxu0 %v4231
      %4313 = vmatpush.bf16.msra.mxu0 %v4230
      %4314 = vmatpush.bf16.msra.mxu0 %v4229
      %4315 = vmatpush.bf16.msra.mxu0 %v4228
      %4316 = vmatpush.bf16.msra.mxu0 %v4227
      %4317 = vmatpush.bf16.msra.mxu0 %v4226
      %4318 = vmatpush.bf16.msra.mxu0 %v4225
      %4319 = vmatmul.bf16.gmra.mxu0 %v4007
      %v4320 = vpop.f32.mrf.mxu0
      %v4321 = vadd.f32 %v4302, %v4320
      %v4322 = vpop.f32.mrf.mxu0
      %v4323 = vadd.f32 %v4304, %v4322
      %4324 = vmatmul.bf16.gmra.mxu0 %v4011
      %v4325 = vpop.f32.mrf.mxu0
      %v4326 = vadd.f32 %v4307, %v4325
      %v4327 = vpop.f32.mrf.mxu0
      %v4328 = vadd.f32 %v4309, %v4327
      %4329 = vdwg.mxu0
      %4330 = vmatpush.bf16.msra.mxu0 %v4240
      %4331 = vmatpush.bf16.msra.mxu0 %v4239
      %4332 = vmatpush.bf16.msra.mxu0 %v4238
      %4333 = vmatpush.bf16.msra.mxu0 %v4237
      %4334 = vmatpush.bf16.msra.mxu0 %v4236
      %4335 = vmatpush.bf16.msra.mxu0 %v4235
      %4336 = vmatpush.bf16.msra.mxu0 %v4234
      %4337 = vmatpush.bf16.msra.mxu0 %v4233
      %4338 = vmatmul.bf16.gmra.mxu0 %v4008
      %v4339 = vpop.f32.mrf.mxu0
      %v4340 = vadd.f32 %v4321, %v4339
      %v4341 = vpop.f32.mrf.mxu0
      %v4342 = vadd.f32 %v4323, %v4341
      %4343 = vmatmul.bf16.gmra.mxu0 %v4012
      %v4344 = vpop.f32.mrf.mxu0
      %v4345 = vadd.f32 %v4326, %v4344
      %v4346 = vpop.f32.mrf.mxu0
      %v4347 = vadd.f32 %v4328, %v4346
      %4348 = vdwg.mxu0
      %v4349 = vadd.f32 %v2921, %v4340
      %v4350 = vadd.f32 %v2922, %v4342
      %v4351 = vadd.f32 %v2923, %v4345
      %v4352 = vadd.f32 %v2924, %v4347
      %4353 = vst [vmem:[#allocation2] sm:$0xff] %v4349
      %4354 = vst [vmem:[#allocation2 + $0x8] sm:$0xff] %v4350
      %4355 = vst [vmem:[#allocation2 + $0x10] sm:$0xff] %v4351
      %4356 = vst [vmem:[#allocation2 + $0x18] sm:$0xff] %v4352
      %p4357 = scmp.eq.s32.totalorder %s33, 1
      // Predicated region
      $region93: #{vivit_forward.4} parent=87 // pred_check
        %p4358 = pneg %p4357
      $region94: #{vivit_forward.4} parent=87 // pred_check_branch
        %4360 = sbr.rel (%p4358) target = $region96
      $region95: #{vivit_forward.4} parent=87 // pred_region
        %v4361 = vpack.c.bf16 %v4349, %v4349
        %v4362 = vpack.c.bf16 %v4350, %v4350
        %v4363 = vpack.c.bf16 %v4351, %v4351
        %v4364 = vpack.c.bf16 %v4352, %v4352
        %4365 = vst [vmem:[%s834] sm:$0xf] %v4361
        %4366 = vst [vmem:[%s834 + $0x4] sm:$0xf] %v4362
        %4367 = vst [vmem:[%s834 + $0x8] sm:$0xf] %v4363
        %4368 = vst [vmem:[%s834 + $0xc] sm:$0xf] %v4364
      $region96: #{vivit_forward.4} parent=87 // pred_fallthru
        _
      %s4369 = smul.u32 4, %s32
      %p4370 = scmp.lt.s32.totalorder %s4369, 3
      %s4371 = scalar_select %p4370, %s4369, 3
      %s4372 = smul.addr %s4371, 4
      %s4373 = scalar_lea.vmem %s17, %s4372
      // Predicated region
      $region97: #{vivit_forward.4} parent=87 // pred_check
        %p4374 = pneg %p500
      $region98: #{vivit_forward.4} parent=87 // pred_check_branch
        %4376 = sbr.rel (%p4374) target = $region100
      $region99: #{vivit_forward.4} parent=87 // pred_region
        %s4377 = smul.u32 4, %s32
      $region100: #{vivit_forward.4} parent=87 // pred_fallthru
        _
      // Predicated region
      $region101: #{vivit_forward.4} parent=87 // pred_check
        %p4378 = pneg %p500
      $region102: #{vivit_forward.4} parent=87 // pred_check_branch
        %4380 = sbr.rel (%p4378) target = $region104
      $region103: #{vivit_forward.4} parent=87 // pred_region
        %s4381 = smul.u32 4, %s32
        %p4382 = scmp.lt.s32.totalorder %s4381, 3
        %s4383 = scalar_select %p4382, %s4381, 3
        %s4384 = smul.addr %s4383, 4
        %s4385 = scalar_lea.vmem %s17, %s4384
      $region104: #{vivit_forward.4} parent=87 // pred_fallthru
        _
    $region88: #{vivit_forward.4} parent=5 // pred_fallthru
      _
    %p4386 = scmp.le.s32.totalorder 2, %s23
    // Predicated region
    $region105: #{vivit_forward.4} parent=5 // pred_check
      %p4387 = pneg %p4386
    $region106: #{vivit_forward.4} parent=5 // pred_check_branch
      %4389 = sbr.rel (%p4387) target = $region108
    $region107: #{vivit_forward.4} parent=5 // pred_region
      %s4390 = ssub.s32 %s23, 2
    $region108: #{vivit_forward.4} parent=5 // pred_fallthru
      _
  $region6: #{vivit_forward.4} parent=0 // loop_footer
    %s27 = sadd.s32 1, %s23
  $region7: #{vivit_forward.4} parent=0 // loop_footer_branch
    %22 = sbr.rel target = $region3
  $region8: #{vivit_forward.4} parent=0 // loop_exit
    _

</llo_original>
